<compile_context>
chip_gen: v7x
topology: tpu7x:2x2x1
jax: 0.10.0
libtpu: 0.0.40
codegen_flags: <defaults>
</compile_context>

<pallas_src>
import functools

import jax
import jax.numpy as jnp
from jax.experimental import pallas as pl
from jax.experimental.pallas import tpu as pltpu

_VMEM_LIMIT = 48 * 1024 * 1024   # <= 48 MiB so v7x (64 MiB/TC) keeps headroom
_LANE = 128


def _round_up(x, m):
    return ((x + m - 1) // m) * m


def _apply_act(x, act):
    if act == "relu":
        return jnp.maximum(x, 0.0)
    if act == "tanh":
        return jnp.tanh(x)
    return x  # "none"


# ---------------------------------------------------------------------------
# Kernel 1 (fused hidden layer):
#   out = act( sum_k (A^k @ H) @ W_k + b )     computed WITHOUT materializing
# the Krylov basis in HBM.  Grid = (n_blocks, n_row_tiles), k outer.  The full
# previous Krylov vector H_{k-1} lives in a 2-buffer VMEM ping-pong (k parity),
# the running output lives in a full (N, nhid_p) f32 VMEM accumulator, and the
# bias/activation epilogue fires on the last k via pl.when.
#
# NOTE: both grid axes MUST stay "arbitrary" — the carry and the accumulator
# are per-core VMEM scratch, so splitting either axis across cores is wrong.
# ---------------------------------------------------------------------------
def _krylov_layer_kernel(a_ref, h_ref, w_ref, b_ref, o_ref,
                         carry_even, carry_odd, acc, *, act, n_blocks):
    k = pl.program_id(0)
    i = pl.program_id(1)
    tm = o_ref.shape[0]
    row0 = pl.multiple_of(i * tm, tm)

    @pl.when(k == 0)
    def _():
        rows = h_ref[...]                                   # (tm, din_p) bf16
        acc[pl.ds(row0, tm), :] = jnp.dot(
            rows, w_ref[0], preferred_element_type=jnp.float32)
        if n_blocks > 1:
            carry_even[pl.ds(row0, tm), :] = rows           # H_0 -> even slot

    if n_blocks > 1:
        def recur(src, dst):
            # rows_i(H_k) = A[i*tm:(i+1)*tm, :] @ H_{k-1}; bf16 feed, f32 acc.
            rows = jnp.dot(a_ref[...], src[...],
                           preferred_element_type=jnp.float32).astype(jnp.bfloat16)
            acc[pl.ds(row0, tm), :] += jnp.dot(
                rows, w_ref[0], preferred_element_type=jnp.float32)

            @pl.when(k < n_blocks - 1)          # last step's H_k never consumed
            def _():
                dst[pl.ds(row0, tm), :] = rows

        # k odd: H_{k-1} is in the even slot; k even (>0): it's in the odd slot.
        @pl.when(jnp.logical_and(k > 0, k % 2 == 1))
        def _():
            recur(carry_even, carry_odd)

        @pl.when(jnp.logical_and(k > 0, k % 2 == 0))
        def _():
            recur(carry_odd, carry_even)

    @pl.when(k == n_blocks - 1)
    def _():
        o_ref[...] = _apply_act(acc[pl.ds(row0, tm), :] + b_ref[...],
                                act).astype(o_ref.dtype)


def krylov_layer(adj_b, h_b, w_p, b_p, act, tm):
    n = adj_b.shape[0]
    din_p = h_b.shape[1]
    n_blocks, _, nhid_p = w_p.shape
    n_tiles = n // tm
    carry_shape = (n, din_p) if n_blocks > 1 else (8, _LANE)   # unused if nb==1
    return pl.pallas_call(
        functools.partial(_krylov_layer_kernel, act=act, n_blocks=n_blocks),
        out_shape=jax.ShapeDtypeStruct((n, nhid_p), jnp.bfloat16),
        grid_spec=pltpu.PrefetchScalarGridSpec(
            num_scalar_prefetch=0,
            grid=(n_blocks, n_tiles),
            in_specs=[
                # A row slab: consumed only for k >= 1; pin block 0 at k == 0 so
                # A is streamed exactly (n_blocks - 1) times.
                pl.BlockSpec((tm, n),
                             lambda k, i: (jnp.where(k == 0, 0, i), 0)),
                # H row tile: consumed only at k == 0.
                pl.BlockSpec((tm, din_p),
                             lambda k, i: (jnp.where(k == 0, i, 0), 0)),
                # W_k slab of the stacked weights (n_blocks, din_p, nhid_p).
                pl.BlockSpec((1, din_p, nhid_p), lambda k, i: (k, 0, 0)),
                pl.BlockSpec((1, nhid_p), lambda k, i: (0, 0)),        # bias f32
            ],
            out_specs=pl.BlockSpec((tm, nhid_p), lambda k, i: (i, 0)),
            scratch_shapes=[
                pltpu.VMEM(carry_shape, jnp.bfloat16),   # carry slot (even k)
                pltpu.VMEM(carry_shape, jnp.bfloat16),   # carry slot (odd k)
                pltpu.VMEM((n, nhid_p), jnp.float32),    # full-output accumulator
            ],
        ),
        compiler_params=pltpu.CompilerParams(
            # MUST be ("arbitrary","arbitrary"): carry + accumulator are per-core
            # VMEM scratch shared across the whole grid.
            dimension_semantics=("arbitrary", "arbitrary"),
            vmem_limit_bytes=_VMEM_LIMIT),
    )(adj_b, h_b, w_p, b_p)
    # TODO(synk): for very large N, tile A's contraction axis (and the f32
    # accumulator columns) so the (tm, N) A slab / (N, nhid) acc fit v7x VMEM,
    # and split the row axis over v7x's 2 TensorCores with a carry exchange.


# ---------------------------------------------------------------------------
# Kernel 2 (fused head): classifier (eye=1, tanh) + out (eye=1) + log_softmax.
# nhid and nclass are padded independently to 128 lanes; padded class lanes are
# masked to a large negative value before the softmax reduction.
# ---------------------------------------------------------------------------
def _head_kernel(h_ref, wc_ref, bc_ref, wo_ref, bo_ref, o_ref, *, nclass):
    h1 = jnp.dot(h_ref[...], wc_ref[...],
                 preferred_element_type=jnp.float32) + bc_ref[...]
    h1 = jnp.tanh(h1).astype(jnp.bfloat16)                # padded lanes stay 0
    logits = jnp.dot(h1, wo_ref[...],
                     preferred_element_type=jnp.float32) + bo_ref[...]
    col = jax.lax.broadcasted_iota(jnp.int32, logits.shape, 1)
    logits = jnp.where(col < nclass, logits, -1e30)       # mask padded classes
    m = jnp.max(logits, axis=-1, keepdims=True)
    z = logits - m
    lse = jnp.log(jnp.sum(jnp.exp(z), axis=-1, keepdims=True))
    o_ref[...] = (z - lse).astype(o_ref.dtype)


def head_layer(h_b, wc_p, bc_p, wo_p, bo_p, nclass, tm):
    n, nhid_p = h_b.shape
    nclass_p = wo_p.shape[1]
    n_tiles = n // tm
    return pl.pallas_call(
        functools.partial(_head_kernel, nclass=nclass),
        out_shape=jax.ShapeDtypeStruct((n, nclass_p), jnp.float32),
        grid_spec=pltpu.PrefetchScalarGridSpec(
            num_scalar_prefetch=0,
            grid=(n_tiles,),
            in_specs=[
                pl.BlockSpec((tm, nhid_p), lambda i: (i, 0)),
                pl.BlockSpec((nhid_p, nhid_p), lambda i: (0, 0)),
                pl.BlockSpec((1, nhid_p), lambda i: (0, 0)),
                pl.BlockSpec((nhid_p, nclass_p), lambda i: (0, 0)),
                pl.BlockSpec((1, nclass_p), lambda i: (0, 0)),
            ],
            out_specs=pl.BlockSpec((tm, nclass_p), lambda i: (i, 0)),
        ),
        compiler_params=pltpu.CompilerParams(
            dimension_semantics=("parallel",),
            vmem_limit_bytes=_VMEM_LIMIT),
    )(h_b, wc_p, bc_p, wo_p, bo_p)


# ---------------------------------------------------------------------------
# Parameter init (logical, f32 — mirrors the PyTorch module) and one-time
# preparation (pad feature dims to 128 multiples, cast MXU operands to bf16,
# reshape hidden weights to the (n_blocks, din_p, nhid_p) stacked layout).
# ---------------------------------------------------------------------------
def init_params(key, nfeat, nlayers, nhid, nclass, n_blocks):
    params = {"hidden": []}
    dims_in = [nfeat] + [nhid] * (nlayers - 1)
    for din in dims_in:
        key, kw, kb = jax.random.split(key, 3)
        scale = 1.0 / jnp.sqrt(jnp.float32(din * n_blocks))
        w = jax.random.uniform(kw, (n_blocks * din, nhid), jnp.float32, -scale, scale)
        b = jax.random.uniform(kb, (1, nhid), jnp.float32, -scale, scale)
        params["hidden"].append((w, b))
    key, kw, kb = jax.random.split(key, 3)
    scale = 1.0 / jnp.sqrt(jnp.float32(nhid))
    params["classifier"] = (
        jax.random.uniform(kw, (nhid, nhid), jnp.float32, -scale, scale),
        jax.random.uniform(kb, (1, nhid), jnp.float32, -scale, scale),
    )
    key, kw, kb = jax.random.split(key, 3)
    params["out"] = (
        jax.random.uniform(kw, (nhid, nclass), jnp.float32, -scale, scale),
        jax.random.uniform(kb, (1, nclass), jnp.float32, -scale, scale),
    )
    return params


def prepare_params(raw, n_blocks, nfeat, nhid, nclass):
    """One-time padding / casting / stacking (hoisted out of the forward)."""
    nfeat_p = _round_up(nfeat, _LANE)
    nhid_p = _round_up(nhid, _LANE)
    nclass_p = _round_up(nclass, _LANE)
    nlayers = len(raw["hidden"])
    dims_in = [nfeat] + [nhid] * (nlayers - 1)
    dims_in_p = [nfeat_p] + [nhid_p] * (nlayers - 1)

    prepared = {"hidden": [], "dims": (nfeat_p, nhid_p, nclass_p), "nclass": nclass}
    for (w, b), din, din_p in zip(raw["hidden"], dims_in, dims_in_p):
        w3 = w.reshape(n_blocks, din, nhid)
        w_p = jnp.zeros((n_blocks, din_p, nhid_p), jnp.bfloat16)
        w_p = w_p.at[:, :din, :nhid].set(w3.astype(jnp.bfloat16))
        b_p = jnp.zeros((1, nhid_p), jnp.float32).at[:, :nhid].set(b)
        prepared["hidden"].append((w_p, b_p))

    wc, bc = raw["classifier"]
    wo, bo = raw["out"]
    wc_p = jnp.zeros((nhid_p, nhid_p), jnp.bfloat16).at[:nhid, :nhid].set(wc.astype(jnp.bfloat16))
    bc_p = jnp.zeros((1, nhid_p), jnp.float32).at[:, :nhid].set(bc)
    wo_p = jnp.zeros((nhid_p, nclass_p), jnp.bfloat16).at[:nhid, :nclass].set(wo.astype(jnp.bfloat16))
    bo_p = jnp.zeros((1, nclass_p), jnp.float32).at[:, :nclass].set(bo)
    prepared["head"] = (wc_p, bc_p, wo_p, bo_p)
    return prepared


# ---------------------------------------------------------------------------
# Full forward pass (eval mode: dropout == identity).
# ---------------------------------------------------------------------------
def truncated_krylov_forward(prepared, x, adj, n_blocks, activation="tanh", tm=256):
    n, nfeat = x.shape
    nfeat_p, _, _ = prepared["dims"]
    tm = min(tm, n)
    assert n % tm == 0 and tm % 16 == 0, "row tile must divide N and be 16-aligned"

    adj_b = adj.astype(jnp.bfloat16)
    h = jnp.zeros((n, nfeat_p), jnp.bfloat16).at[:, :nfeat].set(x.astype(jnp.bfloat16))

    for (w_p, b_p) in prepared["hidden"]:
        # F.dropout(..., training=False) is the identity -> nothing to emit.
        h = krylov_layer(adj_b, h, w_p, b_p, activation, tm)

    wc_p, bc_p, wo_p, bo_p = prepared["head"]
    out_pad = head_layer(h, wc_p, bc_p, wo_p, bo_p, prepared["nclass"], tm)
    return out_pad[:, :prepared["nclass"]]
    # TODO(synk): training-mode dropout (random masks) not implemented; eval path only.
    # TODO(synk): optional fp8 (v7x) / int8 (v5e/v6e) feed for A to halve its HBM bytes.


# ---------------------------------------------------------------------------
# Pure-JAX f32 reference (same math as the PyTorch module, eval path).
# ---------------------------------------------------------------------------
def reference_forward(raw, x, adj, n_blocks, activation="tanh"):
    h = x
    for (w, b) in raw["hidden"]:
        blocks = [h]
        cur = h
        for _ in range(n_blocks - 1):
            cur = adj @ cur
            blocks.append(cur)
        kry = jnp.concatenate(blocks, axis=1)
        h = _apply_act(kry @ w + b, activation)
    wc, bc = raw["classifier"]
    wo, bo = raw["out"]
    h1 = jnp.tanh(h @ wc + bc)
    logits = h1 @ wo + bo
    return jax.nn.log_softmax(logits, axis=1)


if __name__ == "__main__":
    N, NFEAT, NLAYERS, NHID, NCLASS, NBLOCKS = 512, 48, 2, 32, 7, 3
    TM = 256

    key = jax.random.PRNGKey(0)
    kx, ka, kp = jax.random.split(key, 3)

    x = jax.random.normal(kx, (N, NFEAT), dtype=jnp.float32)
    # symmetric-ish, row-normalized dense "adjacency"
    a = jax.random.uniform(ka, (N, N), dtype=jnp.float32)
    a = (a + a.T) * 0.5
    adj = a / jnp.sum(a, axis=1, keepdims=True)

    raw = init_params(kp, NFEAT, NLAYERS, NHID, NCLASS, NBLOCKS)
    prepared = prepare_params(raw, NBLOCKS, NFEAT, NHID, NCLASS)

    out = truncated_krylov_forward(prepared, x, adj, NBLOCKS, activation="tanh", tm=TM)
    out = jax.block_until_ready(out)

    with jax.default_matmul_precision("highest"):
        ref = reference_forward(raw, x, adj, NBLOCKS, activation="tanh")

    assert out.shape == (N, NCLASS)
    assert bool(jnp.all(jnp.isfinite(out)))
    # log_softmax rows must sum (in prob space) to ~1
    assert bool(jnp.allclose(jnp.sum(jnp.exp(out), axis=1), 1.0, atol=1e-4))
    err = float(jnp.max(jnp.abs(out - ref)))
    assert err < 5e-2, f"max |kernel - f32 reference| = {err}"
    print("KERNEL_OK")
</pallas_src>

<mosaic_0001>
module attributes {stable_mosaic.version = 11 : i64} {
  func.func @_krylov_layer_kernel(%arg0: i32, %arg1: i32, %arg2: memref<256x512xbf16, #tpu.memory_space<vmem>>, %arg3: memref<256x128xbf16, #tpu.memory_space<vmem>>, %arg4: memref<1x128x128xbf16, #tpu.memory_space<vmem>>, %arg5: memref<1x128xf32, #tpu.memory_space<vmem>>, %arg6: memref<256x128xbf16, #tpu.memory_space<vmem>>, %arg7: memref<512x128xbf16, #tpu.memory_space<vmem>>, %arg8: memref<512x128xbf16, #tpu.memory_space<vmem>>, %arg9: memref<512x128xf32, #tpu.memory_space<vmem>>) attributes {dimension_semantics = [#tpu.dimension_semantics<arbitrary>, #tpu.dimension_semantics<arbitrary>], iteration_bounds = array<i64: 3, 2>, scalar_prefetch = 0 : i64, scratch_operands = 3 : i64, tpu.core_type = #tpu.core_type<tc>, window_params = [{transform_indices = @transform_0, window_bounds = array<i64: 256, 512>}, {transform_indices = @transform_1, window_bounds = array<i64: 256, 128>}, {transform_indices = @transform_2, window_bounds = array<i64: 1, 128, 128>}, {pipeline_mode = #tpu.pipeline_mode<synchronous>, transform_indices = @transform_3, window_bounds = array<i64: 1, 128>}, {transform_indices = @transform_4, window_bounds = array<i64: 256, 128>}]} {
    %c256_i32 = arith.constant 256 : i32
    %0 = arith.muli %arg1, %c256_i32 : i32
    %1 = tpu.assume_multiple %0, 256 : i32
    %c0_i32 = arith.constant 0 : i32
    %2 = arith.cmpi eq, %arg0, %c0_i32 : i32
    %3 = arith.extui %2 : i1 to i32
    %c0_i32_0 = arith.constant 0 : i32
    %4 = arith.cmpi ne, %3, %c0_i32_0 : i32
    scf.if %4 {
      %c0 = arith.constant 0 : index
      %c0_19 = arith.constant 0 : index
      %38 = vector.load %arg3[%c0, %c0_19] : memref<256x128xbf16, #tpu.memory_space<vmem>>, vector<256x128xbf16>
      %c0_20 = arith.constant 0 : index
      %c0_21 = arith.constant 0 : index
      %c0_22 = arith.constant 0 : index
      %39 = vector.load %arg4[%c0_20, %c0_21, %c0_22] : memref<1x128x128xbf16, #tpu.memory_space<vmem>>, vector<1x128x128xbf16>
      %40 = vector.shape_cast %39 : vector<1x128x128xbf16> to vector<128x128xbf16>
      %cst = arith.constant dense<0.000000e+00> : vector<256x128xf32>
      %41 = tpu.matmul %38, %40, %cst {dimension_numbers = #tpu.dot_dimension_numbers<[1], [0], [0], [1], [0, 0, 1, 1], [], []>} : vector<256x128xbf16>, vector<128x128xbf16>, vector<256x128xf32> -> vector<256x128xf32>
      %42 = arith.index_cast %1 : i32 to index
      %c0_23 = arith.constant 0 : index
      %43 = vector.load %arg9[%42, %c0_23] : memref<512x128xf32, #tpu.memory_space<vmem>>, vector<256x128xf32>
      tpu.vector_store %arg9[%42, %c0_23], %41 {strides = array<i32>} : memref<512x128xf32, #tpu.memory_space<vmem>>, vector<256x128xf32>,
      %44 = arith.index_cast %1 : i32 to index
      %c0_24 = arith.constant 0 : index
      %45 = vector.load %arg7[%44, %c0_24] : memref<512x128xbf16, #tpu.memory_space<vmem>>, vector<256x128xbf16>
      tpu.vector_store %arg7[%44, %c0_24], %38 {strides = array<i32>} : memref<512x128xbf16, #tpu.memory_space<vmem>>, vector<256x128xbf16>,
    } else {
    }
    %c0_i32_1 = arith.constant 0 : i32
    %5 = arith.cmpi sgt, %arg0, %c0_i32_1 : i32
    %c2_i32 = arith.constant 2 : i32
    %c0_i32_2 = arith.constant 0 : i32
    %6 = arith.cmpi eq, %c2_i32, %c0_i32_2 : i32
    %c1_i32 = arith.constant 1 : i32
    %7 = arith.select %6, %c1_i32, %c2_i32 : i32
    %8 = arith.remsi %arg0, %7 : i32
    %c0_i32_3 = arith.constant 0 : i32
    %9 = arith.cmpi ne, %8, %c0_i32_3 : i32
    %c0_i32_4 = arith.constant 0 : i32
    %10 = arith.cmpi slt, %8, %c0_i32_4 : i32
    %c0_i32_5 = arith.constant 0 : i32
    %11 = arith.cmpi slt, %7, %c0_i32_5 : i32
    %12 = arith.xori %10, %11 : i1
    %13 = arith.andi %12, %9 : i1
    %14 = arith.addi %8, %7 : i32
    %15 = arith.select %13, %14, %8 : i32
    %c1_i32_6 = arith.constant 1 : i32
    %16 = arith.cmpi eq, %15, %c1_i32_6 : i32
    %17 = arith.andi %5, %16 : i1
    %18 = arith.extui %17 : i1 to i32
    %c0_i32_7 = arith.constant 0 : i32
    %19 = arith.cmpi ne, %18, %c0_i32_7 : i32
    scf.if %19 {
      %c0 = arith.constant 0 : index
      %c0_19 = arith.constant 0 : index
      %38 = vector.load %arg2[%c0, %c0_19] : memref<256x512xbf16, #tpu.memory_space<vmem>>, vector<256x512xbf16>
      %c0_20 = arith.constant 0 : index
      %c0_21 = arith.constant 0 : index
      %39 = vector.load %arg7[%c0_20, %c0_21] : memref<512x128xbf16, #tpu.memory_space<vmem>>, vector<512x128xbf16>
      %cst = arith.constant dense<0.000000e+00> : vector<256x128xf32>
      %40 = tpu.matmul %38, %39, %cst {dimension_numbers = #tpu.dot_dimension_numbers<[1], [0], [0], [1], [0, 0, 1, 1], [], []>} : vector<256x512xbf16>, vector<512x128xbf16>, vector<256x128xf32> -> vector<256x128xf32>
      %41 = arith.truncf %40 : vector<256x128xf32> to vector<256x128xbf16>
      %42 = arith.index_cast %1 : i32 to index
      %c0_22 = arith.constant 0 : index
      %43 = vector.load %arg9[%42, %c0_22] : memref<512x128xf32, #tpu.memory_space<vmem>>, vector<256x128xf32>
      %c0_23 = arith.constant 0 : index
      %c0_24 = arith.constant 0 : index
      %c0_25 = arith.constant 0 : index
      %44 = vector.load %arg4[%c0_23, %c0_24, %c0_25] : memref<1x128x128xbf16, #tpu.memory_space<vmem>>, vector<1x128x128xbf16>
      %45 = vector.shape_cast %44 : vector<1x128x128xbf16> to vector<128x128xbf16>
      %cst_26 = arith.constant dense<0.000000e+00> : vector<256x128xf32>
      %46 = tpu.matmul %41, %45, %cst_26 {dimension_numbers = #tpu.dot_dimension_numbers<[1], [0], [0], [1], [0, 0, 1, 1], [], []>} : vector<256x128xbf16>, vector<128x128xbf16>, vector<256x128xf32> -> vector<256x128xf32>
      %47 = arith.addf %43, %46 : vector<256x128xf32>
      %48 = arith.index_cast %1 : i32 to index
      %c0_27 = arith.constant 0 : index
      %49 = vector.load %arg9[%48, %c0_27] : memref<512x128xf32, #tpu.memory_space<vmem>>, vector<256x128xf32>
      tpu.vector_store %arg9[%48, %c0_27], %47 {strides = array<i32>} : memref<512x128xf32, #tpu.memory_space<vmem>>, vector<256x128xf32>,
      %c2_i32_28 = arith.constant 2 : i32
      %50 = arith.cmpi slt, %arg0, %c2_i32_28 : i32
      %51 = arith.extui %50 : i1 to i32
      %c0_i32_29 = arith.constant 0 : i32
      %52 = arith.cmpi ne, %51, %c0_i32_29 : i32
      scf.if %52 {
        %53 = arith.index_cast %1 : i32 to index
        %c0_30 = arith.constant 0 : index
        %54 = vector.load %arg8[%53, %c0_30] : memref<512x128xbf16, #tpu.memory_space<vmem>>, vector<256x128xbf16>
        tpu.vector_store %arg8[%53, %c0_30], %41 {strides = array<i32>} : memref<512x128xbf16, #tpu.memory_space<vmem>>, vector<256x128xbf16>,
      } else {
      }
    } else {
    }
    %c0_i32_8 = arith.constant 0 : i32
    %20 = arith.cmpi sgt, %arg0, %c0_i32_8 : i32
    %c2_i32_9 = arith.constant 2 : i32
    %c0_i32_10 = arith.constant 0 : i32
    %21 = arith.cmpi eq, %c2_i32_9, %c0_i32_10 : i32
    %c1_i32_11 = arith.constant 1 : i32
    %22 = arith.select %21, %c1_i32_11, %c2_i32_9 : i32
    %23 = arith.remsi %arg0, %22 : i32
    %c0_i32_12 = arith.constant 0 : i32
    %24 = arith.cmpi ne, %23, %c0_i32_12 : i32
    %c0_i32_13 = arith.constant 0 : i32
    %25 = arith.cmpi slt, %23, %c0_i32_13 : i32
    %c0_i32_14 = arith.constant 0 : i32
    %26 = arith.cmpi slt, %22, %c0_i32_14 : i32
    %27 = arith.xori %25, %26 : i1
    %28 = arith.andi %27, %24 : i1
    %29 = arith.addi %23, %22 : i32
    %30 = arith.select %28, %29, %23 : i32
    %c0_i32_15 = arith.constant 0 : i32
    %31 = arith.cmpi eq, %30, %c0_i32_15 : i32
    %32 = arith.andi %20, %31 : i1
    %33 = arith.extui %32 : i1 to i32
    %c0_i32_16 = arith.constant 0 : i32
    %34 = arith.cmpi ne, %33, %c0_i32_16 : i32
    scf.if %34 {
      %c0 = arith.constant 0 : index
      %c0_19 = arith.constant 0 : index
      %38 = vector.load %arg2[%c0, %c0_19] : memref<256x512xbf16, #tpu.memory_space<vmem>>, vector<256x512xbf16>
      %c0_20 = arith.constant 0 : index
      %c0_21 = arith.constant 0 : index
      %39 = vector.load %arg8[%c0_20, %c0_21] : memref<512x128xbf16, #tpu.memory_space<vmem>>, vector<512x128xbf16>
      %cst = arith.constant dense<0.000000e+00> : vector<256x128xf32>
      %40 = tpu.matmul %38, %39, %cst {dimension_numbers = #tpu.dot_dimension_numbers<[1], [0], [0], [1], [0, 0, 1, 1], [], []>} : vector<256x512xbf16>, vector<512x128xbf16>, vector<256x128xf32> -> vector<256x128xf32>
      %41 = arith.truncf %40 : vector<256x128xf32> to vector<256x128xbf16>
      %42 = arith.index_cast %1 : i32 to index
      %c0_22 = arith.constant 0 : index
      %43 = vector.load %arg9[%42, %c0_22] : memref<512x128xf32, #tpu.memory_space<vmem>>, vector<256x128xf32>
      %c0_23 = arith.constant 0 : index
      %c0_24 = arith.constant 0 : index
      %c0_25 = arith.constant 0 : index
      %44 = vector.load %arg4[%c0_23, %c0_24, %c0_25] : memref<1x128x128xbf16, #tpu.memory_space<vmem>>, vector<1x128x128xbf16>
      %45 = vector.shape_cast %44 : vector<1x128x128xbf16> to vector<128x128xbf16>
      %cst_26 = arith.constant dense<0.000000e+00> : vector<256x128xf32>
      %46 = tpu.matmul %41, %45, %cst_26 {dimension_numbers = #tpu.dot_dimension_numbers<[1], [0], [0], [1], [0, 0, 1, 1], [], []>} : vector<256x128xbf16>, vector<128x128xbf16>, vector<256x128xf32> -> vector<256x128xf32>
      %47 = arith.addf %43, %46 : vector<256x128xf32>
      %48 = arith.index_cast %1 : i32 to index
      %c0_27 = arith.constant 0 : index
      %49 = vector.load %arg9[%48, %c0_27] : memref<512x128xf32, #tpu.memory_space<vmem>>, vector<256x128xf32>
      tpu.vector_store %arg9[%48, %c0_27], %47 {strides = array<i32>} : memref<512x128xf32, #tpu.memory_space<vmem>>, vector<256x128xf32>,
      %c2_i32_28 = arith.constant 2 : i32
      %50 = arith.cmpi slt, %arg0, %c2_i32_28 : i32
      %51 = arith.extui %50 : i1 to i32
      %c0_i32_29 = arith.constant 0 : i32
      %52 = arith.cmpi ne, %51, %c0_i32_29 : i32
      scf.if %52 {
        %53 = arith.index_cast %1 : i32 to index
        %c0_30 = arith.constant 0 : index
        %54 = vector.load %arg7[%53, %c0_30] : memref<512x128xbf16, #tpu.memory_space<vmem>>, vector<256x128xbf16>
        tpu.vector_store %arg7[%53, %c0_30], %41 {strides = array<i32>} : memref<512x128xbf16, #tpu.memory_space<vmem>>, vector<256x128xbf16>,
      } else {
      }
    } else {
    }
    %c2_i32_17 = arith.constant 2 : i32
    %35 = arith.cmpi eq, %arg0, %c2_i32_17 : i32
    %36 = arith.extui %35 : i1 to i32
    %c0_i32_18 = arith.constant 0 : i32
    %37 = arith.cmpi ne, %36, %c0_i32_18 : i32
    scf.if %37 {
      %38 = arith.index_cast %1 : i32 to index
      %c0 = arith.constant 0 : index
      %39 = vector.load %arg9[%38, %c0] : memref<512x128xf32, #tpu.memory_space<vmem>>, vector<256x128xf32>
      %c0_19 = arith.constant 0 : index
      %c0_20 = arith.constant 0 : index
      %40 = vector.load %arg5[%c0_19, %c0_20] : memref<1x128xf32, #tpu.memory_space<vmem>>, vector<1x128xf32>
      %41 = vector.broadcast %40 : vector<1x128xf32> to vector<256x128xf32>
      %42 = arith.addf %39, %41 : vector<256x128xf32>
      %43 = math.tanh %42 : vector<256x128xf32>
      %44 = arith.truncf %43 : vector<256x128xf32> to vector<256x128xbf16>
      %c0_21 = arith.constant 0 : index
      %c0_22 = arith.constant 0 : index
      %45 = vector.load %arg6[%c0_21, %c0_22] : memref<256x128xbf16, #tpu.memory_space<vmem>>, vector<256x128xbf16>
      tpu.vector_store %arg6[%c0_21, %c0_22], %44 {strides = array<i32>} : memref<256x128xbf16, #tpu.memory_space<vmem>>, vector<256x128xbf16>,
    } else {
    }
    return
  }
  func.func @transform_0(%arg0: i32, %arg1: i32) -> (i32, i32) {
    %c0_i32 = arith.constant 0 : i32
    %0 = arith.cmpi eq, %arg0, %c0_i32 : i32
    %c0_i32_0 = arith.constant 0 : i32
    %1 = arith.select %0, %c0_i32_0, %arg1 : i32
    %c0_i32_1 = arith.constant 0 : i32
    %c0_i32_2 = arith.constant 0 : i32
    return %1, %c0_i32_1 : i32, i32
  }
  func.func @transform_1(%arg0: i32, %arg1: i32) -> (i32, i32) {
    %c0_i32 = arith.constant 0 : i32
    %0 = arith.cmpi eq, %arg0, %c0_i32 : i32
    %c0_i32_0 = arith.constant 0 : i32
    %1 = arith.select %0, %arg1, %c0_i32_0 : i32
    %c0_i32_1 = arith.constant 0 : i32
    %c0_i32_2 = arith.constant 0 : i32
    return %1, %c0_i32_1 : i32, i32
  }
  func.func @transform_2(%arg0: i32, %arg1: i32) -> (i32, i32, i32) {
    %c0_i32 = arith.constant 0 : i32
    %c0_i32_0 = arith.constant 0 : i32
    %c0_i32_1 = arith.constant 0 : i32
    return %arg0, %c0_i32, %c0_i32_0 : i32, i32, i32
  }
  func.func @transform_3(%arg0: i32, %arg1: i32) -> (i32, i32) {
    %c0_i32 = arith.constant 0 : i32
    %c0_i32_0 = arith.constant 0 : i32
    %c0_i32_1 = arith.constant 0 : i32
    return %c0_i32, %c0_i32_0 : i32, i32
  }
  func.func @transform_4(%arg0: i32, %arg1: i32) -> (i32, i32) {
    %c0_i32 = arith.constant 0 : i32
    %c0_i32_0 = arith.constant 0 : i32
    return %arg1, %c0_i32 : i32, i32
  }
}

</mosaic_0001>

<llo_original>
// kernel: tpu_custom_call.1
$region0: #{tpu_custom_call.1}
  #allocation0 [shape = 'u32[]', space=smem, size = 0x4, offset = 0x4, fixed_abs, tag = 'smem constant byte address 0x4 - core index']
  #allocation1 [shape = 'u32[144,128]{1,0:T(1,128)}', space=vmem, size = 0x12000, scoped, tag = 'internal scratch']
  #allocation2 [shape = 'bf16[512,128]{1,0:T(16,128)(2,1)}', space=vmem, size = 0x20000, scoped, tag = 'scratch operand']
  #allocation3 [shape = 'bf16[512,128]{1,0:T(16,128)(2,1)}', space=vmem, size = 0x20000, scoped, tag = 'scratch operand']
  #allocation4 [shape = 'f32[512,128]{1,0:T(8,128)}', space=vmem, size = 0x40000, scoped, tag = 'scratch operand']
  %s0 = inlined_call_operand.hbm [shape: bf16[512,512], index: 0, kind: input, shape index: {}]
  %s1 = inlined_call_operand.hbm [shape: bf16[512,128], index: 1, kind: input, shape index: {}]
  %s2 = inlined_call_operand.hbm [shape: bf16[3,128,128], index: 2, kind: input, shape index: {}]
  %s3 = inlined_call_operand.vmem [shape: f32[1,128], index: 3, kind: input, shape index: {}]
  %s4 = inlined_call_operand.hbm [shape: bf16[512,128], index: 4, kind: output, shape index: {}]
  %s5 = sld [smem:[#allocation0]]
  $region85: #{tpu_custom_call.1} parent=0
    _
  %s7 = ssub.s32 1, %s5
  %s8 = scalar_select 0, %s7, %s5
  $region1: #{tpu_custom_call.1} parent=0
    #allocation5 [shape = 'u8[524288]{0}', space=vmem, size = 0x80000, scoped, tag = 'input window, operand 0']
    #allocation6 [shape = 's32[2]{0}', space=sflag, size = 0x8, scoped, tag = 'scoped memory for tpu_custom_call.1']
    #allocation7 [shape = 's32[2]{0}', space=sflag, size = 0x8, scoped, tag = 'scoped memory for tpu_custom_call.1']
    #allocation8 [shape = 'u8[131072]{0}', space=vmem, size = 0x20000, scoped, tag = 'input window, operand 1']
    #allocation9 [shape = 's32[2]{0}', space=sflag, size = 0x8, scoped, tag = 'scoped memory for tpu_custom_call.1']
    #allocation10 [shape = 'u8[65536]{0}', space=vmem, size = 0x10000, scoped, tag = 'input window, operand 2']
    #allocation11 [shape = 'u8[131072]{0}', space=vmem, size = 0x20000, scoped, tag = 'output window, operand 0']
    %9 = vsyncpa [#allocation6], 0
    %s10 = scalar_lea.sflag [#allocation6], 1
    %11 = vsyncpa %s10, 0
    %12 = vsyncpa [#allocation9], 0
    %s13 = scalar_lea.sflag [#allocation9], 1
    %14 = vsyncpa %s13, 0
    %15 = vsyncpa [#allocation7], 0
    %s16 = scalar_lea.sflag [#allocation7], 1
    %17 = vsyncpa %s16, 0
    loop: start=0, step=1, limit=8
    $region2: #{tpu_custom_call.1} parent=1 // loop_pre_header
      _
    $region3: #{tpu_custom_call.1} parent=1 // loop_header
      %s19 = sphi 0, %s23
      %p20 = scmp.ge.s32.totalorder %s19, 8
      %s26 = sphi 0, %s38
      %s27 = sphi 0, %s34
      %s28 = sphi 0, %s26
      %s29 = sphi 0, %s27
      %s30 = sphi 0, %s28
      %s31 = sphi 0, %s29
      %s45 = sphi 0, %s47
      %s48 = sphi 0, %s45
      %s49 = sphi 0, %s48
      %s65 = sphi 0, %s49
      %s75 = sphi 0, %s77
      %s78 = sphi 0, %s75
      %s79 = sphi 0, %s78
      %s95 = sphi 0, %s79
      %s101 = sphi 0, %s103
      %s104 = sphi 0, %s101
      %s105 = sphi 0, %s104
      %s121 = sphi 0, %s105
      %s125 = sphi 0, %s125
      %s127 = sphi 0, %s125
      %s128 = sphi 0, %s127
      %s142 = sphi 0, %s128
      %s148 = sphi 0, %s150
      %s151 = sphi 0, %s148
      %s152 = sphi 0, %s151
      %s168 = sphi 0, %s152
    $region4: #{tpu_custom_call.1} parent=1 // loop_header_branch
      %22 = sbr.rel (%p20) target = $region8
    $region5: #{tpu_custom_call.1} parent=1 // loop_body
      %s24 = ssub.s32 %s19, 1
      %s25 = ssub.s32 %s19, 2
      %s32 = sadd.s32 1, %s27
      %p33 = scmp.ge.s32.totalorder %s32, 2
      %s34 = scalar_select %p33, 0, %s32
      %s35 = sadd.s32 1, %s26
      %s36 = scalar_select %p33, %s35, %s26
      %p37 = scmp.ge.s32.totalorder %s36, 3
      %s38 = scalar_select %p37, 0, %s36
      %p39 = scmp.eq.s32.totalorder %s26, 0
      %s40 = scalar_select %p39, 0, %s27
      %p41 = scmp.eq.s32.totalorder %s38, 0
      %s42 = scalar_select %p41, 0, %s34
      %s43 = ssub.s32 %s40, %s42
      %p44 = scmp.eq.s32.totalorder %s43, 0
      %s46 = sadd.s32 %s45, 1
      %s47 = scalar_select %p44, %s45, %s46
      %p50 = pneg %p44
      %p51 = scmp.eq.s32.totalorder %s19, 5
      %p52 = por %p50, %p51
      %p53 = scmp.ne.s32.totalorder %s45, %s48
      %p54 = scmp.eq.s32.totalorder %s19, 0
      %p55 = por %p53, %p54
      %p56 = scmp.ne.s32.totalorder %s45, %s48
      %p57 = scmp.eq.s32.totalorder %s24, 5
      %p58 = por %p56, %p57
      %p59 = scmp.ne.s32.totalorder %s48, %s49
      %p60 = scmp.eq.s32.totalorder %s24, 0
      %p61 = por %p59, %p60
      %p62 = scmp.ne.s32.totalorder %s48, %s49
      %p63 = scmp.eq.s32.totalorder %s25, 5
      %p64 = por %p62, %p63
      %p66 = scmp.ne.s32.totalorder %s49, %s65
      %p67 = scmp.eq.s32.totalorder %s25, 0
      %p68 = por %p66, %p67
      %p69 = scmp.eq.s32.totalorder %s26, 0
      %s70 = scalar_select %p69, %s27, 0
      %p71 = scmp.eq.s32.totalorder %s38, 0
      %s72 = scalar_select %p71, %s34, 0
      %s73 = ssub.s32 %s70, %s72
      %p74 = scmp.eq.s32.totalorder %s73, 0
      %s76 = sadd.s32 %s75, 1
      %s77 = scalar_select %p74, %s75, %s76
      %p80 = pneg %p74
      %p81 = scmp.eq.s32.totalorder %s19, 5
      %p82 = por %p80, %p81
      %p83 = scmp.ne.s32.totalorder %s75, %s78
      %p84 = scmp.eq.s32.totalorder %s19, 0
      %p85 = por %p83, %p84
      %p86 = scmp.ne.s32.totalorder %s75, %s78
      %p87 = scmp.eq.s32.totalorder %s24, 5
      %p88 = por %p86, %p87
      %p89 = scmp.ne.s32.totalorder %s78, %s79
      %p90 = scmp.eq.s32.totalorder %s24, 0
      %p91 = por %p89, %p90
      %p92 = scmp.ne.s32.totalorder %s78, %s79
      %p93 = scmp.eq.s32.totalorder %s25, 5
      %p94 = por %p92, %p93
      %p96 = scmp.ne.s32.totalorder %s79, %s95
      %p97 = scmp.eq.s32.totalorder %s25, 0
      %p98 = por %p96, %p97
      %s99 = ssub.s32 %s26, %s38
      %p100 = scmp.eq.s32.totalorder %s99, 0
      %s102 = sadd.s32 %s101, 1
      %s103 = scalar_select %p100, %s101, %s102
      %p106 = pneg %p100
      %p107 = scmp.eq.s32.totalorder %s19, 5
      %p108 = por %p106, %p107
      %p109 = scmp.ne.s32.totalorder %s101, %s104
      %p110 = scmp.eq.s32.totalorder %s19, 0
      %p111 = por %p109, %p110
      %p112 = scmp.ne.s32.totalorder %s101, %s104
      %p113 = scmp.eq.s32.totalorder %s24, 5
      %p114 = por %p112, %p113
      %p115 = scmp.ne.s32.totalorder %s104, %s105
      %p116 = scmp.eq.s32.totalorder %s24, 0
      %p117 = por %p115, %p116
      %p118 = scmp.ne.s32.totalorder %s104, %s105
      %p119 = scmp.eq.s32.totalorder %s25, 5
      %p120 = por %p118, %p119
      %p122 = scmp.ne.s32.totalorder %s105, %s121
      %p123 = scmp.eq.s32.totalorder %s25, 0
      %p124 = por %p122, %p123
      %s126 = sadd.s32 %s125, 1
      %p129 = scmp.eq.s32.totalorder %s19, 5
      %p130 = scmp.ne.s32.totalorder %s125, %s127
      %p131 = scmp.eq.s32.totalorder %s19, 0
      %p132 = por %p130, %p131
      %p133 = scmp.ne.s32.totalorder %s125, %s127
      %p134 = scmp.eq.s32.totalorder %s24, 5
      %p135 = por %p133, %p134
      %p136 = scmp.ne.s32.totalorder %s127, %s128
      %p137 = scmp.eq.s32.totalorder %s24, 0
      %p138 = por %p136, %p137
      %p139 = scmp.ne.s32.totalorder %s127, %s128
      %p140 = scmp.eq.s32.totalorder %s25, 5
      %p141 = por %p139, %p140
      %p143 = scmp.ne.s32.totalorder %s128, %s142
      %p144 = scmp.eq.s32.totalorder %s25, 0
      %p145 = por %p143, %p144
      %s146 = ssub.s32 %s27, %s34
      %p147 = scmp.eq.s32.totalorder %s146, 0
      %s149 = sadd.s32 %s148, 1
      %s150 = scalar_select %p147, %s148, %s149
      %p153 = pneg %p147
      %p154 = scmp.eq.s32.totalorder %s19, 5
      %p155 = por %p153, %p154
      %p156 = scmp.ne.s32.totalorder %s148, %s151
      %p157 = scmp.eq.s32.totalorder %s19, 0
      %p158 = por %p156, %p157
      %p159 = scmp.ne.s32.totalorder %s148, %s151
      %p160 = scmp.eq.s32.totalorder %s24, 5
      %p161 = por %p159, %p160
      %p162 = scmp.ne.s32.totalorder %s151, %s152
      %p163 = scmp.eq.s32.totalorder %s24, 0
      %p164 = por %p162, %p163
      %p165 = scmp.ne.s32.totalorder %s151, %s152
      %p166 = scmp.eq.s32.totalorder %s25, 5
      %p167 = por %p165, %p166
      %p169 = scmp.ne.s32.totalorder %s152, %s168
      %p170 = scmp.eq.s32.totalorder %s25, 0
      %p171 = por %p169, %p170
      %p172 = scmp.le.s32.totalorder 1, %s19
      %p173 = scmp.lt.s32.totalorder %s19, 7
      %p174 = pnand %p172, %p173
      %p175 = pneg %p174
      // Predicated region
      $region9: #{tpu_custom_call.1} parent=5 // pred_check
        _
      $region10: #{tpu_custom_call.1} parent=5 // pred_check_branch
        %177 = sbr.rel (%p174) target = $region12
      $region11: #{tpu_custom_call.1} parent=5 // pred_region
        %s178 = ssub.s32 %s19, 1
        // Predicated region
        $region13: #{tpu_custom_call.1} parent=11 // pred_check
          %p179 = pneg %p138
        $region14: #{tpu_custom_call.1} parent=11 // pred_check_branch
          %181 = sbr.rel (%p179) target = $region16
        $region15: #{tpu_custom_call.1} parent=11 // pred_region
          _
        $region16: #{tpu_custom_call.1} parent=11 // pred_fallthru
          _
      $region12: #{tpu_custom_call.1} parent=5 // pred_fallthru
        _
      %p182 = scmp.lt.s32.totalorder %s19, 6
      // Predicated region
      $region17: #{tpu_custom_call.1} parent=5 // pred_check
        %p183 = pneg %p182
      $region18: #{tpu_custom_call.1} parent=5 // pred_check_branch
        %185 = sbr.rel (%p183) target = $region20
      $region19: #{tpu_custom_call.1} parent=5 // pred_region
        // Predicated region
        $region21: #{tpu_custom_call.1} parent=19 // pred_check
          %p186 = pneg %p55
        $region22: #{tpu_custom_call.1} parent=19 // pred_check_branch
          %188 = sbr.rel (%p186) target = $region24
        $region23: #{tpu_custom_call.1} parent=19 // pred_region
          %s189 = sand.u32 %s45, 1
          %s190 = scalar_lea.sflag [#allocation6], %s189
          %s191 = sand.u32 %s45, 1
          %s192 = smul.addr %s191, 512
          %s193 = scalar_lea.vmem [#allocation5], %s192
          %p194 = scmp.eq.s32.totalorder %s26, 0
          %s195 = scalar_select %p194, 0, %s27
          %s196 = smul.u32 32, %s195
          %s198 = ssub.s32 8192, 8192
          %199 = vsyncadd %s190, %s198
          %s200 = smul.addr %s196, 4
          %s201 = smul.addr %s200, 64
          %s202 = scalar_lea.hbm %s0, %s201
          %s203 = sshll.u32 %s193, 4
          %s204 = int_to_ptr.vmem [resolvable:$true] %s203
          %209 = dma.hbm_to_vmem [thread:$0]  %s202, 8192, %s204, %s190, 256, 256, 16
        $region24: #{tpu_custom_call.1} parent=19 // pred_fallthru
          _
        // Predicated region
        $region25: #{tpu_custom_call.1} parent=19 // pred_check
          %p210 = pneg %p85
        $region26: #{tpu_custom_call.1} parent=19 // pred_check_branch
          %212 = sbr.rel (%p210) target = $region28
        $region27: #{tpu_custom_call.1} parent=19 // pred_region
          %s213 = sand.u32 %s19, 1
          %s214 = scalar_lea.sflag [#allocation9], %s213
          %s215 = sand.u32 %s75, 1
          %s216 = smul.addr %s215, 128
          %s217 = scalar_lea.vmem [#allocation8], %s216
          %p218 = scmp.eq.s32.totalorder %s26, 0
          %s219 = scalar_select %p218, %s27, 0
          %s220 = smul.u32 32, %s219
          %s222 = ssub.s32 2048, 2048
          %223 = vsyncadd %s214, %s222
          %s224 = smul.addr %s220, 64
          %s225 = scalar_lea.hbm %s1, %s224
          %s226 = sshll.u32 %s217, 4
          %s227 = int_to_ptr.vmem [resolvable:$true] %s226
          %232 = dma.hbm_to_vmem [thread:$0]  %s225, 2048, %s227, %s214, 64, 64, 4
        $region28: #{tpu_custom_call.1} parent=19 // pred_fallthru
          _
        // Predicated region
        $region29: #{tpu_custom_call.1} parent=19 // pred_check
          %p233 = pneg %p111
        $region30: #{tpu_custom_call.1} parent=19 // pred_check_branch
          %235 = sbr.rel (%p233) target = $region32
        $region31: #{tpu_custom_call.1} parent=19 // pred_region
          %s236 = sand.u32 %s19, 1
          %s237 = scalar_lea.sflag [#allocation9], %s236
          %s238 = sand.u32 %s101, 1
          %s239 = smul.addr %s238, 64
          %s240 = scalar_lea.vmem [#allocation10], %s239
          %s242 = ssub.s32 1024, 1024
          %243 = vsyncadd %s237, %s242
          %s244 = smul.addr %s26, 16
          %s245 = smul.addr %s244, 64
          %s246 = scalar_lea.hbm %s2, %s245
          %s247 = sshll.u32 %s240, 4
          %s248 = int_to_ptr.vmem [resolvable:$true] %s247
          %253 = dma.hbm_to_vmem [thread:$0]  %s246, 1024, %s248, %s237, 64, 64, 4
        $region32: #{tpu_custom_call.1} parent=19 // pred_fallthru
          _
      $region20: #{tpu_custom_call.1} parent=5 // pred_fallthru
        _
      %p254 = scmp.le.s32.totalorder 1, %s19
      %p255 = scmp.lt.s32.totalorder %s19, 7
      %p256 = pnand %p254, %p255
      %p257 = pneg %p256
      // Predicated region
      $region33: #{tpu_custom_call.1} parent=5 // pred_check
        _
      $region34: #{tpu_custom_call.1} parent=5 // pred_check_branch
        %259 = sbr.rel (%p256) target = $region36
      $region35: #{tpu_custom_call.1} parent=5 // pred_region
        %s260 = ssub.s32 %s19, 1
        %s261 = sand.u32 %s48, 1
        %s262 = scalar_lea.sflag [#allocation6], %s261
        %s263 = sand.u32 %s48, 1
        %s264 = smul.addr %s263, 512
        %s265 = scalar_lea.vmem [#allocation5], %s264
        // Predicated region
        $region37: #{tpu_custom_call.1} parent=35 // pred_check
          %p266 = pneg %p61
        $region38: #{tpu_custom_call.1} parent=35 // pred_check_branch
          %268 = sbr.rel (%p266) target = $region40
        $region39: #{tpu_custom_call.1} parent=35 // pred_region
          %269 = dma.done %s262, 8192
        $region40: #{tpu_custom_call.1} parent=35 // pred_fallthru
          _
        %s270 = sand.u32 %s24, 1
        %s271 = scalar_lea.sflag [#allocation9], %s270
        %s272 = sand.u32 %s78, 1
        %s273 = smul.addr %s272, 128
        %s274 = scalar_lea.vmem [#allocation8], %s273
        // Predicated region
        $region41: #{tpu_custom_call.1} parent=35 // pred_check
          %p275 = pneg %p91
        $region42: #{tpu_custom_call.1} parent=35 // pred_check_branch
          %277 = sbr.rel (%p275) target = $region44
        $region43: #{tpu_custom_call.1} parent=35 // pred_region
          %278 = dma.done %s271, 2048
        $region44: #{tpu_custom_call.1} parent=35 // pred_fallthru
          _
        %s279 = sand.u32 %s24, 1
        %s280 = scalar_lea.sflag [#allocation9], %s279
        %s281 = sand.u32 %s104, 1
        %s282 = smul.addr %s281, 64
        %s283 = scalar_lea.vmem [#allocation10], %s282
        // Predicated region
        $region45: #{tpu_custom_call.1} parent=35 // pred_check
          %p284 = pneg %p117
        $region46: #{tpu_custom_call.1} parent=35 // pred_check_branch
          %286 = sbr.rel (%p284) target = $region48
        $region47: #{tpu_custom_call.1} parent=35 // pred_region
          %287 = dma.done %s280, 1024
        $region48: #{tpu_custom_call.1} parent=35 // pred_fallthru
          _
        %s288 = sand.u32 %s48, 1
        %s289 = scalar_lea.sflag [#allocation6], %s288
        %s290 = sand.u32 %s48, 1
        %s291 = smul.addr %s290, 512
        %s292 = scalar_lea.vmem [#allocation5], %s291
        %p293 = pneg %p61
        %p294 = pneg %p58
        %s295 = sand.u32 %s24, 1
        %s296 = scalar_lea.sflag [#allocation9], %s295
        %s297 = sand.u32 %s78, 1
        %s298 = smul.addr %s297, 128
        %s299 = scalar_lea.vmem [#allocation8], %s298
        %p300 = pneg %p91
        %p301 = pneg %p88
        %s302 = sand.u32 %s24, 1
        %s303 = scalar_lea.sflag [#allocation9], %s302
        %s304 = sand.u32 %s104, 1
        %s305 = smul.addr %s304, 64
        %s306 = scalar_lea.vmem [#allocation10], %s305
        %p307 = pneg %p117
        %p308 = pneg %p114
        %p309 = pneg %p138
        %p310 = pneg %p135
        %p311 = pneg %p164
        %p312 = pneg %p161
        %s313 = sand.u32 %s151, 1
        %s314 = scalar_lea.sflag [#allocation7], %s313
        %s315 = sand.u32 %s151, 1
        %s316 = smul.addr %s315, 128
        %s317 = scalar_lea.vmem [#allocation11], %s316
        %p318 = scmp.eq.s32.totalorder %s28, 0
        %s319 = scalar_select %p318, 0, %s29
        %s320 = smul.u32 32, %s319
        %p321 = scmp.eq.s32.totalorder %s28, 0
        %s322 = scalar_select %p321, %s29, 0
        %s323 = smul.u32 32, %s322
        %s324 = smul.u32 32, %s29
        %s326 = smul.u32 %s29, 256
        %p327 = scmp.eq.s32.totalorder %s28, 0
        // Predicated region
        $region49: #{tpu_custom_call.1} parent=35 // pred_check
          %p328 = pneg %p327
        $region50: #{tpu_custom_call.1} parent=35 // pred_check_branch
          %330 = sbr.rel (%p328) target = $region52
        $region51: #{tpu_custom_call.1} parent=35 // pred_region
          %v331 = vld [vmem:[%s274] sm:$0xf]
          %v332 = vld [vmem:[%s274 + $0x4] sm:$0xf]
          %v333 = vld [vmem:[%s274 + $0x8] sm:$0xf]
          %v334 = vld [vmem:[%s274 + $0xc] sm:$0xf]
          %v335 = vld [vmem:[%s274 + $0x10] sm:$0xf]
          %v336 = vld [vmem:[%s274 + $0x14] sm:$0xf]
          %v337 = vld [vmem:[%s274 + $0x18] sm:$0xf]
          %v338 = vld [vmem:[%s274 + $0x1c] sm:$0xf]
          %v339 = vld [vmem:[%s274 + $0x20] sm:$0xf]
          %v340 = vld [vmem:[%s274 + $0x24] sm:$0xf]
          %v341 = vld [vmem:[%s274 + $0x28] sm:$0xf]
          %v342 = vld [vmem:[%s274 + $0x2c] sm:$0xf]
          %v343 = vld [vmem:[%s274 + $0x30] sm:$0xf]
          %v344 = vld [vmem:[%s274 + $0x34] sm:$0xf]
          %v345 = vld [vmem:[%s274 + $0x38] sm:$0xf]
          %v346 = vld [vmem:[%s274 + $0x3c] sm:$0xf]
          %v347 = vld [vmem:[%s274 + $0x40] sm:$0xf]
          %v348 = vld [vmem:[%s274 + $0x44] sm:$0xf]
          %v349 = vld [vmem:[%s274 + $0x48] sm:$0xf]
          %v350 = vld [vmem:[%s274 + $0x4c] sm:$0xf]
          %v351 = vld [vmem:[%s274 + $0x50] sm:$0xf]
          %v352 = vld [vmem:[%s274 + $0x54] sm:$0xf]
          %v353 = vld [vmem:[%s274 + $0x58] sm:$0xf]
          %v354 = vld [vmem:[%s274 + $0x5c] sm:$0xf]
          %v355 = vld [vmem:[%s274 + $0x60] sm:$0xf]
          %v356 = vld [vmem:[%s274 + $0x64] sm:$0xf]
          %v357 = vld [vmem:[%s274 + $0x68] sm:$0xf]
          %v358 = vld [vmem:[%s274 + $0x6c] sm:$0xf]
          %v359 = vld [vmem:[%s274 + $0x70] sm:$0xf]
          %v360 = vld [vmem:[%s274 + $0x74] sm:$0xf]
          %v361 = vld [vmem:[%s274 + $0x78] sm:$0xf]
          %v362 = vld [vmem:[%s274 + $0x7c] sm:$0xf]
          %v363 = vld [vmem:[%s283] sm:$0xf]
          %v364 = vld [vmem:[%s283 + $0x4] sm:$0xf]
          %v365 = vld [vmem:[%s283 + $0x8] sm:$0xf]
          %v366 = vld [vmem:[%s283 + $0xc] sm:$0xf]
          %v367 = vld [vmem:[%s283 + $0x10] sm:$0xf]
          %v368 = vld [vmem:[%s283 + $0x14] sm:$0xf]
          %v369 = vld [vmem:[%s283 + $0x18] sm:$0xf]
          %v370 = vld [vmem:[%s283 + $0x1c] sm:$0xf]
          %v371 = vld [vmem:[%s283 + $0x20] sm:$0xf]
          %v372 = vld [vmem:[%s283 + $0x24] sm:$0xf]
          %v373 = vld [vmem:[%s283 + $0x28] sm:$0xf]
          %v374 = vld [vmem:[%s283 + $0x2c] sm:$0xf]
          %v375 = vld [vmem:[%s283 + $0x30] sm:$0xf]
          %v376 = vld [vmem:[%s283 + $0x34] sm:$0xf]
          %v377 = vld [vmem:[%s283 + $0x38] sm:$0xf]
          %v378 = vld [vmem:[%s283 + $0x3c] sm:$0xf]
          %v411 = vunpack.c.l.b16 %v331
          %v412 = vunpack.c.l.b16 %v332
          %v413 = vunpack.c.l.b16 %v333
          %v414 = vunpack.c.l.b16 %v334
          %v415 = vunpack.c.l.b16 %v335
          %v416 = vunpack.c.l.b16 %v336
          %v417 = vunpack.c.l.b16 %v337
          %v418 = vunpack.c.l.b16 %v338
          %v419 = vunpack.c.l.b16 %v339
          %v420 = vunpack.c.l.b16 %v340
          %v421 = vunpack.c.l.b16 %v341
          %v422 = vunpack.c.l.b16 %v342
          %v423 = vunpack.c.l.b16 %v343
          %v424 = vunpack.c.l.b16 %v344
          %v425 = vunpack.c.l.b16 %v345
          %v426 = vunpack.c.l.b16 %v346
          %v427 = vunpack.c.l.b16 %v347
          %v428 = vunpack.c.l.b16 %v348
          %v429 = vunpack.c.l.b16 %v349
          %v430 = vunpack.c.l.b16 %v350
          %v431 = vunpack.c.l.b16 %v351
          %v432 = vunpack.c.l.b16 %v352
          %v433 = vunpack.c.l.b16 %v353
          %v434 = vunpack.c.l.b16 %v354
          %v435 = vunpack.c.l.b16 %v355
          %v436 = vunpack.c.l.b16 %v356
          %v437 = vunpack.c.l.b16 %v357
          %v438 = vunpack.c.l.b16 %v358
          %v439 = vunpack.c.l.b16 %v359
          %v440 = vunpack.c.l.b16 %v360
          %v441 = vunpack.c.l.b16 %v361
          %v442 = vunpack.c.l.b16 %v362
          %v443 = vpack.c.b16 %v412, %v411
          %v444 = vpack.c.b16 %v414, %v413
          %v445 = vpack.c.b16 %v416, %v415
          %v446 = vpack.c.b16 %v418, %v417
          %v447 = vpack.c.b16 %v420, %v419
          %v448 = vpack.c.b16 %v422, %v421
          %v449 = vpack.c.b16 %v424, %v423
          %v450 = vpack.c.b16 %v426, %v425
          %v451 = vpack.c.b16 %v428, %v427
          %v452 = vpack.c.b16 %v430, %v429
          %v453 = vpack.c.b16 %v432, %v431
          %v454 = vpack.c.b16 %v434, %v433
          %v455 = vpack.c.b16 %v436, %v435
          %v456 = vpack.c.b16 %v438, %v437
          %v457 = vpack.c.b16 %v440, %v439
          %v458 = vpack.c.b16 %v442, %v441
          %v491 = vunpack.c.l.b16 %v363
          %v492 = vunpack.c.l.b16 %v364
          %v493 = vunpack.c.l.b16 %v365
          %v494 = vunpack.c.l.b16 %v366
          %v495 = vunpack.c.l.b16 %v367
          %v496 = vunpack.c.l.b16 %v368
          %v497 = vunpack.c.l.b16 %v369
          %v498 = vunpack.c.l.b16 %v370
          %v499 = vunpack.c.l.b16 %v371
          %v500 = vunpack.c.l.b16 %v372
          %v501 = vunpack.c.l.b16 %v373
          %v502 = vunpack.c.l.b16 %v374
          %v503 = vunpack.c.l.b16 %v375
          %v504 = vunpack.c.l.b16 %v376
          %v505 = vunpack.c.l.b16 %v377
          %v506 = vunpack.c.l.b16 %v378
          %v507 = vpack.c.b16 %v492, %v491
          %v508 = vpack.c.b16 %v494, %v493
          %v509 = vpack.c.b16 %v496, %v495
          %v510 = vpack.c.b16 %v498, %v497
          %v511 = vpack.c.b16 %v500, %v499
          %v512 = vpack.c.b16 %v502, %v501
          %v513 = vpack.c.b16 %v504, %v503
          %v514 = vpack.c.b16 %v506, %v505
          %523 = vmatprep.subr.bf16.mxu0 0
          %524 = vmatpush1.bf16.msra.mxu0 %v507
          %525 = vmatprep.subr.bf16.mxu0 0
          %526 = vmatpush1.bf16.msra.mxu0 %v508
          %527 = vmatprep.subr.bf16.mxu0 0
          %528 = vmatpush1.bf16.msra.mxu0 %v509
          %529 = vmatprep.subr.bf16.mxu0 0
          %530 = vmatpush1.bf16.msra.mxu0 %v510
          %531 = vmatprep.subr.bf16.mxu0 0
          %532 = vmatpush1.bf16.msra.mxu0 %v511
          %533 = vmatprep.subr.bf16.mxu0 0
          %534 = vmatpush1.bf16.msra.mxu0 %v512
          %535 = vmatprep.subr.bf16.mxu0 0
          %536 = vmatpush1.bf16.msra.mxu0 %v513
          %537 = vmatprep.subr.bf16.mxu0 0
          %538 = vmatpush1.bf16.msra.mxu0 %v514
          %539 = vmatprep.subr.bf16.mxu0 0
          %540 = vmatpush1.bf16.msra.mxu0 0
          %541 = vmatprep.subr.bf16.mxu0 0
          %542 = vmatpush1.bf16.msra.mxu0 0
          %543 = vmatprep.subr.bf16.mxu0 0
          %544 = vmatpush1.bf16.msra.mxu0 0
          %545 = vmatprep.subr.bf16.mxu0 0
          %546 = vmatpush1.bf16.msra.mxu0 0
          %547 = vmatprep.subr.bf16.mxu0 0
          %548 = vmatpush1.bf16.msra.mxu0 0
          %549 = vmatprep.subr.bf16.mxu0 0
          %550 = vmatpush1.bf16.msra.mxu0 0
          %551 = vmatprep.subr.bf16.mxu0 0
          %552 = vmatpush1.bf16.msra.mxu0 0
          %553 = vmatprep.subr.bf16.mxu0 0
          %554 = vmatpush1.bf16.msra.mxu0 0
          %555 = vmatprep.mubr.bf16.mxu0 0
          %556 = vmatmul.mubr.bf16.gmra.mrb[0].mxu0 %v443
          %v557 = vpop.f32.mrb[0].mxu0
          %v558 = vadd.f32 0.0, %v557
          %v559 = vpop.f32.mrb[0].mxu0
          %v560 = vpop.f32.mrb[0].mxu0
          %v561 = vadd.f32 0.0, %v560
          %v562 = vpop.f32.mrb[0].mxu0
          %563 = vmatprep.mubr.bf16.mxu0 0
          %564 = vmatmul.mubr.bf16.gmra.mrb[0].mxu0 %v444
          %v565 = vpop.f32.mrb[0].mxu0
          %v566 = vadd.f32 0.0, %v565
          %v567 = vpop.f32.mrb[0].mxu0
          %v568 = vpop.f32.mrb[0].mxu0
          %v569 = vadd.f32 0.0, %v568
          %v570 = vpop.f32.mrb[0].mxu0
          %571 = vmatprep.mubr.bf16.mxu0 0
          %572 = vmatmul.mubr.bf16.gmra.mrb[0].mxu0 %v445
          %v573 = vpop.f32.mrb[0].mxu0
          %v574 = vadd.f32 0.0, %v573
          %v575 = vpop.f32.mrb[0].mxu0
          %v576 = vpop.f32.mrb[0].mxu0
          %v577 = vadd.f32 0.0, %v576
          %v578 = vpop.f32.mrb[0].mxu0
          %579 = vmatprep.mubr.bf16.mxu0 0
          %580 = vmatmul.mubr.bf16.gmra.mrb[0].mxu0 %v446
          %v581 = vpop.f32.mrb[0].mxu0
          %v582 = vadd.f32 0.0, %v581
          %v583 = vpop.f32.mrb[0].mxu0
          %v584 = vpop.f32.mrb[0].mxu0
          %v585 = vadd.f32 0.0, %v584
          %v586 = vpop.f32.mrb[0].mxu0
          %587 = vmatprep.mubr.bf16.mxu0 0
          %588 = vmatmul.mubr.bf16.gmra.mrb[0].mxu0 %v447
          %v589 = vpop.f32.mrb[0].mxu0
          %v590 = vadd.f32 0.0, %v589
          %v591 = vpop.f32.mrb[0].mxu0
          %v592 = vpop.f32.mrb[0].mxu0
          %v593 = vadd.f32 0.0, %v592
          %v594 = vpop.f32.mrb[0].mxu0
          %595 = vmatprep.mubr.bf16.mxu0 0
          %596 = vmatmul.mubr.bf16.gmra.mrb[0].mxu0 %v448
          %v597 = vpop.f32.mrb[0].mxu0
          %v598 = vadd.f32 0.0, %v597
          %v599 = vpop.f32.mrb[0].mxu0
          %v600 = vpop.f32.mrb[0].mxu0
          %v601 = vadd.f32 0.0, %v600
          %v602 = vpop.f32.mrb[0].mxu0
          %603 = vmatprep.mubr.bf16.mxu0 0
          %604 = vmatmul.mubr.bf16.gmra.mrb[0].mxu0 %v449
          %v605 = vpop.f32.mrb[0].mxu0
          %v606 = vadd.f32 0.0, %v605
          %v607 = vpop.f32.mrb[0].mxu0
          %v608 = vpop.f32.mrb[0].mxu0
          %v609 = vadd.f32 0.0, %v608
          %v610 = vpop.f32.mrb[0].mxu0
          %611 = vmatprep.mubr.bf16.mxu0 0
          %612 = vmatmul.mubr.bf16.gmra.mrb[0].mxu0 %v450
          %v613 = vpop.f32.mrb[0].mxu0
          %v614 = vadd.f32 0.0, %v613
          %v615 = vpop.f32.mrb[0].mxu0
          %v616 = vpop.f32.mrb[0].mxu0
          %v617 = vadd.f32 0.0, %v616
          %v618 = vpop.f32.mrb[0].mxu0
          %619 = vmatprep.mubr.bf16.mxu0 0
          %620 = vmatmul.mubr.bf16.gmra.mrb[0].mxu0 %v451
          %v621 = vpop.f32.mrb[0].mxu0
          %v622 = vadd.f32 0.0, %v621
          %v623 = vpop.f32.mrb[0].mxu0
          %v624 = vpop.f32.mrb[0].mxu0
          %v625 = vadd.f32 0.0, %v624
          %v626 = vpop.f32.mrb[0].mxu0
          %627 = vmatprep.mubr.bf16.mxu0 0
          %628 = vmatmul.mubr.bf16.gmra.mrb[0].mxu0 %v452
          %v629 = vpop.f32.mrb[0].mxu0
          %v630 = vadd.f32 0.0, %v629
          %v631 = vpop.f32.mrb[0].mxu0
          %v632 = vpop.f32.mrb[0].mxu0
          %v633 = vadd.f32 0.0, %v632
          %v634 = vpop.f32.mrb[0].mxu0
          %635 = vmatprep.mubr.bf16.mxu0 0
          %636 = vmatmul.mubr.bf16.gmra.mrb[0].mxu0 %v453
          %v637 = vpop.f32.mrb[0].mxu0
          %v638 = vadd.f32 0.0, %v637
          %v639 = vpop.f32.mrb[0].mxu0
          %v640 = vpop.f32.mrb[0].mxu0
          %v641 = vadd.f32 0.0, %v640
          %v642 = vpop.f32.mrb[0].mxu0
          %643 = vmatprep.mubr.bf16.mxu0 0
          %644 = vmatmul.mubr.bf16.gmra.mrb[0].mxu0 %v454
          %v645 = vpop.f32.mrb[0].mxu0
          %v646 = vadd.f32 0.0, %v645
          %v647 = vpop.f32.mrb[0].mxu0
          %v648 = vpop.f32.mrb[0].mxu0
          %v649 = vadd.f32 0.0, %v648
          %v650 = vpop.f32.mrb[0].mxu0
          %651 = vmatprep.mubr.bf16.mxu0 0
          %652 = vmatmul.mubr.bf16.gmra.mrb[0].mxu0 %v455
          %v653 = vpop.f32.mrb[0].mxu0
          %v654 = vadd.f32 0.0, %v653
          %v655 = vpop.f32.mrb[0].mxu0
          %v656 = vpop.f32.mrb[0].mxu0
          %v657 = vadd.f32 0.0, %v656
          %v658 = vpop.f32.mrb[0].mxu0
          %659 = vmatprep.mubr.bf16.mxu0 0
          %660 = vmatmul.mubr.bf16.gmra.mrb[0].mxu0 %v456
          %v661 = vpop.f32.mrb[0].mxu0
          %v662 = vadd.f32 0.0, %v661
          %v663 = vpop.f32.mrb[0].mxu0
          %v664 = vpop.f32.mrb[0].mxu0
          %v665 = vadd.f32 0.0, %v664
          %v666 = vpop.f32.mrb[0].mxu0
          %667 = vmatprep.mubr.bf16.mxu0 0
          %668 = vmatmul.mubr.bf16.gmra.mrb[0].mxu0 %v457
          %v669 = vpop.f32.mrb[0].mxu0
          %v670 = vadd.f32 0.0, %v669
          %v671 = vpop.f32.mrb[0].mxu0
          %v672 = vpop.f32.mrb[0].mxu0
          %v673 = vadd.f32 0.0, %v672
          %v674 = vpop.f32.mrb[0].mxu0
          %675 = vmatprep.mubr.bf16.mxu0 0
          %676 = vmatmul.mubr.bf16.gmra.mrb[0].mxu0 %v458
          %v677 = vpop.f32.mrb[0].mxu0
          %v678 = vadd.f32 0.0, %v677
          %v679 = vpop.f32.mrb[0].mxu0
          %v680 = vpop.f32.mrb[0].mxu0
          %v681 = vadd.f32 0.0, %v680
          %v682 = vpop.f32.mrb[0].mxu0
          %683 = vdwg.mxu0
          %s684 = scalar_lea.vmem [#allocation4], %s326
          %685 = vst [vmem:[%s684] sm:$0xff] %v558
          %686 = vst [vmem:[%s684 + $0x8] sm:$0xff] %v561
          %687 = vst [vmem:[%s684 + $0x10] sm:$0xff] %v566
          %688 = vst [vmem:[%s684 + $0x18] sm:$0xff] %v569
          %689 = vst [vmem:[%s684 + $0x20] sm:$0xff] %v574
          %690 = vst [vmem:[%s684 + $0x28] sm:$0xff] %v577
          %691 = vst [vmem:[%s684 + $0x30] sm:$0xff] %v582
          %692 = vst [vmem:[%s684 + $0x38] sm:$0xff] %v585
          %693 = vst [vmem:[%s684 + $0x40] sm:$0xff] %v590
          %694 = vst [vmem:[%s684 + $0x48] sm:$0xff] %v593
          %695 = vst [vmem:[%s684 + $0x50] sm:$0xff] %v598
          %696 = vst [vmem:[%s684 + $0x58] sm:$0xff] %v601
          %697 = vst [vmem:[%s684 + $0x60] sm:$0xff] %v606
          %698 = vst [vmem:[%s684 + $0x68] sm:$0xff] %v609
          %699 = vst [vmem:[%s684 + $0x70] sm:$0xff] %v614
          %700 = vst [vmem:[%s684 + $0x78] sm:$0xff] %v617
          %701 = vst [vmem:[%s684 + $0x80] sm:$0xff] %v622
          %702 = vst [vmem:[%s684 + $0x88] sm:$0xff] %v625
          %703 = vst [vmem:[%s684 + $0x90] sm:$0xff] %v630
          %704 = vst [vmem:[%s684 + $0x98] sm:$0xff] %v633
          %705 = vst [vmem:[%s684 + $0xa0] sm:$0xff] %v638
          %706 = vst [vmem:[%s684 + $0xa8] sm:$0xff] %v641
          %707 = vst [vmem:[%s684 + $0xb0] sm:$0xff] %v646
          %708 = vst [vmem:[%s684 + $0xb8] sm:$0xff] %v649
          %709 = vst [vmem:[%s684 + $0xc0] sm:$0xff] %v654
          %710 = vst [vmem:[%s684 + $0xc8] sm:$0xff] %v657
          %711 = vst [vmem:[%s684 + $0xd0] sm:$0xff] %v662
          %712 = vst [vmem:[%s684 + $0xd8] sm:$0xff] %v665
          %713 = vst [vmem:[%s684 + $0xe0] sm:$0xff] %v670
          %714 = vst [vmem:[%s684 + $0xe8] sm:$0xff] %v673
          %715 = vst [vmem:[%s684 + $0xf0] sm:$0xff] %v678
          %716 = vst [vmem:[%s684 + $0xf8] sm:$0xff] %v681
          %s717 = sshra.s32 %s326, 4
          %s718 = sand.u32 %s326, 15
          %s719 = smul.addr %s717, 8
          %s720 = scalar_lea.vmem [#allocation2], %s719
          %721 = vst [vmem:[%s720] sm:$0xff] %v443
          %722 = vst [vmem:[%s720 + $0x8] sm:$0xff] %v444
          %723 = vst [vmem:[%s720 + $0x10] sm:$0xff] %v445
          %724 = vst [vmem:[%s720 + $0x18] sm:$0xff] %v446
          %725 = vst [vmem:[%s720 + $0x20] sm:$0xff] %v447
          %726 = vst [vmem:[%s720 + $0x28] sm:$0xff] %v448
          %727 = vst [vmem:[%s720 + $0x30] sm:$0xff] %v449
          %728 = vst [vmem:[%s720 + $0x38] sm:$0xff] %v450
          %729 = vst [vmem:[%s720 + $0x40] sm:$0xff] %v451
          %730 = vst [vmem:[%s720 + $0x48] sm:$0xff] %v452
          %731 = vst [vmem:[%s720 + $0x50] sm:$0xff] %v453
          %732 = vst [vmem:[%s720 + $0x58] sm:$0xff] %v454
          %733 = vst [vmem:[%s720 + $0x60] sm:$0xff] %v455
          %734 = vst [vmem:[%s720 + $0x68] sm:$0xff] %v456
          %735 = vst [vmem:[%s720 + $0x70] sm:$0xff] %v457
          %736 = vst [vmem:[%s720 + $0x78] sm:$0xff] %v458
        $region52: #{tpu_custom_call.1} parent=35 // pred_fallthru
          _
        %p737 = scmp.gt.s32.totalorder %s28, 0
        %p738 = scmp.lt.s32.totalorder %s28, 0
        %s739 = ssub.s32 0, %s28
        %s740 = scalar_select %p738, %s739, %s28
        %s741 = sand.u32 %s740, 1
        %s742 = ssub.s32 0, %s741
        %s743 = scalar_select %p738, %s742, %s741
        %p744 = scmp.ne.s32.totalorder %s743, 0
        %p745 = scmp.lt.s32.totalorder %s743, 0
        %p746 = pnand %p745, %p744
        %p747 = pneg %p746
        %s748 = sadd.s32 %s743, 2
        %s749 = scalar_select %p747, %s748, %s743
        %p750 = scmp.eq.s32.totalorder %s749, 1
        %p751 = pnand %p737, %p750
        %p752 = pneg %p751
        // Predicated region
        $region53: #{tpu_custom_call.1} parent=35 // pred_check
          _
        $region54: #{tpu_custom_call.1} parent=35 // pred_check_branch
          %754 = sbr.rel (%p751) target = $region56
        $region55: #{tpu_custom_call.1} parent=35 // pred_region
          %v755 = vld [vmem:[%s265] sm:$0xff]
          %v756 = vld [vmem:[%s265 + $0x8] sm:$0xff]
          %v757 = vld [vmem:[%s265 + $0x10] sm:$0xff]
          %v758 = vld [vmem:[%s265 + $0x18] sm:$0xff]
          %v759 = vld [vmem:[%s265 + $0x20] sm:$0xff]
          %v760 = vld [vmem:[%s265 + $0x28] sm:$0xff]
          %v761 = vld [vmem:[%s265 + $0x30] sm:$0xff]
          %v762 = vld [vmem:[%s265 + $0x38] sm:$0xff]
          %v763 = vld [vmem:[%s265 + $0x40] sm:$0xff]
          %v764 = vld [vmem:[%s265 + $0x48] sm:$0xff]
          %v765 = vld [vmem:[%s265 + $0x50] sm:$0xff]
          %v766 = vld [vmem:[%s265 + $0x58] sm:$0xff]
          %v767 = vld [vmem:[%s265 + $0x60] sm:$0xff]
          %v768 = vld [vmem:[%s265 + $0x68] sm:$0xff]
          %v769 = vld [vmem:[%s265 + $0x70] sm:$0xff]
          %v770 = vld [vmem:[%s265 + $0x78] sm:$0xff]
          %v771 = vld [vmem:[%s265 + $0x80] sm:$0xff]
          %v772 = vld [vmem:[%s265 + $0x88] sm:$0xff]
          %v773 = vld [vmem:[%s265 + $0x90] sm:$0xff]
          %v774 = vld [vmem:[%s265 + $0x98] sm:$0xff]
          %v775 = vld [vmem:[%s265 + $0xa0] sm:$0xff]
          %v776 = vld [vmem:[%s265 + $0xa8] sm:$0xff]
          %v777 = vld [vmem:[%s265 + $0xb0] sm:$0xff]
          %v778 = vld [vmem:[%s265 + $0xb8] sm:$0xff]
          %v779 = vld [vmem:[%s265 + $0xc0] sm:$0xff]
          %v780 = vld [vmem:[%s265 + $0xc8] sm:$0xff]
          %v781 = vld [vmem:[%s265 + $0xd0] sm:$0xff]
          %v782 = vld [vmem:[%s265 + $0xd8] sm:$0xff]
          %v783 = vld [vmem:[%s265 + $0xe0] sm:$0xff]
          %v784 = vld [vmem:[%s265 + $0xe8] sm:$0xff]
          %v785 = vld [vmem:[%s265 + $0xf0] sm:$0xff]
          %v786 = vld [vmem:[%s265 + $0xf8] sm:$0xff]
          %v787 = vld [vmem:[%s265 + $0x100] sm:$0xff]
          %v788 = vld [vmem:[%s265 + $0x108] sm:$0xff]
          %v789 = vld [vmem:[%s265 + $0x110] sm:$0xff]
          %v790 = vld [vmem:[%s265 + $0x118] sm:$0xff]
          %v791 = vld [vmem:[%s265 + $0x120] sm:$0xff]
          %v792 = vld [vmem:[%s265 + $0x128] sm:$0xff]
          %v793 = vld [vmem:[%s265 + $0x130] sm:$0xff]
          %v794 = vld [vmem:[%s265 + $0x138] sm:$0xff]
          %v795 = vld [vmem:[%s265 + $0x140] sm:$0xff]
          %v796 = vld [vmem:[%s265 + $0x148] sm:$0xff]
          %v797 = vld [vmem:[%s265 + $0x150] sm:$0xff]
          %v798 = vld [vmem:[%s265 + $0x158] sm:$0xff]
          %v799 = vld [vmem:[%s265 + $0x160] sm:$0xff]
          %v800 = vld [vmem:[%s265 + $0x168] sm:$0xff]
          %v801 = vld [vmem:[%s265 + $0x170] sm:$0xff]
          %v802 = vld [vmem:[%s265 + $0x178] sm:$0xff]
          %v803 = vld [vmem:[%s265 + $0x180] sm:$0xff]
          %v804 = vld [vmem:[%s265 + $0x188] sm:$0xff]
          %v805 = vld [vmem:[%s265 + $0x190] sm:$0xff]
          %v806 = vld [vmem:[%s265 + $0x198] sm:$0xff]
          %v807 = vld [vmem:[%s265 + $0x1a0] sm:$0xff]
          %v808 = vld [vmem:[%s265 + $0x1a8] sm:$0xff]
          %v809 = vld [vmem:[%s265 + $0x1b0] sm:$0xff]
          %v810 = vld [vmem:[%s265 + $0x1b8] sm:$0xff]
          %v811 = vld [vmem:[%s265 + $0x1c0] sm:$0xff]
          %v812 = vld [vmem:[%s265 + $0x1c8] sm:$0xff]
          %v813 = vld [vmem:[%s265 + $0x1d0] sm:$0xff]
          %v814 = vld [vmem:[%s265 + $0x1d8] sm:$0xff]
          %v815 = vld [vmem:[%s265 + $0x1e0] sm:$0xff]
          %v816 = vld [vmem:[%s265 + $0x1e8] sm:$0xff]
          %v817 = vld [vmem:[%s265 + $0x1f0] sm:$0xff]
          %v818 = vld [vmem:[%s265 + $0x1f8] sm:$0xff]
          %v819 = vld [vmem:[#allocation2] sm:$0xff]
          %v820 = vld [vmem:[#allocation2 + $0x8] sm:$0xff]
          %v821 = vld [vmem:[#allocation2 + $0x10] sm:$0xff]
          %v822 = vld [vmem:[#allocation2 + $0x18] sm:$0xff]
          %v823 = vld [vmem:[#allocation2 + $0x20] sm:$0xff]
          %v824 = vld [vmem:[#allocation2 + $0x28] sm:$0xff]
          %v825 = vld [vmem:[#allocation2 + $0x30] sm:$0xff]
          %v826 = vld [vmem:[#allocation2 + $0x38] sm:$0xff]
          %v827 = vld [vmem:[#allocation2 + $0x40] sm:$0xff]
          %v828 = vld [vmem:[#allocation2 + $0x48] sm:$0xff]
          %v829 = vld [vmem:[#allocation2 + $0x50] sm:$0xff]
          %v830 = vld [vmem:[#allocation2 + $0x58] sm:$0xff]
          %v831 = vld [vmem:[#allocation2 + $0x60] sm:$0xff]
          %v832 = vld [vmem:[#allocation2 + $0x68] sm:$0xff]
          %v833 = vld [vmem:[#allocation2 + $0x70] sm:$0xff]
          %v834 = vld [vmem:[#allocation2 + $0x78] sm:$0xff]
          %v835 = vld [vmem:[#allocation2 + $0x80] sm:$0xff]
          %v836 = vld [vmem:[#allocation2 + $0x88] sm:$0xff]
          %v837 = vld [vmem:[#allocation2 + $0x90] sm:$0xff]
          %v838 = vld [vmem:[#allocation2 + $0x98] sm:$0xff]
          %v839 = vld [vmem:[#allocation2 + $0xa0] sm:$0xff]
          %v840 = vld [vmem:[#allocation2 + $0xa8] sm:$0xff]
          %v841 = vld [vmem:[#allocation2 + $0xb0] sm:$0xff]
          %v842 = vld [vmem:[#allocation2 + $0xb8] sm:$0xff]
          %v843 = vld [vmem:[#allocation2 + $0xc0] sm:$0xff]
          %v844 = vld [vmem:[#allocation2 + $0xc8] sm:$0xff]
          %v845 = vld [vmem:[#allocation2 + $0xd0] sm:$0xff]
          %v846 = vld [vmem:[#allocation2 + $0xd8] sm:$0xff]
          %v847 = vld [vmem:[#allocation2 + $0xe0] sm:$0xff]
          %v848 = vld [vmem:[#allocation2 + $0xe8] sm:$0xff]
          %v849 = vld [vmem:[#allocation2 + $0xf0] sm:$0xff]
          %v850 = vld [vmem:[#allocation2 + $0xf8] sm:$0xff]
          %v915 = vunpack.c.l.b16 %v755
          %v916 = vunpack.c.h.b16 %v755
          %v917 = vunpack.c.l.b16 %v756
          %v918 = vunpack.c.h.b16 %v756
          %v919 = vunpack.c.l.b16 %v757
          %v920 = vunpack.c.h.b16 %v757
          %v921 = vunpack.c.l.b16 %v758
          %v922 = vunpack.c.h.b16 %v758
          %v923 = vunpack.c.l.b16 %v759
          %v924 = vunpack.c.h.b16 %v759
          %v925 = vunpack.c.l.b16 %v760
          %v926 = vunpack.c.h.b16 %v760
          %v927 = vunpack.c.l.b16 %v761
          %v928 = vunpack.c.h.b16 %v761
          %v929 = vunpack.c.l.b16 %v762
          %v930 = vunpack.c.h.b16 %v762
          %v931 = vunpack.c.l.b16 %v763
          %v932 = vunpack.c.h.b16 %v763
          %v933 = vunpack.c.l.b16 %v764
          %v934 = vunpack.c.h.b16 %v764
          %v935 = vunpack.c.l.b16 %v765
          %v936 = vunpack.c.h.b16 %v765
          %v937 = vunpack.c.l.b16 %v766
          %v938 = vunpack.c.h.b16 %v766
          %v939 = vunpack.c.l.b16 %v767
          %v940 = vunpack.c.h.b16 %v767
          %v941 = vunpack.c.l.b16 %v768
          %v942 = vunpack.c.h.b16 %v768
          %v943 = vunpack.c.l.b16 %v769
          %v944 = vunpack.c.h.b16 %v769
          %v945 = vunpack.c.l.b16 %v770
          %v946 = vunpack.c.h.b16 %v770
          %v947 = vunpack.c.l.b16 %v771
          %v948 = vunpack.c.h.b16 %v771
          %v949 = vunpack.c.l.b16 %v772
          %v950 = vunpack.c.h.b16 %v772
          %v951 = vunpack.c.l.b16 %v773
          %v952 = vunpack.c.h.b16 %v773
          %v953 = vunpack.c.l.b16 %v774
          %v954 = vunpack.c.h.b16 %v774
          %v955 = vunpack.c.l.b16 %v775
          %v956 = vunpack.c.h.b16 %v775
          %v957 = vunpack.c.l.b16 %v776
          %v958 = vunpack.c.h.b16 %v776
          %v959 = vunpack.c.l.b16 %v777
          %v960 = vunpack.c.h.b16 %v777
          %v961 = vunpack.c.l.b16 %v778
          %v962 = vunpack.c.h.b16 %v778
          %v963 = vunpack.c.l.b16 %v779
          %v964 = vunpack.c.h.b16 %v779
          %v965 = vunpack.c.l.b16 %v780
          %v966 = vunpack.c.h.b16 %v780
          %v967 = vunpack.c.l.b16 %v781
          %v968 = vunpack.c.h.b16 %v781
          %v969 = vunpack.c.l.b16 %v782
          %v970 = vunpack.c.h.b16 %v782
          %v971 = vunpack.c.l.b16 %v783
          %v972 = vunpack.c.h.b16 %v783
          %v973 = vunpack.c.l.b16 %v784
          %v974 = vunpack.c.h.b16 %v784
          %v975 = vunpack.c.l.b16 %v785
          %v976 = vunpack.c.h.b16 %v785
          %v977 = vunpack.c.l.b16 %v786
          %v978 = vunpack.c.h.b16 %v786
          %v979 = vunpack.c.l.b16 %v787
          %v980 = vunpack.c.h.b16 %v787
          %v981 = vunpack.c.l.b16 %v788
          %v982 = vunpack.c.h.b16 %v788
          %v983 = vunpack.c.l.b16 %v789
          %v984 = vunpack.c.h.b16 %v789
          %v985 = vunpack.c.l.b16 %v790
          %v986 = vunpack.c.h.b16 %v790
          %v987 = vunpack.c.l.b16 %v791
          %v988 = vunpack.c.h.b16 %v791
          %v989 = vunpack.c.l.b16 %v792
          %v990 = vunpack.c.h.b16 %v792
          %v991 = vunpack.c.l.b16 %v793
          %v992 = vunpack.c.h.b16 %v793
          %v993 = vunpack.c.l.b16 %v794
          %v994 = vunpack.c.h.b16 %v794
          %v995 = vunpack.c.l.b16 %v795
          %v996 = vunpack.c.h.b16 %v795
          %v997 = vunpack.c.l.b16 %v796
          %v998 = vunpack.c.h.b16 %v796
          %v999 = vunpack.c.l.b16 %v797
          %v1000 = vunpack.c.h.b16 %v797
          %v1001 = vunpack.c.l.b16 %v798
          %v1002 = vunpack.c.h.b16 %v798
          %v1003 = vunpack.c.l.b16 %v799
          %v1004 = vunpack.c.h.b16 %v799
          %v1005 = vunpack.c.l.b16 %v800
          %v1006 = vunpack.c.h.b16 %v800
          %v1007 = vunpack.c.l.b16 %v801
          %v1008 = vunpack.c.h.b16 %v801
          %v1009 = vunpack.c.l.b16 %v802
          %v1010 = vunpack.c.h.b16 %v802
          %v1011 = vunpack.c.l.b16 %v803
          %v1012 = vunpack.c.h.b16 %v803
          %v1013 = vunpack.c.l.b16 %v804
          %v1014 = vunpack.c.h.b16 %v804
          %v1015 = vunpack.c.l.b16 %v805
          %v1016 = vunpack.c.h.b16 %v805
          %v1017 = vunpack.c.l.b16 %v806
          %v1018 = vunpack.c.h.b16 %v806
          %v1019 = vunpack.c.l.b16 %v807
          %v1020 = vunpack.c.h.b16 %v807
          %v1021 = vunpack.c.l.b16 %v808
          %v1022 = vunpack.c.h.b16 %v808
          %v1023 = vunpack.c.l.b16 %v809
          %v1024 = vunpack.c.h.b16 %v809
          %v1025 = vunpack.c.l.b16 %v810
          %v1026 = vunpack.c.h.b16 %v810
          %v1027 = vunpack.c.l.b16 %v811
          %v1028 = vunpack.c.h.b16 %v811
          %v1029 = vunpack.c.l.b16 %v812
          %v1030 = vunpack.c.h.b16 %v812
          %v1031 = vunpack.c.l.b16 %v813
          %v1032 = vunpack.c.h.b16 %v813
          %v1033 = vunpack.c.l.b16 %v814
          %v1034 = vunpack.c.h.b16 %v814
          %v1035 = vunpack.c.l.b16 %v815
          %v1036 = vunpack.c.h.b16 %v815
          %v1037 = vunpack.c.l.b16 %v816
          %v1038 = vunpack.c.h.b16 %v816
          %v1039 = vunpack.c.l.b16 %v817
          %v1040 = vunpack.c.h.b16 %v817
          %v1041 = vunpack.c.l.b16 %v818
          %v1042 = vunpack.c.h.b16 %v818
          %v1043 = vpack.c.b16 %v919, %v915
          %v1044 = vpack.c.b16 %v920, %v916
          %v1045 = vpack.c.b16 %v921, %v917
          %v1046 = vpack.c.b16 %v922, %v918
          %v1047 = vpack.c.b16 %v927, %v923
          %v1048 = vpack.c.b16 %v928, %v924
          %v1049 = vpack.c.b16 %v929, %v925
          %v1050 = vpack.c.b16 %v930, %v926
          %v1051 = vpack.c.b16 %v935, %v931
          %v1052 = vpack.c.b16 %v936, %v932
          %v1053 = vpack.c.b16 %v937, %v933
          %v1054 = vpack.c.b16 %v938, %v934
          %v1055 = vpack.c.b16 %v943, %v939
          %v1056 = vpack.c.b16 %v944, %v940
          %v1057 = vpack.c.b16 %v945, %v941
          %v1058 = vpack.c.b16 %v946, %v942
          %v1059 = vpack.c.b16 %v951, %v947
          %v1060 = vpack.c.b16 %v952, %v948
          %v1061 = vpack.c.b16 %v953, %v949
          %v1062 = vpack.c.b16 %v954, %v950
          %v1063 = vpack.c.b16 %v959, %v955
          %v1064 = vpack.c.b16 %v960, %v956
          %v1065 = vpack.c.b16 %v961, %v957
          %v1066 = vpack.c.b16 %v962, %v958
          %v1067 = vpack.c.b16 %v967, %v963
          %v1068 = vpack.c.b16 %v968, %v964
          %v1069 = vpack.c.b16 %v969, %v965
          %v1070 = vpack.c.b16 %v970, %v966
          %v1071 = vpack.c.b16 %v975, %v971
          %v1072 = vpack.c.b16 %v976, %v972
          %v1073 = vpack.c.b16 %v977, %v973
          %v1074 = vpack.c.b16 %v978, %v974
          %v1075 = vpack.c.b16 %v983, %v979
          %v1076 = vpack.c.b16 %v984, %v980
          %v1077 = vpack.c.b16 %v985, %v981
          %v1078 = vpack.c.b16 %v986, %v982
          %v1079 = vpack.c.b16 %v991, %v987
          %v1080 = vpack.c.b16 %v992, %v988
          %v1081 = vpack.c.b16 %v993, %v989
          %v1082 = vpack.c.b16 %v994, %v990
          %v1083 = vpack.c.b16 %v999, %v995
          %v1084 = vpack.c.b16 %v1000, %v996
          %v1085 = vpack.c.b16 %v1001, %v997
          %v1086 = vpack.c.b16 %v1002, %v998
          %v1087 = vpack.c.b16 %v1007, %v1003
          %v1088 = vpack.c.b16 %v1008, %v1004
          %v1089 = vpack.c.b16 %v1009, %v1005
          %v1090 = vpack.c.b16 %v1010, %v1006
          %v1091 = vpack.c.b16 %v1015, %v1011
          %v1092 = vpack.c.b16 %v1016, %v1012
          %v1093 = vpack.c.b16 %v1017, %v1013
          %v1094 = vpack.c.b16 %v1018, %v1014
          %v1095 = vpack.c.b16 %v1023, %v1019
          %v1096 = vpack.c.b16 %v1024, %v1020
          %v1097 = vpack.c.b16 %v1025, %v1021
          %v1098 = vpack.c.b16 %v1026, %v1022
          %v1099 = vpack.c.b16 %v1031, %v1027
          %v1100 = vpack.c.b16 %v1032, %v1028
          %v1101 = vpack.c.b16 %v1033, %v1029
          %v1102 = vpack.c.b16 %v1034, %v1030
          %v1103 = vpack.c.b16 %v1039, %v1035
          %v1104 = vpack.c.b16 %v1040, %v1036
          %v1105 = vpack.c.b16 %v1041, %v1037
          %v1106 = vpack.c.b16 %v1042, %v1038
          %1171 = vmatprep.subr.bf16.mxu0 0
          %1172 = vmatpush1.bf16.msra.mxu0 %v819
          %1173 = vmatprep.subr.bf16.mxu0 0
          %1174 = vmatpush1.bf16.msra.mxu0 %v820
          %1175 = vmatprep.subr.bf16.mxu0 0
          %1176 = vmatpush1.bf16.msra.mxu0 %v821
          %1177 = vmatprep.subr.bf16.mxu0 0
          %1178 = vmatpush1.bf16.msra.mxu0 %v822
          %1179 = vmatprep.subr.bf16.mxu0 0
          %1180 = vmatpush1.bf16.msra.mxu0 %v823
          %1181 = vmatprep.subr.bf16.mxu0 0
          %1182 = vmatpush1.bf16.msra.mxu0 %v824
          %1183 = vmatprep.subr.bf16.mxu0 0
          %1184 = vmatpush1.bf16.msra.mxu0 %v825
          %1185 = vmatprep.subr.bf16.mxu0 0
          %1186 = vmatpush1.bf16.msra.mxu0 %v826
          %1187 = vmatprep.subr.bf16.mxu0 0
          %1188 = vmatpush1.bf16.msra.mxu0 %v827
          %1189 = vmatprep.subr.bf16.mxu0 0
          %1190 = vmatpush1.bf16.msra.mxu0 %v828
          %1191 = vmatprep.subr.bf16.mxu0 0
          %1192 = vmatpush1.bf16.msra.mxu0 %v829
          %1193 = vmatprep.subr.bf16.mxu0 0
          %1194 = vmatpush1.bf16.msra.mxu0 %v830
          %1195 = vmatprep.subr.bf16.mxu0 0
          %1196 = vmatpush1.bf16.msra.mxu0 %v831
          %1197 = vmatprep.subr.bf16.mxu0 0
          %1198 = vmatpush1.bf16.msra.mxu0 %v832
          %1199 = vmatprep.subr.bf16.mxu0 0
          %1200 = vmatpush1.bf16.msra.mxu0 %v833
          %1201 = vmatprep.subr.bf16.mxu0 0
          %1202 = vmatpush1.bf16.msra.mxu0 %v834
          %1203 = vmatprep.mubr.bf16.mxu0 %v1044
          %1204 = vmatmul.mubr.bf16.gmra.mrb[0].mxu0 %v1043
          %v1205 = vpop.f32.mrb[0].mxu0
          %v1206 = vadd.f32 0.0, %v1205
          %v1207 = vpop.f32.mrb[0].mxu0
          %v1208 = vpop.f32.mrb[0].mxu0
          %v1209 = vadd.f32 0.0, %v1208
          %v1210 = vpop.f32.mrb[0].mxu0
          %1211 = vmatprep.mubr.bf16.mxu0 %v1048
          %1212 = vmatmul.mubr.bf16.gmra.mrb[0].mxu0 %v1047
          %v1213 = vpop.f32.mrb[0].mxu0
          %v1214 = vadd.f32 0.0, %v1213
          %v1215 = vpop.f32.mrb[0].mxu0
          %v1216 = vpop.f32.mrb[0].mxu0
          %v1217 = vadd.f32 0.0, %v1216
          %v1218 = vpop.f32.mrb[0].mxu0
          %1219 = vmatprep.mubr.bf16.mxu0 %v1052
          %1220 = vmatmul.mubr.bf16.gmra.mrb[0].mxu0 %v1051
          %v1221 = vpop.f32.mrb[0].mxu0
          %v1222 = vadd.f32 0.0, %v1221
          %v1223 = vpop.f32.mrb[0].mxu0
          %v1224 = vpop.f32.mrb[0].mxu0
          %v1225 = vadd.f32 0.0, %v1224
          %v1226 = vpop.f32.mrb[0].mxu0
          %1227 = vmatprep.mubr.bf16.mxu0 %v1056
          %1228 = vmatmul.mubr.bf16.gmra.mrb[0].mxu0 %v1055
          %v1229 = vpop.f32.mrb[0].mxu0
          %v1230 = vadd.f32 0.0, %v1229
          %v1231 = vpop.f32.mrb[0].mxu0
          %v1232 = vpop.f32.mrb[0].mxu0
          %v1233 = vadd.f32 0.0, %v1232
          %v1234 = vpop.f32.mrb[0].mxu0
          %1235 = vmatprep.mubr.bf16.mxu0 %v1060
          %1236 = vmatmul.mubr.bf16.gmra.mrb[0].mxu0 %v1059
          %v1237 = vpop.f32.mrb[0].mxu0
          %v1238 = vadd.f32 0.0, %v1237
          %v1239 = vpop.f32.mrb[0].mxu0
          %v1240 = vpop.f32.mrb[0].mxu0
          %v1241 = vadd.f32 0.0, %v1240
          %v1242 = vpop.f32.mrb[0].mxu0
          %1243 = vmatprep.mubr.bf16.mxu0 %v1064
          %1244 = vmatmul.mubr.bf16.gmra.mrb[0].mxu0 %v1063
          %v1245 = vpop.f32.mrb[0].mxu0
          %v1246 = vadd.f32 0.0, %v1245
          %v1247 = vpop.f32.mrb[0].mxu0
          %v1248 = vpop.f32.mrb[0].mxu0
          %v1249 = vadd.f32 0.0, %v1248
          %v1250 = vpop.f32.mrb[0].mxu0
          %1251 = vmatprep.mubr.bf16.mxu0 %v1068
          %1252 = vmatmul.mubr.bf16.gmra.mrb[0].mxu0 %v1067
          %v1253 = vpop.f32.mrb[0].mxu0
          %v1254 = vadd.f32 0.0, %v1253
          %v1255 = vpop.f32.mrb[0].mxu0
          %v1256 = vpop.f32.mrb[0].mxu0
          %v1257 = vadd.f32 0.0, %v1256
          %v1258 = vpop.f32.mrb[0].mxu0
          %1259 = vmatprep.mubr.bf16.mxu0 %v1072
          %1260 = vmatmul.mubr.bf16.gmra.mrb[0].mxu0 %v1071
          %v1261 = vpop.f32.mrb[0].mxu0
          %v1262 = vadd.f32 0.0, %v1261
          %v1263 = vpop.f32.mrb[0].mxu0
          %v1264 = vpop.f32.mrb[0].mxu0
          %v1265 = vadd.f32 0.0, %v1264
          %v1266 = vpop.f32.mrb[0].mxu0
          %1267 = vmatprep.mubr.bf16.mxu0 %v1076
          %1268 = vmatmul.mubr.bf16.gmra.mrb[0].mxu0 %v1075
          %v1269 = vpop.f32.mrb[0].mxu0
          %v1270 = vadd.f32 0.0, %v1269
          %v1271 = vpop.f32.mrb[0].mxu0
          %v1272 = vpop.f32.mrb[0].mxu0
          %v1273 = vadd.f32 0.0, %v1272
          %v1274 = vpop.f32.mrb[0].mxu0
          %1275 = vmatprep.mubr.bf16.mxu0 %v1080
          %1276 = vmatmul.mubr.bf16.gmra.mrb[0].mxu0 %v1079
          %v1277 = vpop.f32.mrb[0].mxu0
          %v1278 = vadd.f32 0.0, %v1277
          %v1279 = vpop.f32.mrb[0].mxu0
          %v1280 = vpop.f32.mrb[0].mxu0
          %v1281 = vadd.f32 0.0, %v1280
          %v1282 = vpop.f32.mrb[0].mxu0
          %1283 = vmatprep.mubr.bf16.mxu0 %v1084
          %1284 = vmatmul.mubr.bf16.gmra.mrb[0].mxu0 %v1083
          %v1285 = vpop.f32.mrb[0].mxu0
          %v1286 = vadd.f32 0.0, %v1285
          %v1287 = vpop.f32.mrb[0].mxu0
          %v1288 = vpop.f32.mrb[0].mxu0
          %v1289 = vadd.f32 0.0, %v1288
          %v1290 = vpop.f32.mrb[0].mxu0
          %1291 = vmatprep.mubr.bf16.mxu0 %v1088
          %1292 = vmatmul.mubr.bf16.gmra.mrb[0].mxu0 %v1087
          %v1293 = vpop.f32.mrb[0].mxu0
          %v1294 = vadd.f32 0.0, %v1293
          %v1295 = vpop.f32.mrb[0].mxu0
          %v1296 = vpop.f32.mrb[0].mxu0
          %v1297 = vadd.f32 0.0, %v1296
          %v1298 = vpop.f32.mrb[0].mxu0
          %1299 = vmatprep.mubr.bf16.mxu0 %v1092
          %1300 = vmatmul.mubr.bf16.gmra.mrb[0].mxu0 %v1091
          %v1301 = vpop.f32.mrb[0].mxu0
          %v1302 = vadd.f32 0.0, %v1301
          %v1303 = vpop.f32.mrb[0].mxu0
          %v1304 = vpop.f32.mrb[0].mxu0
          %v1305 = vadd.f32 0.0, %v1304
          %v1306 = vpop.f32.mrb[0].mxu0
          %1307 = vmatprep.mubr.bf16.mxu0 %v1096
          %1308 = vmatmul.mubr.bf16.gmra.mrb[0].mxu0 %v1095
          %v1309 = vpop.f32.mrb[0].mxu0
          %v1310 = vadd.f32 0.0, %v1309
          %v1311 = vpop.f32.mrb[0].mxu0
          %v1312 = vpop.f32.mrb[0].mxu0
          %v1313 = vadd.f32 0.0, %v1312
          %v1314 = vpop.f32.mrb[0].mxu0
          %1315 = vmatprep.mubr.bf16.mxu0 %v1100
          %1316 = vmatmul.mubr.bf16.gmra.mrb[0].mxu0 %v1099
          %v1317 = vpop.f32.mrb[0].mxu0
          %v1318 = vadd.f32 0.0, %v1317
          %v1319 = vpop.f32.mrb[0].mxu0
          %v1320 = vpop.f32.mrb[0].mxu0
          %v1321 = vadd.f32 0.0, %v1320
          %v1322 = vpop.f32.mrb[0].mxu0
          %1323 = vmatprep.mubr.bf16.mxu0 %v1104
          %1324 = vmatmul.mubr.bf16.gmra.mrb[0].mxu0 %v1103
          %v1325 = vpop.f32.mrb[0].mxu0
          %v1326 = vadd.f32 0.0, %v1325
          %v1327 = vpop.f32.mrb[0].mxu0
          %v1328 = vpop.f32.mrb[0].mxu0
          %v1329 = vadd.f32 0.0, %v1328
          %v1330 = vpop.f32.mrb[0].mxu0
          %1331 = vdwg.mxu0
          %1332 = vmatprep.subr.bf16.mxu0 0
          %1333 = vmatpush1.bf16.msra.mxu0 %v835
          %1334 = vmatprep.subr.bf16.mxu0 0
          %1335 = vmatpush1.bf16.msra.mxu0 %v836
          %1336 = vmatprep.subr.bf16.mxu0 0
          %1337 = vmatpush1.bf16.msra.mxu0 %v837
          %1338 = vmatprep.subr.bf16.mxu0 0
          %1339 = vmatpush1.bf16.msra.mxu0 %v838
          %1340 = vmatprep.subr.bf16.mxu0 0
          %1341 = vmatpush1.bf16.msra.mxu0 %v839
          %1342 = vmatprep.subr.bf16.mxu0 0
          %1343 = vmatpush1.bf16.msra.mxu0 %v840
          %1344 = vmatprep.subr.bf16.mxu0 0
          %1345 = vmatpush1.bf16.msra.mxu0 %v841
          %1346 = vmatprep.subr.bf16.mxu0 0
          %1347 = vmatpush1.bf16.msra.mxu0 %v842
          %1348 = vmatprep.subr.bf16.mxu0 0
          %1349 = vmatpush1.bf16.msra.mxu0 %v843
          %1350 = vmatprep.subr.bf16.mxu0 0
          %1351 = vmatpush1.bf16.msra.mxu0 %v844
          %1352 = vmatprep.subr.bf16.mxu0 0
          %1353 = vmatpush1.bf16.msra.mxu0 %v845
          %1354 = vmatprep.subr.bf16.mxu0 0
          %1355 = vmatpush1.bf16.msra.mxu0 %v846
          %1356 = vmatprep.subr.bf16.mxu0 0
          %1357 = vmatpush1.bf16.msra.mxu0 %v847
          %1358 = vmatprep.subr.bf16.mxu0 0
          %1359 = vmatpush1.bf16.msra.mxu0 %v848
          %1360 = vmatprep.subr.bf16.mxu0 0
          %1361 = vmatpush1.bf16.msra.mxu0 %v849
          %1362 = vmatprep.subr.bf16.mxu0 0
          %1363 = vmatpush1.bf16.msra.mxu0 %v850
          %1364 = vmatprep.mubr.bf16.mxu0 %v1046
          %1365 = vmatmul.mubr.bf16.gmra.mrb[0].mxu0 %v1045
          %v1366 = vpop.f32.mrb[0].mxu0
          %v1367 = vadd.f32 %v1206, %v1366
          %v1368 = vpop.f32.mrb[0].mxu0
          %v1369 = vpop.f32.mrb[0].mxu0
          %v1370 = vadd.f32 %v1209, %v1369
          %v1371 = vpop.f32.mrb[0].mxu0
          %1372 = vmatprep.mubr.bf16.mxu0 %v1050
          %1373 = vmatmul.mubr.bf16.gmra.mrb[0].mxu0 %v1049
          %v1374 = vpop.f32.mrb[0].mxu0
          %v1375 = vadd.f32 %v1214, %v1374
          %v1376 = vpop.f32.mrb[0].mxu0
          %v1377 = vpop.f32.mrb[0].mxu0
          %v1378 = vadd.f32 %v1217, %v1377
          %v1379 = vpop.f32.mrb[0].mxu0
          %1380 = vmatprep.mubr.bf16.mxu0 %v1054
          %1381 = vmatmul.mubr.bf16.gmra.mrb[0].mxu0 %v1053
          %v1382 = vpop.f32.mrb[0].mxu0
          %v1383 = vadd.f32 %v1222, %v1382
          %v1384 = vpop.f32.mrb[0].mxu0
          %v1385 = vpop.f32.mrb[0].mxu0
          %v1386 = vadd.f32 %v1225, %v1385
          %v1387 = vpop.f32.mrb[0].mxu0
          %1388 = vmatprep.mubr.bf16.mxu0 %v1058
          %1389 = vmatmul.mubr.bf16.gmra.mrb[0].mxu0 %v1057
          %v1390 = vpop.f32.mrb[0].mxu0
          %v1391 = vadd.f32 %v1230, %v1390
          %v1392 = vpop.f32.mrb[0].mxu0
          %v1393 = vpop.f32.mrb[0].mxu0
          %v1394 = vadd.f32 %v1233, %v1393
          %v1395 = vpop.f32.mrb[0].mxu0
          %1396 = vmatprep.mubr.bf16.mxu0 %v1062
          %1397 = vmatmul.mubr.bf16.gmra.mrb[0].mxu0 %v1061
          %v1398 = vpop.f32.mrb[0].mxu0
          %v1399 = vadd.f32 %v1238, %v1398
          %v1400 = vpop.f32.mrb[0].mxu0
          %v1401 = vpop.f32.mrb[0].mxu0
          %v1402 = vadd.f32 %v1241, %v1401
          %v1403 = vpop.f32.mrb[0].mxu0
          %1404 = vmatprep.mubr.bf16.mxu0 %v1066
          %1405 = vmatmul.mubr.bf16.gmra.mrb[0].mxu0 %v1065
          %v1406 = vpop.f32.mrb[0].mxu0
          %v1407 = vadd.f32 %v1246, %v1406
          %v1408 = vpop.f32.mrb[0].mxu0
          %v1409 = vpop.f32.mrb[0].mxu0
          %v1410 = vadd.f32 %v1249, %v1409
          %v1411 = vpop.f32.mrb[0].mxu0
          %1412 = vmatprep.mubr.bf16.mxu0 %v1070
          %1413 = vmatmul.mubr.bf16.gmra.mrb[0].mxu0 %v1069
          %v1414 = vpop.f32.mrb[0].mxu0
          %v1415 = vadd.f32 %v1254, %v1414
          %v1416 = vpop.f32.mrb[0].mxu0
          %v1417 = vpop.f32.mrb[0].mxu0
          %v1418 = vadd.f32 %v1257, %v1417
          %v1419 = vpop.f32.mrb[0].mxu0
          %1420 = vmatprep.mubr.bf16.mxu0 %v1074
          %1421 = vmatmul.mubr.bf16.gmra.mrb[0].mxu0 %v1073
          %v1422 = vpop.f32.mrb[0].mxu0
          %v1423 = vadd.f32 %v1262, %v1422
          %v1424 = vpop.f32.mrb[0].mxu0
          %v1425 = vpop.f32.mrb[0].mxu0
          %v1426 = vadd.f32 %v1265, %v1425
          %v1427 = vpop.f32.mrb[0].mxu0
          %1428 = vmatprep.mubr.bf16.mxu0 %v1078
          %1429 = vmatmul.mubr.bf16.gmra.mrb[0].mxu0 %v1077
          %v1430 = vpop.f32.mrb[0].mxu0
          %v1431 = vadd.f32 %v1270, %v1430
          %v1432 = vpop.f32.mrb[0].mxu0
          %v1433 = vpop.f32.mrb[0].mxu0
          %v1434 = vadd.f32 %v1273, %v1433
          %v1435 = vpop.f32.mrb[0].mxu0
          %1436 = vmatprep.mubr.bf16.mxu0 %v1082
          %1437 = vmatmul.mubr.bf16.gmra.mrb[0].mxu0 %v1081
          %v1438 = vpop.f32.mrb[0].mxu0
          %v1439 = vadd.f32 %v1278, %v1438
          %v1440 = vpop.f32.mrb[0].mxu0
          %v1441 = vpop.f32.mrb[0].mxu0
          %v1442 = vadd.f32 %v1281, %v1441
          %v1443 = vpop.f32.mrb[0].mxu0
          %1444 = vmatprep.mubr.bf16.mxu0 %v1086
          %1445 = vmatmul.mubr.bf16.gmra.mrb[0].mxu0 %v1085
          %v1446 = vpop.f32.mrb[0].mxu0
          %v1447 = vadd.f32 %v1286, %v1446
          %v1448 = vpop.f32.mrb[0].mxu0
          %v1449 = vpop.f32.mrb[0].mxu0
          %v1450 = vadd.f32 %v1289, %v1449
          %v1451 = vpop.f32.mrb[0].mxu0
          %1452 = vmatprep.mubr.bf16.mxu0 %v1090
          %1453 = vmatmul.mubr.bf16.gmra.mrb[0].mxu0 %v1089
          %v1454 = vpop.f32.mrb[0].mxu0
          %v1455 = vadd.f32 %v1294, %v1454
          %v1456 = vpop.f32.mrb[0].mxu0
          %v1457 = vpop.f32.mrb[0].mxu0
          %v1458 = vadd.f32 %v1297, %v1457
          %v1459 = vpop.f32.mrb[0].mxu0
          %1460 = vmatprep.mubr.bf16.mxu0 %v1094
          %1461 = vmatmul.mubr.bf16.gmra.mrb[0].mxu0 %v1093
          %v1462 = vpop.f32.mrb[0].mxu0
          %v1463 = vadd.f32 %v1302, %v1462
          %v1464 = vpop.f32.mrb[0].mxu0
          %v1465 = vpop.f32.mrb[0].mxu0
          %v1466 = vadd.f32 %v1305, %v1465
          %v1467 = vpop.f32.mrb[0].mxu0
          %1468 = vmatprep.mubr.bf16.mxu0 %v1098
          %1469 = vmatmul.mubr.bf16.gmra.mrb[0].mxu0 %v1097
          %v1470 = vpop.f32.mrb[0].mxu0
          %v1471 = vadd.f32 %v1310, %v1470
          %v1472 = vpop.f32.mrb[0].mxu0
          %v1473 = vpop.f32.mrb[0].mxu0
          %v1474 = vadd.f32 %v1313, %v1473
          %v1475 = vpop.f32.mrb[0].mxu0
          %1476 = vmatprep.mubr.bf16.mxu0 %v1102
          %1477 = vmatmul.mubr.bf16.gmra.mrb[0].mxu0 %v1101
          %v1478 = vpop.f32.mrb[0].mxu0
          %v1479 = vadd.f32 %v1318, %v1478
          %v1480 = vpop.f32.mrb[0].mxu0
          %v1481 = vpop.f32.mrb[0].mxu0
          %v1482 = vadd.f32 %v1321, %v1481
          %v1483 = vpop.f32.mrb[0].mxu0
          %1484 = vmatprep.mubr.bf16.mxu0 %v1106
          %1485 = vmatmul.mubr.bf16.gmra.mrb[0].mxu0 %v1105
          %v1486 = vpop.f32.mrb[0].mxu0
          %v1487 = vadd.f32 %v1326, %v1486
          %v1488 = vpop.f32.mrb[0].mxu0
          %v1489 = vpop.f32.mrb[0].mxu0
          %v1490 = vadd.f32 %v1329, %v1489
          %v1491 = vpop.f32.mrb[0].mxu0
          %1492 = vdwg.mxu0
          %v1493 = vpack.c.bf16 %v1370, %v1367
          %v1494 = vpack.c.bf16 %v1378, %v1375
          %v1495 = vpack.c.bf16 %v1386, %v1383
          %v1496 = vpack.c.bf16 %v1394, %v1391
          %v1497 = vpack.c.bf16 %v1402, %v1399
          %v1498 = vpack.c.bf16 %v1410, %v1407
          %v1499 = vpack.c.bf16 %v1418, %v1415
          %v1500 = vpack.c.bf16 %v1426, %v1423
          %v1501 = vpack.c.bf16 %v1434, %v1431
          %v1502 = vpack.c.bf16 %v1442, %v1439
          %v1503 = vpack.c.bf16 %v1450, %v1447
          %v1504 = vpack.c.bf16 %v1458, %v1455
          %v1505 = vpack.c.bf16 %v1466, %v1463
          %v1506 = vpack.c.bf16 %v1474, %v1471
          %v1507 = vpack.c.bf16 %v1482, %v1479
          %v1508 = vpack.c.bf16 %v1490, %v1487
          %s1509 = scalar_lea.vmem [#allocation4], %s326
          %v1510 = vld [vmem:[%s1509] sm:$0xff]
          %v1511 = vld [vmem:[%s1509 + $0x8] sm:$0xff]
          %v1512 = vld [vmem:[%s1509 + $0x10] sm:$0xff]
          %v1513 = vld [vmem:[%s1509 + $0x18] sm:$0xff]
          %v1514 = vld [vmem:[%s1509 + $0x20] sm:$0xff]
          %v1515 = vld [vmem:[%s1509 + $0x28] sm:$0xff]
          %v1516 = vld [vmem:[%s1509 + $0x30] sm:$0xff]
          %v1517 = vld [vmem:[%s1509 + $0x38] sm:$0xff]
          %v1518 = vld [vmem:[%s1509 + $0x40] sm:$0xff]
          %v1519 = vld [vmem:[%s1509 + $0x48] sm:$0xff]
          %v1520 = vld [vmem:[%s1509 + $0x50] sm:$0xff]
          %v1521 = vld [vmem:[%s1509 + $0x58] sm:$0xff]
          %v1522 = vld [vmem:[%s1509 + $0x60] sm:$0xff]
          %v1523 = vld [vmem:[%s1509 + $0x68] sm:$0xff]
          %v1524 = vld [vmem:[%s1509 + $0x70] sm:$0xff]
          %v1525 = vld [vmem:[%s1509 + $0x78] sm:$0xff]
          %v1526 = vld [vmem:[%s1509 + $0x80] sm:$0xff]
          %v1527 = vld [vmem:[%s1509 + $0x88] sm:$0xff]
          %v1528 = vld [vmem:[%s1509 + $0x90] sm:$0xff]
          %v1529 = vld [vmem:[%s1509 + $0x98] sm:$0xff]
          %v1530 = vld [vmem:[%s1509 + $0xa0] sm:$0xff]
          %v1531 = vld [vmem:[%s1509 + $0xa8] sm:$0xff]
          %v1532 = vld [vmem:[%s1509 + $0xb0] sm:$0xff]
          %v1533 = vld [vmem:[%s1509 + $0xb8] sm:$0xff]
          %v1534 = vld [vmem:[%s1509 + $0xc0] sm:$0xff]
          %v1535 = vld [vmem:[%s1509 + $0xc8] sm:$0xff]
          %v1536 = vld [vmem:[%s1509 + $0xd0] sm:$0xff]
          %v1537 = vld [vmem:[%s1509 + $0xd8] sm:$0xff]
          %v1538 = vld [vmem:[%s1509 + $0xe0] sm:$0xff]
          %v1539 = vld [vmem:[%s1509 + $0xe8] sm:$0xff]
          %v1540 = vld [vmem:[%s1509 + $0xf0] sm:$0xff]
          %v1541 = vld [vmem:[%s1509 + $0xf8] sm:$0xff]
          %v1542 = vld [vmem:[%s283] sm:$0xf]
          %v1543 = vld [vmem:[%s283 + $0x4] sm:$0xf]
          %v1544 = vld [vmem:[%s283 + $0x8] sm:$0xf]
          %v1545 = vld [vmem:[%s283 + $0xc] sm:$0xf]
          %v1546 = vld [vmem:[%s283 + $0x10] sm:$0xf]
          %v1547 = vld [vmem:[%s283 + $0x14] sm:$0xf]
          %v1548 = vld [vmem:[%s283 + $0x18] sm:$0xf]
          %v1549 = vld [vmem:[%s283 + $0x1c] sm:$0xf]
          %v1550 = vld [vmem:[%s283 + $0x20] sm:$0xf]
          %v1551 = vld [vmem:[%s283 + $0x24] sm:$0xf]
          %v1552 = vld [vmem:[%s283 + $0x28] sm:$0xf]
          %v1553 = vld [vmem:[%s283 + $0x2c] sm:$0xf]
          %v1554 = vld [vmem:[%s283 + $0x30] sm:$0xf]
          %v1555 = vld [vmem:[%s283 + $0x34] sm:$0xf]
          %v1556 = vld [vmem:[%s283 + $0x38] sm:$0xf]
          %v1557 = vld [vmem:[%s283 + $0x3c] sm:$0xf]
          %v1574 = vunpack.c.l.b16 %v1542
          %v1575 = vunpack.c.l.b16 %v1543
          %v1576 = vunpack.c.l.b16 %v1544
          %v1577 = vunpack.c.l.b16 %v1545
          %v1578 = vunpack.c.l.b16 %v1546
          %v1579 = vunpack.c.l.b16 %v1547
          %v1580 = vunpack.c.l.b16 %v1548
          %v1581 = vunpack.c.l.b16 %v1549
          %v1582 = vunpack.c.l.b16 %v1550
          %v1583 = vunpack.c.l.b16 %v1551
          %v1584 = vunpack.c.l.b16 %v1552
          %v1585 = vunpack.c.l.b16 %v1553
          %v1586 = vunpack.c.l.b16 %v1554
          %v1587 = vunpack.c.l.b16 %v1555
          %v1588 = vunpack.c.l.b16 %v1556
          %v1589 = vunpack.c.l.b16 %v1557
          %v1590 = vpack.c.b16 %v1575, %v1574
          %v1591 = vpack.c.b16 %v1577, %v1576
          %v1592 = vpack.c.b16 %v1579, %v1578
          %v1593 = vpack.c.b16 %v1581, %v1580
          %v1594 = vpack.c.b16 %v1583, %v1582
          %v1595 = vpack.c.b16 %v1585, %v1584
          %v1596 = vpack.c.b16 %v1587, %v1586
          %v1597 = vpack.c.b16 %v1589, %v1588
          %1606 = vmatprep.subr.bf16.mxu0 0
          %1607 = vmatpush1.bf16.msra.mxu0 %v1590
          %1608 = vmatprep.subr.bf16.mxu0 0
          %1609 = vmatpush1.bf16.msra.mxu0 %v1591
          %1610 = vmatprep.subr.bf16.mxu0 0
          %1611 = vmatpush1.bf16.msra.mxu0 %v1592
          %1612 = vmatprep.subr.bf16.mxu0 0
          %1613 = vmatpush1.bf16.msra.mxu0 %v1593
          %1614 = vmatprep.subr.bf16.mxu0 0
          %1615 = vmatpush1.bf16.msra.mxu0 %v1594
          %1616 = vmatprep.subr.bf16.mxu0 0
          %1617 = vmatpush1.bf16.msra.mxu0 %v1595
          %1618 = vmatprep.subr.bf16.mxu0 0
          %1619 = vmatpush1.bf16.msra.mxu0 %v1596
          %1620 = vmatprep.subr.bf16.mxu0 0
          %1621 = vmatpush1.bf16.msra.mxu0 %v1597
          %1622 = vmatprep.subr.bf16.mxu0 0
          %1623 = vmatpush1.bf16.msra.mxu0 0
          %1624 = vmatprep.subr.bf16.mxu0 0
          %1625 = vmatpush1.bf16.msra.mxu0 0
          %1626 = vmatprep.subr.bf16.mxu0 0
          %1627 = vmatpush1.bf16.msra.mxu0 0
          %1628 = vmatprep.subr.bf16.mxu0 0
          %1629 = vmatpush1.bf16.msra.mxu0 0
          %1630 = vmatprep.subr.bf16.mxu0 0
          %1631 = vmatpush1.bf16.msra.mxu0 0
          %1632 = vmatprep.subr.bf16.mxu0 0
          %1633 = vmatpush1.bf16.msra.mxu0 0
          %1634 = vmatprep.subr.bf16.mxu0 0
          %1635 = vmatpush1.bf16.msra.mxu0 0
          %1636 = vmatprep.subr.bf16.mxu0 0
          %1637 = vmatpush1.bf16.msra.mxu0 0
          %1638 = vmatprep.mubr.bf16.mxu0 0
          %1639 = vmatmul.mubr.bf16.gmra.mrb[0].mxu0 %v1493
          %v1640 = vpop.f32.mrb[0].mxu0
          %v1641 = vadd.f32 0.0, %v1640
          %v1642 = vpop.f32.mrb[0].mxu0
          %v1643 = vpop.f32.mrb[0].mxu0
          %v1644 = vadd.f32 0.0, %v1643
          %v1645 = vpop.f32.mrb[0].mxu0
          %1646 = vmatprep.mubr.bf16.mxu0 0
          %1647 = vmatmul.mubr.bf16.gmra.mrb[0].mxu0 %v1494
          %v1648 = vpop.f32.mrb[0].mxu0
          %v1649 = vadd.f32 0.0, %v1648
          %v1650 = vpop.f32.mrb[0].mxu0
          %v1651 = vpop.f32.mrb[0].mxu0
          %v1652 = vadd.f32 0.0, %v1651
          %v1653 = vpop.f32.mrb[0].mxu0
          %1654 = vmatprep.mubr.bf16.mxu0 0
          %1655 = vmatmul.mubr.bf16.gmra.mrb[0].mxu0 %v1495
          %v1656 = vpop.f32.mrb[0].mxu0
          %v1657 = vadd.f32 0.0, %v1656
          %v1658 = vpop.f32.mrb[0].mxu0
          %v1659 = vpop.f32.mrb[0].mxu0
          %v1660 = vadd.f32 0.0, %v1659
          %v1661 = vpop.f32.mrb[0].mxu0
          %1662 = vmatprep.mubr.bf16.mxu0 0
          %1663 = vmatmul.mubr.bf16.gmra.mrb[0].mxu0 %v1496
          %v1664 = vpop.f32.mrb[0].mxu0
          %v1665 = vadd.f32 0.0, %v1664
          %v1666 = vpop.f32.mrb[0].mxu0
          %v1667 = vpop.f32.mrb[0].mxu0
          %v1668 = vadd.f32 0.0, %v1667
          %v1669 = vpop.f32.mrb[0].mxu0
          %1670 = vmatprep.mubr.bf16.mxu0 0
          %1671 = vmatmul.mubr.bf16.gmra.mrb[0].mxu0 %v1497
          %v1672 = vpop.f32.mrb[0].mxu0
          %v1673 = vadd.f32 0.0, %v1672
          %v1674 = vpop.f32.mrb[0].mxu0
          %v1675 = vpop.f32.mrb[0].mxu0
          %v1676 = vadd.f32 0.0, %v1675
          %v1677 = vpop.f32.mrb[0].mxu0
          %1678 = vmatprep.mubr.bf16.mxu0 0
          %1679 = vmatmul.mubr.bf16.gmra.mrb[0].mxu0 %v1498
          %v1680 = vpop.f32.mrb[0].mxu0
          %v1681 = vadd.f32 0.0, %v1680
          %v1682 = vpop.f32.mrb[0].mxu0
          %v1683 = vpop.f32.mrb[0].mxu0
          %v1684 = vadd.f32 0.0, %v1683
          %v1685 = vpop.f32.mrb[0].mxu0
          %1686 = vmatprep.mubr.bf16.mxu0 0
          %1687 = vmatmul.mubr.bf16.gmra.mrb[0].mxu0 %v1499
          %v1688 = vpop.f32.mrb[0].mxu0
          %v1689 = vadd.f32 0.0, %v1688
          %v1690 = vpop.f32.mrb[0].mxu0
          %v1691 = vpop.f32.mrb[0].mxu0
          %v1692 = vadd.f32 0.0, %v1691
          %v1693 = vpop.f32.mrb[0].mxu0
          %1694 = vmatprep.mubr.bf16.mxu0 0
          %1695 = vmatmul.mubr.bf16.gmra.mrb[0].mxu0 %v1500
          %v1696 = vpop.f32.mrb[0].mxu0
          %v1697 = vadd.f32 0.0, %v1696
          %v1698 = vpop.f32.mrb[0].mxu0
          %v1699 = vpop.f32.mrb[0].mxu0
          %v1700 = vadd.f32 0.0, %v1699
          %v1701 = vpop.f32.mrb[0].mxu0
          %1702 = vmatprep.mubr.bf16.mxu0 0
          %1703 = vmatmul.mubr.bf16.gmra.mrb[0].mxu0 %v1501
          %v1704 = vpop.f32.mrb[0].mxu0
          %v1705 = vadd.f32 0.0, %v1704
          %v1706 = vpop.f32.mrb[0].mxu0
          %v1707 = vpop.f32.mrb[0].mxu0
          %v1708 = vadd.f32 0.0, %v1707
          %v1709 = vpop.f32.mrb[0].mxu0
          %1710 = vmatprep.mubr.bf16.mxu0 0
          %1711 = vmatmul.mubr.bf16.gmra.mrb[0].mxu0 %v1502
          %v1712 = vpop.f32.mrb[0].mxu0
          %v1713 = vadd.f32 0.0, %v1712
          %v1714 = vpop.f32.mrb[0].mxu0
          %v1715 = vpop.f32.mrb[0].mxu0
          %v1716 = vadd.f32 0.0, %v1715
          %v1717 = vpop.f32.mrb[0].mxu0
          %1718 = vmatprep.mubr.bf16.mxu0 0
          %1719 = vmatmul.mubr.bf16.gmra.mrb[0].mxu0 %v1503
          %v1720 = vpop.f32.mrb[0].mxu0
          %v1721 = vadd.f32 0.0, %v1720
          %v1722 = vpop.f32.mrb[0].mxu0
          %v1723 = vpop.f32.mrb[0].mxu0
          %v1724 = vadd.f32 0.0, %v1723
          %v1725 = vpop.f32.mrb[0].mxu0
          %1726 = vmatprep.mubr.bf16.mxu0 0
          %1727 = vmatmul.mubr.bf16.gmra.mrb[0].mxu0 %v1504
          %v1728 = vpop.f32.mrb[0].mxu0
          %v1729 = vadd.f32 0.0, %v1728
          %v1730 = vpop.f32.mrb[0].mxu0
          %v1731 = vpop.f32.mrb[0].mxu0
          %v1732 = vadd.f32 0.0, %v1731
          %v1733 = vpop.f32.mrb[0].mxu0
          %1734 = vmatprep.mubr.bf16.mxu0 0
          %1735 = vmatmul.mubr.bf16.gmra.mrb[0].mxu0 %v1505
          %v1736 = vpop.f32.mrb[0].mxu0
          %v1737 = vadd.f32 0.0, %v1736
          %v1738 = vpop.f32.mrb[0].mxu0
          %v1739 = vpop.f32.mrb[0].mxu0
          %v1740 = vadd.f32 0.0, %v1739
          %v1741 = vpop.f32.mrb[0].mxu0
          %1742 = vmatprep.mubr.bf16.mxu0 0
          %1743 = vmatmul.mubr.bf16.gmra.mrb[0].mxu0 %v1506
          %v1744 = vpop.f32.mrb[0].mxu0
          %v1745 = vadd.f32 0.0, %v1744
          %v1746 = vpop.f32.mrb[0].mxu0
          %v1747 = vpop.f32.mrb[0].mxu0
          %v1748 = vadd.f32 0.0, %v1747
          %v1749 = vpop.f32.mrb[0].mxu0
          %1750 = vmatprep.mubr.bf16.mxu0 0
          %1751 = vmatmul.mubr.bf16.gmra.mrb[0].mxu0 %v1507
          %v1752 = vpop.f32.mrb[0].mxu0
          %v1753 = vadd.f32 0.0, %v1752
          %v1754 = vpop.f32.mrb[0].mxu0
          %v1755 = vpop.f32.mrb[0].mxu0
          %v1756 = vadd.f32 0.0, %v1755
          %v1757 = vpop.f32.mrb[0].mxu0
          %1758 = vmatprep.mubr.bf16.mxu0 0
          %1759 = vmatmul.mubr.bf16.gmra.mrb[0].mxu0 %v1508
          %v1760 = vpop.f32.mrb[0].mxu0
          %v1761 = vadd.f32 0.0, %v1760
          %v1762 = vpop.f32.mrb[0].mxu0
          %v1763 = vpop.f32.mrb[0].mxu0
          %v1764 = vadd.f32 0.0, %v1763
          %v1765 = vpop.f32.mrb[0].mxu0
          %1766 = vdwg.mxu0
          %v1767 = vadd.f32 %v1510, %v1641
          %v1768 = vadd.f32 %v1511, %v1644
          %v1769 = vadd.f32 %v1512, %v1649
          %v1770 = vadd.f32 %v1513, %v1652
          %v1771 = vadd.f32 %v1514, %v1657
          %v1772 = vadd.f32 %v1515, %v1660
          %v1773 = vadd.f32 %v1516, %v1665
          %v1774 = vadd.f32 %v1517, %v1668
          %v1775 = vadd.f32 %v1518, %v1673
          %v1776 = vadd.f32 %v1519, %v1676
          %v1777 = vadd.f32 %v1520, %v1681
          %v1778 = vadd.f32 %v1521, %v1684
          %v1779 = vadd.f32 %v1522, %v1689
          %v1780 = vadd.f32 %v1523, %v1692
          %v1781 = vadd.f32 %v1524, %v1697
          %v1782 = vadd.f32 %v1525, %v1700
          %v1783 = vadd.f32 %v1526, %v1705
          %v1784 = vadd.f32 %v1527, %v1708
          %v1785 = vadd.f32 %v1528, %v1713
          %v1786 = vadd.f32 %v1529, %v1716
          %v1787 = vadd.f32 %v1530, %v1721
          %v1788 = vadd.f32 %v1531, %v1724
          %v1789 = vadd.f32 %v1532, %v1729
          %v1790 = vadd.f32 %v1533, %v1732
          %v1791 = vadd.f32 %v1534, %v1737
          %v1792 = vadd.f32 %v1535, %v1740
          %v1793 = vadd.f32 %v1536, %v1745
          %v1794 = vadd.f32 %v1537, %v1748
          %v1795 = vadd.f32 %v1538, %v1753
          %v1796 = vadd.f32 %v1539, %v1756
          %v1797 = vadd.f32 %v1540, %v1761
          %v1798 = vadd.f32 %v1541, %v1764
          %1799 = vst [vmem:[%s1509] sm:$0xff] %v1767
          %1800 = vst [vmem:[%s1509 + $0x8] sm:$0xff] %v1768
          %1801 = vst [vmem:[%s1509 + $0x10] sm:$0xff] %v1769
          %1802 = vst [vmem:[%s1509 + $0x18] sm:$0xff] %v1770
          %1803 = vst [vmem:[%s1509 + $0x20] sm:$0xff] %v1771
          %1804 = vst [vmem:[%s1509 + $0x28] sm:$0xff] %v1772
          %1805 = vst [vmem:[%s1509 + $0x30] sm:$0xff] %v1773
          %1806 = vst [vmem:[%s1509 + $0x38] sm:$0xff] %v1774
          %1807 = vst [vmem:[%s1509 + $0x40] sm:$0xff] %v1775
          %1808 = vst [vmem:[%s1509 + $0x48] sm:$0xff] %v1776
          %1809 = vst [vmem:[%s1509 + $0x50] sm:$0xff] %v1777
          %1810 = vst [vmem:[%s1509 + $0x58] sm:$0xff] %v1778
          %1811 = vst [vmem:[%s1509 + $0x60] sm:$0xff] %v1779
          %1812 = vst [vmem:[%s1509 + $0x68] sm:$0xff] %v1780
          %1813 = vst [vmem:[%s1509 + $0x70] sm:$0xff] %v1781
          %1814 = vst [vmem:[%s1509 + $0x78] sm:$0xff] %v1782
          %1815 = vst [vmem:[%s1509 + $0x80] sm:$0xff] %v1783
          %1816 = vst [vmem:[%s1509 + $0x88] sm:$0xff] %v1784
          %1817 = vst [vmem:[%s1509 + $0x90] sm:$0xff] %v1785
          %1818 = vst [vmem:[%s1509 + $0x98] sm:$0xff] %v1786
          %1819 = vst [vmem:[%s1509 + $0xa0] sm:$0xff] %v1787
          %1820 = vst [vmem:[%s1509 + $0xa8] sm:$0xff] %v1788
          %1821 = vst [vmem:[%s1509 + $0xb0] sm:$0xff] %v1789
          %1822 = vst [vmem:[%s1509 + $0xb8] sm:$0xff] %v1790
          %1823 = vst [vmem:[%s1509 + $0xc0] sm:$0xff] %v1791
          %1824 = vst [vmem:[%s1509 + $0xc8] sm:$0xff] %v1792
          %1825 = vst [vmem:[%s1509 + $0xd0] sm:$0xff] %v1793
          %1826 = vst [vmem:[%s1509 + $0xd8] sm:$0xff] %v1794
          %1827 = vst [vmem:[%s1509 + $0xe0] sm:$0xff] %v1795
          %1828 = vst [vmem:[%s1509 + $0xe8] sm:$0xff] %v1796
          %1829 = vst [vmem:[%s1509 + $0xf0] sm:$0xff] %v1797
          %1830 = vst [vmem:[%s1509 + $0xf8] sm:$0xff] %v1798
          %p1831 = scmp.lt.s32.totalorder %s28, 2
          // Predicated region
          $region57: #{tpu_custom_call.1} parent=55 // pred_check
            %p1832 = pneg %p1831
          $region58: #{tpu_custom_call.1} parent=55 // pred_check_branch
            %1834 = sbr.rel (%p1832) target = $region60
          $region59: #{tpu_custom_call.1} parent=55 // pred_region
            %s1835 = sshra.s32 %s326, 4
            %s1836 = sand.u32 %s326, 15
            %s1837 = smul.addr %s1835, 8
            %s1838 = scalar_lea.vmem [#allocation3], %s1837
            %1839 = vst [vmem:[%s1838] sm:$0xff] %v1493
            %1840 = vst [vmem:[%s1838 + $0x8] sm:$0xff] %v1494
            %1841 = vst [vmem:[%s1838 + $0x10] sm:$0xff] %v1495
            %1842 = vst [vmem:[%s1838 + $0x18] sm:$0xff] %v1496
            %1843 = vst [vmem:[%s1838 + $0x20] sm:$0xff] %v1497
            %1844 = vst [vmem:[%s1838 + $0x28] sm:$0xff] %v1498
            %1845 = vst [vmem:[%s1838 + $0x30] sm:$0xff] %v1499
            %1846 = vst [vmem:[%s1838 + $0x38] sm:$0xff] %v1500
            %1847 = vst [vmem:[%s1838 + $0x40] sm:$0xff] %v1501
            %1848 = vst [vmem:[%s1838 + $0x48] sm:$0xff] %v1502
            %1849 = vst [vmem:[%s1838 + $0x50] sm:$0xff] %v1503
            %1850 = vst [vmem:[%s1838 + $0x58] sm:$0xff] %v1504
            %1851 = vst [vmem:[%s1838 + $0x60] sm:$0xff] %v1505
            %1852 = vst [vmem:[%s1838 + $0x68] sm:$0xff] %v1506
            %1853 = vst [vmem:[%s1838 + $0x70] sm:$0xff] %v1507
            %1854 = vst [vmem:[%s1838 + $0x78] sm:$0xff] %v1508
          $region60: #{tpu_custom_call.1} parent=55 // pred_fallthru
            _
        $region56: #{tpu_custom_call.1} parent=35 // pred_fallthru
          _
        %p1855 = scmp.eq.s32.totalorder %s749, 0
        %p1856 = pnand %p737, %p1855
        %p1857 = pneg %p1856
        // Predicated region
        $region61: #{tpu_custom_call.1} parent=35 // pred_check
          _
        $region62: #{tpu_custom_call.1} parent=35 // pred_check_branch
          %1859 = sbr.rel (%p1856) target = $region64
        $region63: #{tpu_custom_call.1} parent=35 // pred_region
          %v1860 = vld [vmem:[%s265] sm:$0xff]
          %v1861 = vld [vmem:[%s265 + $0x8] sm:$0xff]
          %v1862 = vld [vmem:[%s265 + $0x10] sm:$0xff]
          %v1863 = vld [vmem:[%s265 + $0x18] sm:$0xff]
          %v1864 = vld [vmem:[%s265 + $0x20] sm:$0xff]
          %v1865 = vld [vmem:[%s265 + $0x28] sm:$0xff]
          %v1866 = vld [vmem:[%s265 + $0x30] sm:$0xff]
          %v1867 = vld [vmem:[%s265 + $0x38] sm:$0xff]
          %v1868 = vld [vmem:[%s265 + $0x40] sm:$0xff]
          %v1869 = vld [vmem:[%s265 + $0x48] sm:$0xff]
          %v1870 = vld [vmem:[%s265 + $0x50] sm:$0xff]
          %v1871 = vld [vmem:[%s265 + $0x58] sm:$0xff]
          %v1872 = vld [vmem:[%s265 + $0x60] sm:$0xff]
          %v1873 = vld [vmem:[%s265 + $0x68] sm:$0xff]
          %v1874 = vld [vmem:[%s265 + $0x70] sm:$0xff]
          %v1875 = vld [vmem:[%s265 + $0x78] sm:$0xff]
          %v1876 = vld [vmem:[%s265 + $0x80] sm:$0xff]
          %v1877 = vld [vmem:[%s265 + $0x88] sm:$0xff]
          %v1878 = vld [vmem:[%s265 + $0x90] sm:$0xff]
          %v1879 = vld [vmem:[%s265 + $0x98] sm:$0xff]
          %v1880 = vld [vmem:[%s265 + $0xa0] sm:$0xff]
          %v1881 = vld [vmem:[%s265 + $0xa8] sm:$0xff]
          %v1882 = vld [vmem:[%s265 + $0xb0] sm:$0xff]
          %v1883 = vld [vmem:[%s265 + $0xb8] sm:$0xff]
          %v1884 = vld [vmem:[%s265 + $0xc0] sm:$0xff]
          %v1885 = vld [vmem:[%s265 + $0xc8] sm:$0xff]
          %v1886 = vld [vmem:[%s265 + $0xd0] sm:$0xff]
          %v1887 = vld [vmem:[%s265 + $0xd8] sm:$0xff]
          %v1888 = vld [vmem:[%s265 + $0xe0] sm:$0xff]
          %v1889 = vld [vmem:[%s265 + $0xe8] sm:$0xff]
          %v1890 = vld [vmem:[%s265 + $0xf0] sm:$0xff]
          %v1891 = vld [vmem:[%s265 + $0xf8] sm:$0xff]
          %v1892 = vld [vmem:[%s265 + $0x100] sm:$0xff]
          %v1893 = vld [vmem:[%s265 + $0x108] sm:$0xff]
          %v1894 = vld [vmem:[%s265 + $0x110] sm:$0xff]
          %v1895 = vld [vmem:[%s265 + $0x118] sm:$0xff]
          %v1896 = vld [vmem:[%s265 + $0x120] sm:$0xff]
          %v1897 = vld [vmem:[%s265 + $0x128] sm:$0xff]
          %v1898 = vld [vmem:[%s265 + $0x130] sm:$0xff]
          %v1899 = vld [vmem:[%s265 + $0x138] sm:$0xff]
          %v1900 = vld [vmem:[%s265 + $0x140] sm:$0xff]
          %v1901 = vld [vmem:[%s265 + $0x148] sm:$0xff]
          %v1902 = vld [vmem:[%s265 + $0x150] sm:$0xff]
          %v1903 = vld [vmem:[%s265 + $0x158] sm:$0xff]
          %v1904 = vld [vmem:[%s265 + $0x160] sm:$0xff]
          %v1905 = vld [vmem:[%s265 + $0x168] sm:$0xff]
          %v1906 = vld [vmem:[%s265 + $0x170] sm:$0xff]
          %v1907 = vld [vmem:[%s265 + $0x178] sm:$0xff]
          %v1908 = vld [vmem:[%s265 + $0x180] sm:$0xff]
          %v1909 = vld [vmem:[%s265 + $0x188] sm:$0xff]
          %v1910 = vld [vmem:[%s265 + $0x190] sm:$0xff]
          %v1911 = vld [vmem:[%s265 + $0x198] sm:$0xff]
          %v1912 = vld [vmem:[%s265 + $0x1a0] sm:$0xff]
          %v1913 = vld [vmem:[%s265 + $0x1a8] sm:$0xff]
          %v1914 = vld [vmem:[%s265 + $0x1b0] sm:$0xff]
          %v1915 = vld [vmem:[%s265 + $0x1b8] sm:$0xff]
          %v1916 = vld [vmem:[%s265 + $0x1c0] sm:$0xff]
          %v1917 = vld [vmem:[%s265 + $0x1c8] sm:$0xff]
          %v1918 = vld [vmem:[%s265 + $0x1d0] sm:$0xff]
          %v1919 = vld [vmem:[%s265 + $0x1d8] sm:$0xff]
          %v1920 = vld [vmem:[%s265 + $0x1e0] sm:$0xff]
          %v1921 = vld [vmem:[%s265 + $0x1e8] sm:$0xff]
          %v1922 = vld [vmem:[%s265 + $0x1f0] sm:$0xff]
          %v1923 = vld [vmem:[%s265 + $0x1f8] sm:$0xff]
          %v1924 = vld [vmem:[#allocation3] sm:$0xff]
          %v1925 = vld [vmem:[#allocation3 + $0x8] sm:$0xff]
          %v1926 = vld [vmem:[#allocation3 + $0x10] sm:$0xff]
          %v1927 = vld [vmem:[#allocation3 + $0x18] sm:$0xff]
          %v1928 = vld [vmem:[#allocation3 + $0x20] sm:$0xff]
          %v1929 = vld [vmem:[#allocation3 + $0x28] sm:$0xff]
          %v1930 = vld [vmem:[#allocation3 + $0x30] sm:$0xff]
          %v1931 = vld [vmem:[#allocation3 + $0x38] sm:$0xff]
          %v1932 = vld [vmem:[#allocation3 + $0x40] sm:$0xff]
          %v1933 = vld [vmem:[#allocation3 + $0x48] sm:$0xff]
          %v1934 = vld [vmem:[#allocation3 + $0x50] sm:$0xff]
          %v1935 = vld [vmem:[#allocation3 + $0x58] sm:$0xff]
          %v1936 = vld [vmem:[#allocation3 + $0x60] sm:$0xff]
          %v1937 = vld [vmem:[#allocation3 + $0x68] sm:$0xff]
          %v1938 = vld [vmem:[#allocation3 + $0x70] sm:$0xff]
          %v1939 = vld [vmem:[#allocation3 + $0x78] sm:$0xff]
          %v1940 = vld [vmem:[#allocation3 + $0x80] sm:$0xff]
          %v1941 = vld [vmem:[#allocation3 + $0x88] sm:$0xff]
          %v1942 = vld [vmem:[#allocation3 + $0x90] sm:$0xff]
          %v1943 = vld [vmem:[#allocation3 + $0x98] sm:$0xff]
          %v1944 = vld [vmem:[#allocation3 + $0xa0] sm:$0xff]
          %v1945 = vld [vmem:[#allocation3 + $0xa8] sm:$0xff]
          %v1946 = vld [vmem:[#allocation3 + $0xb0] sm:$0xff]
          %v1947 = vld [vmem:[#allocation3 + $0xb8] sm:$0xff]
          %v1948 = vld [vmem:[#allocation3 + $0xc0] sm:$0xff]
          %v1949 = vld [vmem:[#allocation3 + $0xc8] sm:$0xff]
          %v1950 = vld [vmem:[#allocation3 + $0xd0] sm:$0xff]
          %v1951 = vld [vmem:[#allocation3 + $0xd8] sm:$0xff]
          %v1952 = vld [vmem:[#allocation3 + $0xe0] sm:$0xff]
          %v1953 = vld [vmem:[#allocation3 + $0xe8] sm:$0xff]
          %v1954 = vld [vmem:[#allocation3 + $0xf0] sm:$0xff]
          %v1955 = vld [vmem:[#allocation3 + $0xf8] sm:$0xff]
          %v2020 = vunpack.c.l.b16 %v1860
          %v2021 = vunpack.c.h.b16 %v1860
          %v2022 = vunpack.c.l.b16 %v1861
          %v2023 = vunpack.c.h.b16 %v1861
          %v2024 = vunpack.c.l.b16 %v1862
          %v2025 = vunpack.c.h.b16 %v1862
          %v2026 = vunpack.c.l.b16 %v1863
          %v2027 = vunpack.c.h.b16 %v1863
          %v2028 = vunpack.c.l.b16 %v1864
          %v2029 = vunpack.c.h.b16 %v1864
          %v2030 = vunpack.c.l.b16 %v1865
          %v2031 = vunpack.c.h.b16 %v1865
          %v2032 = vunpack.c.l.b16 %v1866
          %v2033 = vunpack.c.h.b16 %v1866
          %v2034 = vunpack.c.l.b16 %v1867
          %v2035 = vunpack.c.h.b16 %v1867
          %v2036 = vunpack.c.l.b16 %v1868
          %v2037 = vunpack.c.h.b16 %v1868
          %v2038 = vunpack.c.l.b16 %v1869
          %v2039 = vunpack.c.h.b16 %v1869
          %v2040 = vunpack.c.l.b16 %v1870
          %v2041 = vunpack.c.h.b16 %v1870
          %v2042 = vunpack.c.l.b16 %v1871
          %v2043 = vunpack.c.h.b16 %v1871
          %v2044 = vunpack.c.l.b16 %v1872
          %v2045 = vunpack.c.h.b16 %v1872
          %v2046 = vunpack.c.l.b16 %v1873
          %v2047 = vunpack.c.h.b16 %v1873
          %v2048 = vunpack.c.l.b16 %v1874
          %v2049 = vunpack.c.h.b16 %v1874
          %v2050 = vunpack.c.l.b16 %v1875
          %v2051 = vunpack.c.h.b16 %v1875
          %v2052 = vunpack.c.l.b16 %v1876
          %v2053 = vunpack.c.h.b16 %v1876
          %v2054 = vunpack.c.l.b16 %v1877
          %v2055 = vunpack.c.h.b16 %v1877
          %v2056 = vunpack.c.l.b16 %v1878
          %v2057 = vunpack.c.h.b16 %v1878
          %v2058 = vunpack.c.l.b16 %v1879
          %v2059 = vunpack.c.h.b16 %v1879
          %v2060 = vunpack.c.l.b16 %v1880
          %v2061 = vunpack.c.h.b16 %v1880
          %v2062 = vunpack.c.l.b16 %v1881
          %v2063 = vunpack.c.h.b16 %v1881
          %v2064 = vunpack.c.l.b16 %v1882
          %v2065 = vunpack.c.h.b16 %v1882
          %v2066 = vunpack.c.l.b16 %v1883
          %v2067 = vunpack.c.h.b16 %v1883
          %v2068 = vunpack.c.l.b16 %v1884
          %v2069 = vunpack.c.h.b16 %v1884
          %v2070 = vunpack.c.l.b16 %v1885
          %v2071 = vunpack.c.h.b16 %v1885
          %v2072 = vunpack.c.l.b16 %v1886
          %v2073 = vunpack.c.h.b16 %v1886
          %v2074 = vunpack.c.l.b16 %v1887
          %v2075 = vunpack.c.h.b16 %v1887
          %v2076 = vunpack.c.l.b16 %v1888
          %v2077 = vunpack.c.h.b16 %v1888
          %v2078 = vunpack.c.l.b16 %v1889
          %v2079 = vunpack.c.h.b16 %v1889
          %v2080 = vunpack.c.l.b16 %v1890
          %v2081 = vunpack.c.h.b16 %v1890
          %v2082 = vunpack.c.l.b16 %v1891
          %v2083 = vunpack.c.h.b16 %v1891
          %v2084 = vunpack.c.l.b16 %v1892
          %v2085 = vunpack.c.h.b16 %v1892
          %v2086 = vunpack.c.l.b16 %v1893
          %v2087 = vunpack.c.h.b16 %v1893
          %v2088 = vunpack.c.l.b16 %v1894
          %v2089 = vunpack.c.h.b16 %v1894
          %v2090 = vunpack.c.l.b16 %v1895
          %v2091 = vunpack.c.h.b16 %v1895
          %v2092 = vunpack.c.l.b16 %v1896
          %v2093 = vunpack.c.h.b16 %v1896
          %v2094 = vunpack.c.l.b16 %v1897
          %v2095 = vunpack.c.h.b16 %v1897
          %v2096 = vunpack.c.l.b16 %v1898
          %v2097 = vunpack.c.h.b16 %v1898
          %v2098 = vunpack.c.l.b16 %v1899
          %v2099 = vunpack.c.h.b16 %v1899
          %v2100 = vunpack.c.l.b16 %v1900
          %v2101 = vunpack.c.h.b16 %v1900
          %v2102 = vunpack.c.l.b16 %v1901
          %v2103 = vunpack.c.h.b16 %v1901
          %v2104 = vunpack.c.l.b16 %v1902
          %v2105 = vunpack.c.h.b16 %v1902
          %v2106 = vunpack.c.l.b16 %v1903
          %v2107 = vunpack.c.h.b16 %v1903
          %v2108 = vunpack.c.l.b16 %v1904
          %v2109 = vunpack.c.h.b16 %v1904
          %v2110 = vunpack.c.l.b16 %v1905
          %v2111 = vunpack.c.h.b16 %v1905
          %v2112 = vunpack.c.l.b16 %v1906
          %v2113 = vunpack.c.h.b16 %v1906
          %v2114 = vunpack.c.l.b16 %v1907
          %v2115 = vunpack.c.h.b16 %v1907
          %v2116 = vunpack.c.l.b16 %v1908
          %v2117 = vunpack.c.h.b16 %v1908
          %v2118 = vunpack.c.l.b16 %v1909
          %v2119 = vunpack.c.h.b16 %v1909
          %v2120 = vunpack.c.l.b16 %v1910
          %v2121 = vunpack.c.h.b16 %v1910
          %v2122 = vunpack.c.l.b16 %v1911
          %v2123 = vunpack.c.h.b16 %v1911
          %v2124 = vunpack.c.l.b16 %v1912
          %v2125 = vunpack.c.h.b16 %v1912
          %v2126 = vunpack.c.l.b16 %v1913
          %v2127 = vunpack.c.h.b16 %v1913
          %v2128 = vunpack.c.l.b16 %v1914
          %v2129 = vunpack.c.h.b16 %v1914
          %v2130 = vunpack.c.l.b16 %v1915
          %v2131 = vunpack.c.h.b16 %v1915
          %v2132 = vunpack.c.l.b16 %v1916
          %v2133 = vunpack.c.h.b16 %v1916
          %v2134 = vunpack.c.l.b16 %v1917
          %v2135 = vunpack.c.h.b16 %v1917
          %v2136 = vunpack.c.l.b16 %v1918
          %v2137 = vunpack.c.h.b16 %v1918
          %v2138 = vunpack.c.l.b16 %v1919
          %v2139 = vunpack.c.h.b16 %v1919
          %v2140 = vunpack.c.l.b16 %v1920
          %v2141 = vunpack.c.h.b16 %v1920
          %v2142 = vunpack.c.l.b16 %v1921
          %v2143 = vunpack.c.h.b16 %v1921
          %v2144 = vunpack.c.l.b16 %v1922
          %v2145 = vunpack.c.h.b16 %v1922
          %v2146 = vunpack.c.l.b16 %v1923
          %v2147 = vunpack.c.h.b16 %v1923
          %v2148 = vpack.c.b16 %v2024, %v2020
          %v2149 = vpack.c.b16 %v2025, %v2021
          %v2150 = vpack.c.b16 %v2026, %v2022
          %v2151 = vpack.c.b16 %v2027, %v2023
          %v2152 = vpack.c.b16 %v2032, %v2028
          %v2153 = vpack.c.b16 %v2033, %v2029
          %v2154 = vpack.c.b16 %v2034, %v2030
          %v2155 = vpack.c.b16 %v2035, %v2031
          %v2156 = vpack.c.b16 %v2040, %v2036
          %v2157 = vpack.c.b16 %v2041, %v2037
          %v2158 = vpack.c.b16 %v2042, %v2038
          %v2159 = vpack.c.b16 %v2043, %v2039
          %v2160 = vpack.c.b16 %v2048, %v2044
          %v2161 = vpack.c.b16 %v2049, %v2045
          %v2162 = vpack.c.b16 %v2050, %v2046
          %v2163 = vpack.c.b16 %v2051, %v2047
          %v2164 = vpack.c.b16 %v2056, %v2052
          %v2165 = vpack.c.b16 %v2057, %v2053
          %v2166 = vpack.c.b16 %v2058, %v2054
          %v2167 = vpack.c.b16 %v2059, %v2055
          %v2168 = vpack.c.b16 %v2064, %v2060
          %v2169 = vpack.c.b16 %v2065, %v2061
          %v2170 = vpack.c.b16 %v2066, %v2062
          %v2171 = vpack.c.b16 %v2067, %v2063
          %v2172 = vpack.c.b16 %v2072, %v2068
          %v2173 = vpack.c.b16 %v2073, %v2069
          %v2174 = vpack.c.b16 %v2074, %v2070
          %v2175 = vpack.c.b16 %v2075, %v2071
          %v2176 = vpack.c.b16 %v2080, %v2076
          %v2177 = vpack.c.b16 %v2081, %v2077
          %v2178 = vpack.c.b16 %v2082, %v2078
          %v2179 = vpack.c.b16 %v2083, %v2079
          %v2180 = vpack.c.b16 %v2088, %v2084
          %v2181 = vpack.c.b16 %v2089, %v2085
          %v2182 = vpack.c.b16 %v2090, %v2086
          %v2183 = vpack.c.b16 %v2091, %v2087
          %v2184 = vpack.c.b16 %v2096, %v2092
          %v2185 = vpack.c.b16 %v2097, %v2093
          %v2186 = vpack.c.b16 %v2098, %v2094
          %v2187 = vpack.c.b16 %v2099, %v2095
          %v2188 = vpack.c.b16 %v2104, %v2100
          %v2189 = vpack.c.b16 %v2105, %v2101
          %v2190 = vpack.c.b16 %v2106, %v2102
          %v2191 = vpack.c.b16 %v2107, %v2103
          %v2192 = vpack.c.b16 %v2112, %v2108
          %v2193 = vpack.c.b16 %v2113, %v2109
          %v2194 = vpack.c.b16 %v2114, %v2110
          %v2195 = vpack.c.b16 %v2115, %v2111
          %v2196 = vpack.c.b16 %v2120, %v2116
          %v2197 = vpack.c.b16 %v2121, %v2117
          %v2198 = vpack.c.b16 %v2122, %v2118
          %v2199 = vpack.c.b16 %v2123, %v2119
          %v2200 = vpack.c.b16 %v2128, %v2124
          %v2201 = vpack.c.b16 %v2129, %v2125
          %v2202 = vpack.c.b16 %v2130, %v2126
          %v2203 = vpack.c.b16 %v2131, %v2127
          %v2204 = vpack.c.b16 %v2136, %v2132
          %v2205 = vpack.c.b16 %v2137, %v2133
          %v2206 = vpack.c.b16 %v2138, %v2134
          %v2207 = vpack.c.b16 %v2139, %v2135
          %v2208 = vpack.c.b16 %v2144, %v2140
          %v2209 = vpack.c.b16 %v2145, %v2141
          %v2210 = vpack.c.b16 %v2146, %v2142
          %v2211 = vpack.c.b16 %v2147, %v2143
          %2276 = vmatprep.subr.bf16.mxu0 0
          %2277 = vmatpush1.bf16.msra.mxu0 %v1924
          %2278 = vmatprep.subr.bf16.mxu0 0
          %2279 = vmatpush1.bf16.msra.mxu0 %v1925
          %2280 = vmatprep.subr.bf16.mxu0 0
          %2281 = vmatpush1.bf16.msra.mxu0 %v1926
          %2282 = vmatprep.subr.bf16.mxu0 0
          %2283 = vmatpush1.bf16.msra.mxu0 %v1927
          %2284 = vmatprep.subr.bf16.mxu0 0
          %2285 = vmatpush1.bf16.msra.mxu0 %v1928
          %2286 = vmatprep.subr.bf16.mxu0 0
          %2287 = vmatpush1.bf16.msra.mxu0 %v1929
          %2288 = vmatprep.subr.bf16.mxu0 0
          %2289 = vmatpush1.bf16.msra.mxu0 %v1930
          %2290 = vmatprep.subr.bf16.mxu0 0
          %2291 = vmatpush1.bf16.msra.mxu0 %v1931
          %2292 = vmatprep.subr.bf16.mxu0 0
          %2293 = vmatpush1.bf16.msra.mxu0 %v1932
          %2294 = vmatprep.subr.bf16.mxu0 0
          %2295 = vmatpush1.bf16.msra.mxu0 %v1933
          %2296 = vmatprep.subr.bf16.mxu0 0
          %2297 = vmatpush1.bf16.msra.mxu0 %v1934
          %2298 = vmatprep.subr.bf16.mxu0 0
          %2299 = vmatpush1.bf16.msra.mxu0 %v1935
          %2300 = vmatprep.subr.bf16.mxu0 0
          %2301 = vmatpush1.bf16.msra.mxu0 %v1936
          %2302 = vmatprep.subr.bf16.mxu0 0
          %2303 = vmatpush1.bf16.msra.mxu0 %v1937
          %2304 = vmatprep.subr.bf16.mxu0 0
          %2305 = vmatpush1.bf16.msra.mxu0 %v1938
          %2306 = vmatprep.subr.bf16.mxu0 0
          %2307 = vmatpush1.bf16.msra.mxu0 %v1939
          %2308 = vmatprep.mubr.bf16.mxu0 %v2149
          %2309 = vmatmul.mubr.bf16.gmra.mrb[0].mxu0 %v2148
          %v2310 = vpop.f32.mrb[0].mxu0
          %v2311 = vadd.f32 0.0, %v2310
          %v2312 = vpop.f32.mrb[0].mxu0
          %v2313 = vpop.f32.mrb[0].mxu0
          %v2314 = vadd.f32 0.0, %v2313
          %v2315 = vpop.f32.mrb[0].mxu0
          %2316 = vmatprep.mubr.bf16.mxu0 %v2153
          %2317 = vmatmul.mubr.bf16.gmra.mrb[0].mxu0 %v2152
          %v2318 = vpop.f32.mrb[0].mxu0
          %v2319 = vadd.f32 0.0, %v2318
          %v2320 = vpop.f32.mrb[0].mxu0
          %v2321 = vpop.f32.mrb[0].mxu0
          %v2322 = vadd.f32 0.0, %v2321
          %v2323 = vpop.f32.mrb[0].mxu0
          %2324 = vmatprep.mubr.bf16.mxu0 %v2157
          %2325 = vmatmul.mubr.bf16.gmra.mrb[0].mxu0 %v2156
          %v2326 = vpop.f32.mrb[0].mxu0
          %v2327 = vadd.f32 0.0, %v2326
          %v2328 = vpop.f32.mrb[0].mxu0
          %v2329 = vpop.f32.mrb[0].mxu0
          %v2330 = vadd.f32 0.0, %v2329
          %v2331 = vpop.f32.mrb[0].mxu0
          %2332 = vmatprep.mubr.bf16.mxu0 %v2161
          %2333 = vmatmul.mubr.bf16.gmra.mrb[0].mxu0 %v2160
          %v2334 = vpop.f32.mrb[0].mxu0
          %v2335 = vadd.f32 0.0, %v2334
          %v2336 = vpop.f32.mrb[0].mxu0
          %v2337 = vpop.f32.mrb[0].mxu0
          %v2338 = vadd.f32 0.0, %v2337
          %v2339 = vpop.f32.mrb[0].mxu0
          %2340 = vmatprep.mubr.bf16.mxu0 %v2165
          %2341 = vmatmul.mubr.bf16.gmra.mrb[0].mxu0 %v2164
          %v2342 = vpop.f32.mrb[0].mxu0
          %v2343 = vadd.f32 0.0, %v2342
          %v2344 = vpop.f32.mrb[0].mxu0
          %v2345 = vpop.f32.mrb[0].mxu0
          %v2346 = vadd.f32 0.0, %v2345
          %v2347 = vpop.f32.mrb[0].mxu0
          %2348 = vmatprep.mubr.bf16.mxu0 %v2169
          %2349 = vmatmul.mubr.bf16.gmra.mrb[0].mxu0 %v2168
          %v2350 = vpop.f32.mrb[0].mxu0
          %v2351 = vadd.f32 0.0, %v2350
          %v2352 = vpop.f32.mrb[0].mxu0
          %v2353 = vpop.f32.mrb[0].mxu0
          %v2354 = vadd.f32 0.0, %v2353
          %v2355 = vpop.f32.mrb[0].mxu0
          %2356 = vmatprep.mubr.bf16.mxu0 %v2173
          %2357 = vmatmul.mubr.bf16.gmra.mrb[0].mxu0 %v2172
          %v2358 = vpop.f32.mrb[0].mxu0
          %v2359 = vadd.f32 0.0, %v2358
          %v2360 = vpop.f32.mrb[0].mxu0
          %v2361 = vpop.f32.mrb[0].mxu0
          %v2362 = vadd.f32 0.0, %v2361
          %v2363 = vpop.f32.mrb[0].mxu0
          %2364 = vmatprep.mubr.bf16.mxu0 %v2177
          %2365 = vmatmul.mubr.bf16.gmra.mrb[0].mxu0 %v2176
          %v2366 = vpop.f32.mrb[0].mxu0
          %v2367 = vadd.f32 0.0, %v2366
          %v2368 = vpop.f32.mrb[0].mxu0
          %v2369 = vpop.f32.mrb[0].mxu0
          %v2370 = vadd.f32 0.0, %v2369
          %v2371 = vpop.f32.mrb[0].mxu0
          %2372 = vmatprep.mubr.bf16.mxu0 %v2181
          %2373 = vmatmul.mubr.bf16.gmra.mrb[0].mxu0 %v2180
          %v2374 = vpop.f32.mrb[0].mxu0
          %v2375 = vadd.f32 0.0, %v2374
          %v2376 = vpop.f32.mrb[0].mxu0
          %v2377 = vpop.f32.mrb[0].mxu0
          %v2378 = vadd.f32 0.0, %v2377
          %v2379 = vpop.f32.mrb[0].mxu0
          %2380 = vmatprep.mubr.bf16.mxu0 %v2185
          %2381 = vmatmul.mubr.bf16.gmra.mrb[0].mxu0 %v2184
          %v2382 = vpop.f32.mrb[0].mxu0
          %v2383 = vadd.f32 0.0, %v2382
          %v2384 = vpop.f32.mrb[0].mxu0
          %v2385 = vpop.f32.mrb[0].mxu0
          %v2386 = vadd.f32 0.0, %v2385
          %v2387 = vpop.f32.mrb[0].mxu0
          %2388 = vmatprep.mubr.bf16.mxu0 %v2189
          %2389 = vmatmul.mubr.bf16.gmra.mrb[0].mxu0 %v2188
          %v2390 = vpop.f32.mrb[0].mxu0
          %v2391 = vadd.f32 0.0, %v2390
          %v2392 = vpop.f32.mrb[0].mxu0
          %v2393 = vpop.f32.mrb[0].mxu0
          %v2394 = vadd.f32 0.0, %v2393
          %v2395 = vpop.f32.mrb[0].mxu0
          %2396 = vmatprep.mubr.bf16.mxu0 %v2193
          %2397 = vmatmul.mubr.bf16.gmra.mrb[0].mxu0 %v2192
          %v2398 = vpop.f32.mrb[0].mxu0
          %v2399 = vadd.f32 0.0, %v2398
          %v2400 = vpop.f32.mrb[0].mxu0
          %v2401 = vpop.f32.mrb[0].mxu0
          %v2402 = vadd.f32 0.0, %v2401
          %v2403 = vpop.f32.mrb[0].mxu0
          %2404 = vmatprep.mubr.bf16.mxu0 %v2197
          %2405 = vmatmul.mubr.bf16.gmra.mrb[0].mxu0 %v2196
          %v2406 = vpop.f32.mrb[0].mxu0
          %v2407 = vadd.f32 0.0, %v2406
          %v2408 = vpop.f32.mrb[0].mxu0
          %v2409 = vpop.f32.mrb[0].mxu0
          %v2410 = vadd.f32 0.0, %v2409
          %v2411 = vpop.f32.mrb[0].mxu0
          %2412 = vmatprep.mubr.bf16.mxu0 %v2201
          %2413 = vmatmul.mubr.bf16.gmra.mrb[0].mxu0 %v2200
          %v2414 = vpop.f32.mrb[0].mxu0
          %v2415 = vadd.f32 0.0, %v2414
          %v2416 = vpop.f32.mrb[0].mxu0
          %v2417 = vpop.f32.mrb[0].mxu0
          %v2418 = vadd.f32 0.0, %v2417
          %v2419 = vpop.f32.mrb[0].mxu0
          %2420 = vmatprep.mubr.bf16.mxu0 %v2205
          %2421 = vmatmul.mubr.bf16.gmra.mrb[0].mxu0 %v2204
          %v2422 = vpop.f32.mrb[0].mxu0
          %v2423 = vadd.f32 0.0, %v2422
          %v2424 = vpop.f32.mrb[0].mxu0
          %v2425 = vpop.f32.mrb[0].mxu0
          %v2426 = vadd.f32 0.0, %v2425
          %v2427 = vpop.f32.mrb[0].mxu0
          %2428 = vmatprep.mubr.bf16.mxu0 %v2209
          %2429 = vmatmul.mubr.bf16.gmra.mrb[0].mxu0 %v2208
          %v2430 = vpop.f32.mrb[0].mxu0
          %v2431 = vadd.f32 0.0, %v2430
          %v2432 = vpop.f32.mrb[0].mxu0
          %v2433 = vpop.f32.mrb[0].mxu0
          %v2434 = vadd.f32 0.0, %v2433
          %v2435 = vpop.f32.mrb[0].mxu0
          %2436 = vdwg.mxu0
          %2437 = vmatprep.subr.bf16.mxu0 0
          %2438 = vmatpush1.bf16.msra.mxu0 %v1940
          %2439 = vmatprep.subr.bf16.mxu0 0
          %2440 = vmatpush1.bf16.msra.mxu0 %v1941
          %2441 = vmatprep.subr.bf16.mxu0 0
          %2442 = vmatpush1.bf16.msra.mxu0 %v1942
          %2443 = vmatprep.subr.bf16.mxu0 0
          %2444 = vmatpush1.bf16.msra.mxu0 %v1943
          %2445 = vmatprep.subr.bf16.mxu0 0
          %2446 = vmatpush1.bf16.msra.mxu0 %v1944
          %2447 = vmatprep.subr.bf16.mxu0 0
          %2448 = vmatpush1.bf16.msra.mxu0 %v1945
          %2449 = vmatprep.subr.bf16.mxu0 0
          %2450 = vmatpush1.bf16.msra.mxu0 %v1946
          %2451 = vmatprep.subr.bf16.mxu0 0
          %2452 = vmatpush1.bf16.msra.mxu0 %v1947
          %2453 = vmatprep.subr.bf16.mxu0 0
          %2454 = vmatpush1.bf16.msra.mxu0 %v1948
          %2455 = vmatprep.subr.bf16.mxu0 0
          %2456 = vmatpush1.bf16.msra.mxu0 %v1949
          %2457 = vmatprep.subr.bf16.mxu0 0
          %2458 = vmatpush1.bf16.msra.mxu0 %v1950
          %2459 = vmatprep.subr.bf16.mxu0 0
          %2460 = vmatpush1.bf16.msra.mxu0 %v1951
          %2461 = vmatprep.subr.bf16.mxu0 0
          %2462 = vmatpush1.bf16.msra.mxu0 %v1952
          %2463 = vmatprep.subr.bf16.mxu0 0
          %2464 = vmatpush1.bf16.msra.mxu0 %v1953
          %2465 = vmatprep.subr.bf16.mxu0 0
          %2466 = vmatpush1.bf16.msra.mxu0 %v1954
          %2467 = vmatprep.subr.bf16.mxu0 0
          %2468 = vmatpush1.bf16.msra.mxu0 %v1955
          %2469 = vmatprep.mubr.bf16.mxu0 %v2151
          %2470 = vmatmul.mubr.bf16.gmra.mrb[0].mxu0 %v2150
          %v2471 = vpop.f32.mrb[0].mxu0
          %v2472 = vadd.f32 %v2311, %v2471
          %v2473 = vpop.f32.mrb[0].mxu0
          %v2474 = vpop.f32.mrb[0].mxu0
          %v2475 = vadd.f32 %v2314, %v2474
          %v2476 = vpop.f32.mrb[0].mxu0
          %2477 = vmatprep.mubr.bf16.mxu0 %v2155
          %2478 = vmatmul.mubr.bf16.gmra.mrb[0].mxu0 %v2154
          %v2479 = vpop.f32.mrb[0].mxu0
          %v2480 = vadd.f32 %v2319, %v2479
          %v2481 = vpop.f32.mrb[0].mxu0
          %v2482 = vpop.f32.mrb[0].mxu0
          %v2483 = vadd.f32 %v2322, %v2482
          %v2484 = vpop.f32.mrb[0].mxu0
          %2485 = vmatprep.mubr.bf16.mxu0 %v2159
          %2486 = vmatmul.mubr.bf16.gmra.mrb[0].mxu0 %v2158
          %v2487 = vpop.f32.mrb[0].mxu0
          %v2488 = vadd.f32 %v2327, %v2487
          %v2489 = vpop.f32.mrb[0].mxu0
          %v2490 = vpop.f32.mrb[0].mxu0
          %v2491 = vadd.f32 %v2330, %v2490
          %v2492 = vpop.f32.mrb[0].mxu0
          %2493 = vmatprep.mubr.bf16.mxu0 %v2163
          %2494 = vmatmul.mubr.bf16.gmra.mrb[0].mxu0 %v2162
          %v2495 = vpop.f32.mrb[0].mxu0
          %v2496 = vadd.f32 %v2335, %v2495
          %v2497 = vpop.f32.mrb[0].mxu0
          %v2498 = vpop.f32.mrb[0].mxu0
          %v2499 = vadd.f32 %v2338, %v2498
          %v2500 = vpop.f32.mrb[0].mxu0
          %2501 = vmatprep.mubr.bf16.mxu0 %v2167
          %2502 = vmatmul.mubr.bf16.gmra.mrb[0].mxu0 %v2166
          %v2503 = vpop.f32.mrb[0].mxu0
          %v2504 = vadd.f32 %v2343, %v2503
          %v2505 = vpop.f32.mrb[0].mxu0
          %v2506 = vpop.f32.mrb[0].mxu0
          %v2507 = vadd.f32 %v2346, %v2506
          %v2508 = vpop.f32.mrb[0].mxu0
          %2509 = vmatprep.mubr.bf16.mxu0 %v2171
          %2510 = vmatmul.mubr.bf16.gmra.mrb[0].mxu0 %v2170
          %v2511 = vpop.f32.mrb[0].mxu0
          %v2512 = vadd.f32 %v2351, %v2511
          %v2513 = vpop.f32.mrb[0].mxu0
          %v2514 = vpop.f32.mrb[0].mxu0
          %v2515 = vadd.f32 %v2354, %v2514
          %v2516 = vpop.f32.mrb[0].mxu0
          %2517 = vmatprep.mubr.bf16.mxu0 %v2175
          %2518 = vmatmul.mubr.bf16.gmra.mrb[0].mxu0 %v2174
          %v2519 = vpop.f32.mrb[0].mxu0
          %v2520 = vadd.f32 %v2359, %v2519
          %v2521 = vpop.f32.mrb[0].mxu0
          %v2522 = vpop.f32.mrb[0].mxu0
          %v2523 = vadd.f32 %v2362, %v2522
          %v2524 = vpop.f32.mrb[0].mxu0
          %2525 = vmatprep.mubr.bf16.mxu0 %v2179
          %2526 = vmatmul.mubr.bf16.gmra.mrb[0].mxu0 %v2178
          %v2527 = vpop.f32.mrb[0].mxu0
          %v2528 = vadd.f32 %v2367, %v2527
          %v2529 = vpop.f32.mrb[0].mxu0
          %v2530 = vpop.f32.mrb[0].mxu0
          %v2531 = vadd.f32 %v2370, %v2530
          %v2532 = vpop.f32.mrb[0].mxu0
          %2533 = vmatprep.mubr.bf16.mxu0 %v2183
          %2534 = vmatmul.mubr.bf16.gmra.mrb[0].mxu0 %v2182
          %v2535 = vpop.f32.mrb[0].mxu0
          %v2536 = vadd.f32 %v2375, %v2535
          %v2537 = vpop.f32.mrb[0].mxu0
          %v2538 = vpop.f32.mrb[0].mxu0
          %v2539 = vadd.f32 %v2378, %v2538
          %v2540 = vpop.f32.mrb[0].mxu0
          %2541 = vmatprep.mubr.bf16.mxu0 %v2187
          %2542 = vmatmul.mubr.bf16.gmra.mrb[0].mxu0 %v2186
          %v2543 = vpop.f32.mrb[0].mxu0
          %v2544 = vadd.f32 %v2383, %v2543
          %v2545 = vpop.f32.mrb[0].mxu0
          %v2546 = vpop.f32.mrb[0].mxu0
          %v2547 = vadd.f32 %v2386, %v2546
          %v2548 = vpop.f32.mrb[0].mxu0
          %2549 = vmatprep.mubr.bf16.mxu0 %v2191
          %2550 = vmatmul.mubr.bf16.gmra.mrb[0].mxu0 %v2190
          %v2551 = vpop.f32.mrb[0].mxu0
          %v2552 = vadd.f32 %v2391, %v2551
          %v2553 = vpop.f32.mrb[0].mxu0
          %v2554 = vpop.f32.mrb[0].mxu0
          %v2555 = vadd.f32 %v2394, %v2554
          %v2556 = vpop.f32.mrb[0].mxu0
          %2557 = vmatprep.mubr.bf16.mxu0 %v2195
          %2558 = vmatmul.mubr.bf16.gmra.mrb[0].mxu0 %v2194
          %v2559 = vpop.f32.mrb[0].mxu0
          %v2560 = vadd.f32 %v2399, %v2559
          %v2561 = vpop.f32.mrb[0].mxu0
          %v2562 = vpop.f32.mrb[0].mxu0
          %v2563 = vadd.f32 %v2402, %v2562
          %v2564 = vpop.f32.mrb[0].mxu0
          %2565 = vmatprep.mubr.bf16.mxu0 %v2199
          %2566 = vmatmul.mubr.bf16.gmra.mrb[0].mxu0 %v2198
          %v2567 = vpop.f32.mrb[0].mxu0
          %v2568 = vadd.f32 %v2407, %v2567
          %v2569 = vpop.f32.mrb[0].mxu0
          %v2570 = vpop.f32.mrb[0].mxu0
          %v2571 = vadd.f32 %v2410, %v2570
          %v2572 = vpop.f32.mrb[0].mxu0
          %2573 = vmatprep.mubr.bf16.mxu0 %v2203
          %2574 = vmatmul.mubr.bf16.gmra.mrb[0].mxu0 %v2202
          %v2575 = vpop.f32.mrb[0].mxu0
          %v2576 = vadd.f32 %v2415, %v2575
          %v2577 = vpop.f32.mrb[0].mxu0
          %v2578 = vpop.f32.mrb[0].mxu0
          %v2579 = vadd.f32 %v2418, %v2578
          %v2580 = vpop.f32.mrb[0].mxu0
          %2581 = vmatprep.mubr.bf16.mxu0 %v2207
          %2582 = vmatmul.mubr.bf16.gmra.mrb[0].mxu0 %v2206
          %v2583 = vpop.f32.mrb[0].mxu0
          %v2584 = vadd.f32 %v2423, %v2583
          %v2585 = vpop.f32.mrb[0].mxu0
          %v2586 = vpop.f32.mrb[0].mxu0
          %v2587 = vadd.f32 %v2426, %v2586
          %v2588 = vpop.f32.mrb[0].mxu0
          %2589 = vmatprep.mubr.bf16.mxu0 %v2211
          %2590 = vmatmul.mubr.bf16.gmra.mrb[0].mxu0 %v2210
          %v2591 = vpop.f32.mrb[0].mxu0
          %v2592 = vadd.f32 %v2431, %v2591
          %v2593 = vpop.f32.mrb[0].mxu0
          %v2594 = vpop.f32.mrb[0].mxu0
          %v2595 = vadd.f32 %v2434, %v2594
          %v2596 = vpop.f32.mrb[0].mxu0
          %2597 = vdwg.mxu0
          %v2598 = vpack.c.bf16 %v2475, %v2472
          %v2599 = vpack.c.bf16 %v2483, %v2480
          %v2600 = vpack.c.bf16 %v2491, %v2488
          %v2601 = vpack.c.bf16 %v2499, %v2496
          %v2602 = vpack.c.bf16 %v2507, %v2504
          %v2603 = vpack.c.bf16 %v2515, %v2512
          %v2604 = vpack.c.bf16 %v2523, %v2520
          %v2605 = vpack.c.bf16 %v2531, %v2528
          %v2606 = vpack.c.bf16 %v2539, %v2536
          %v2607 = vpack.c.bf16 %v2547, %v2544
          %v2608 = vpack.c.bf16 %v2555, %v2552
          %v2609 = vpack.c.bf16 %v2563, %v2560
          %v2610 = vpack.c.bf16 %v2571, %v2568
          %v2611 = vpack.c.bf16 %v2579, %v2576
          %v2612 = vpack.c.bf16 %v2587, %v2584
          %v2613 = vpack.c.bf16 %v2595, %v2592
          %s2614 = scalar_lea.vmem [#allocation4], %s326
          %v2615 = vld [vmem:[%s2614] sm:$0xff]
          %v2616 = vld [vmem:[%s2614 + $0x8] sm:$0xff]
          %v2617 = vld [vmem:[%s2614 + $0x10] sm:$0xff]
          %v2618 = vld [vmem:[%s2614 + $0x18] sm:$0xff]
          %v2619 = vld [vmem:[%s2614 + $0x20] sm:$0xff]
          %v2620 = vld [vmem:[%s2614 + $0x28] sm:$0xff]
          %v2621 = vld [vmem:[%s2614 + $0x30] sm:$0xff]
          %v2622 = vld [vmem:[%s2614 + $0x38] sm:$0xff]
          %v2623 = vld [vmem:[%s2614 + $0x40] sm:$0xff]
          %v2624 = vld [vmem:[%s2614 + $0x48] sm:$0xff]
          %v2625 = vld [vmem:[%s2614 + $0x50] sm:$0xff]
          %v2626 = vld [vmem:[%s2614 + $0x58] sm:$0xff]
          %v2627 = vld [vmem:[%s2614 + $0x60] sm:$0xff]
          %v2628 = vld [vmem:[%s2614 + $0x68] sm:$0xff]
          %v2629 = vld [vmem:[%s2614 + $0x70] sm:$0xff]
          %v2630 = vld [vmem:[%s2614 + $0x78] sm:$0xff]
          %v2631 = vld [vmem:[%s2614 + $0x80] sm:$0xff]
          %v2632 = vld [vmem:[%s2614 + $0x88] sm:$0xff]
          %v2633 = vld [vmem:[%s2614 + $0x90] sm:$0xff]
          %v2634 = vld [vmem:[%s2614 + $0x98] sm:$0xff]
          %v2635 = vld [vmem:[%s2614 + $0xa0] sm:$0xff]
          %v2636 = vld [vmem:[%s2614 + $0xa8] sm:$0xff]
          %v2637 = vld [vmem:[%s2614 + $0xb0] sm:$0xff]
          %v2638 = vld [vmem:[%s2614 + $0xb8] sm:$0xff]
          %v2639 = vld [vmem:[%s2614 + $0xc0] sm:$0xff]
          %v2640 = vld [vmem:[%s2614 + $0xc8] sm:$0xff]
          %v2641 = vld [vmem:[%s2614 + $0xd0] sm:$0xff]
          %v2642 = vld [vmem:[%s2614 + $0xd8] sm:$0xff]
          %v2643 = vld [vmem:[%s2614 + $0xe0] sm:$0xff]
          %v2644 = vld [vmem:[%s2614 + $0xe8] sm:$0xff]
          %v2645 = vld [vmem:[%s2614 + $0xf0] sm:$0xff]
          %v2646 = vld [vmem:[%s2614 + $0xf8] sm:$0xff]
          %v2647 = vld [vmem:[%s283] sm:$0xf]
          %v2648 = vld [vmem:[%s283 + $0x4] sm:$0xf]
          %v2649 = vld [vmem:[%s283 + $0x8] sm:$0xf]
          %v2650 = vld [vmem:[%s283 + $0xc] sm:$0xf]
          %v2651 = vld [vmem:[%s283 + $0x10] sm:$0xf]
          %v2652 = vld [vmem:[%s283 + $0x14] sm:$0xf]
          %v2653 = vld [vmem:[%s283 + $0x18] sm:$0xf]
          %v2654 = vld [vmem:[%s283 + $0x1c] sm:$0xf]
          %v2655 = vld [vmem:[%s283 + $0x20] sm:$0xf]
          %v2656 = vld [vmem:[%s283 + $0x24] sm:$0xf]
          %v2657 = vld [vmem:[%s283 + $0x28] sm:$0xf]
          %v2658 = vld [vmem:[%s283 + $0x2c] sm:$0xf]
          %v2659 = vld [vmem:[%s283 + $0x30] sm:$0xf]
          %v2660 = vld [vmem:[%s283 + $0x34] sm:$0xf]
          %v2661 = vld [vmem:[%s283 + $0x38] sm:$0xf]
          %v2662 = vld [vmem:[%s283 + $0x3c] sm:$0xf]
          %v2679 = vunpack.c.l.b16 %v2647
          %v2680 = vunpack.c.l.b16 %v2648
          %v2681 = vunpack.c.l.b16 %v2649
          %v2682 = vunpack.c.l.b16 %v2650
          %v2683 = vunpack.c.l.b16 %v2651
          %v2684 = vunpack.c.l.b16 %v2652
          %v2685 = vunpack.c.l.b16 %v2653
          %v2686 = vunpack.c.l.b16 %v2654
          %v2687 = vunpack.c.l.b16 %v2655
          %v2688 = vunpack.c.l.b16 %v2656
          %v2689 = vunpack.c.l.b16 %v2657
          %v2690 = vunpack.c.l.b16 %v2658
          %v2691 = vunpack.c.l.b16 %v2659
          %v2692 = vunpack.c.l.b16 %v2660
          %v2693 = vunpack.c.l.b16 %v2661
          %v2694 = vunpack.c.l.b16 %v2662
          %v2695 = vpack.c.b16 %v2680, %v2679
          %v2696 = vpack.c.b16 %v2682, %v2681
          %v2697 = vpack.c.b16 %v2684, %v2683
          %v2698 = vpack.c.b16 %v2686, %v2685
          %v2699 = vpack.c.b16 %v2688, %v2687
          %v2700 = vpack.c.b16 %v2690, %v2689
          %v2701 = vpack.c.b16 %v2692, %v2691
          %v2702 = vpack.c.b16 %v2694, %v2693
          %2711 = vmatprep.subr.bf16.mxu0 0
          %2712 = vmatpush1.bf16.msra.mxu0 %v2695
          %2713 = vmatprep.subr.bf16.mxu0 0
          %2714 = vmatpush1.bf16.msra.mxu0 %v2696
          %2715 = vmatprep.subr.bf16.mxu0 0
          %2716 = vmatpush1.bf16.msra.mxu0 %v2697
          %2717 = vmatprep.subr.bf16.mxu0 0
          %2718 = vmatpush1.bf16.msra.mxu0 %v2698
          %2719 = vmatprep.subr.bf16.mxu0 0
          %2720 = vmatpush1.bf16.msra.mxu0 %v2699
          %2721 = vmatprep.subr.bf16.mxu0 0
          %2722 = vmatpush1.bf16.msra.mxu0 %v2700
          %2723 = vmatprep.subr.bf16.mxu0 0
          %2724 = vmatpush1.bf16.msra.mxu0 %v2701
          %2725 = vmatprep.subr.bf16.mxu0 0
          %2726 = vmatpush1.bf16.msra.mxu0 %v2702
          %2727 = vmatprep.subr.bf16.mxu0 0
          %2728 = vmatpush1.bf16.msra.mxu0 0
          %2729 = vmatprep.subr.bf16.mxu0 0
          %2730 = vmatpush1.bf16.msra.mxu0 0
          %2731 = vmatprep.subr.bf16.mxu0 0
          %2732 = vmatpush1.bf16.msra.mxu0 0
          %2733 = vmatprep.subr.bf16.mxu0 0
          %2734 = vmatpush1.bf16.msra.mxu0 0
          %2735 = vmatprep.subr.bf16.mxu0 0
          %2736 = vmatpush1.bf16.msra.mxu0 0
          %2737 = vmatprep.subr.bf16.mxu0 0
          %2738 = vmatpush1.bf16.msra.mxu0 0
          %2739 = vmatprep.subr.bf16.mxu0 0
          %2740 = vmatpush1.bf16.msra.mxu0 0
          %2741 = vmatprep.subr.bf16.mxu0 0
          %2742 = vmatpush1.bf16.msra.mxu0 0
          %2743 = vmatprep.mubr.bf16.mxu0 0
          %2744 = vmatmul.mubr.bf16.gmra.mrb[0].mxu0 %v2598
          %v2745 = vpop.f32.mrb[0].mxu0
          %v2746 = vadd.f32 0.0, %v2745
          %v2747 = vpop.f32.mrb[0].mxu0
          %v2748 = vpop.f32.mrb[0].mxu0
          %v2749 = vadd.f32 0.0, %v2748
          %v2750 = vpop.f32.mrb[0].mxu0
          %2751 = vmatprep.mubr.bf16.mxu0 0
          %2752 = vmatmul.mubr.bf16.gmra.mrb[0].mxu0 %v2599
          %v2753 = vpop.f32.mrb[0].mxu0
          %v2754 = vadd.f32 0.0, %v2753
          %v2755 = vpop.f32.mrb[0].mxu0
          %v2756 = vpop.f32.mrb[0].mxu0
          %v2757 = vadd.f32 0.0, %v2756
          %v2758 = vpop.f32.mrb[0].mxu0
          %2759 = vmatprep.mubr.bf16.mxu0 0
          %2760 = vmatmul.mubr.bf16.gmra.mrb[0].mxu0 %v2600
          %v2761 = vpop.f32.mrb[0].mxu0
          %v2762 = vadd.f32 0.0, %v2761
          %v2763 = vpop.f32.mrb[0].mxu0
          %v2764 = vpop.f32.mrb[0].mxu0
          %v2765 = vadd.f32 0.0, %v2764
          %v2766 = vpop.f32.mrb[0].mxu0
          %2767 = vmatprep.mubr.bf16.mxu0 0
          %2768 = vmatmul.mubr.bf16.gmra.mrb[0].mxu0 %v2601
          %v2769 = vpop.f32.mrb[0].mxu0
          %v2770 = vadd.f32 0.0, %v2769
          %v2771 = vpop.f32.mrb[0].mxu0
          %v2772 = vpop.f32.mrb[0].mxu0
          %v2773 = vadd.f32 0.0, %v2772
          %v2774 = vpop.f32.mrb[0].mxu0
          %2775 = vmatprep.mubr.bf16.mxu0 0
          %2776 = vmatmul.mubr.bf16.gmra.mrb[0].mxu0 %v2602
          %v2777 = vpop.f32.mrb[0].mxu0
          %v2778 = vadd.f32 0.0, %v2777
          %v2779 = vpop.f32.mrb[0].mxu0
          %v2780 = vpop.f32.mrb[0].mxu0
          %v2781 = vadd.f32 0.0, %v2780
          %v2782 = vpop.f32.mrb[0].mxu0
          %2783 = vmatprep.mubr.bf16.mxu0 0
          %2784 = vmatmul.mubr.bf16.gmra.mrb[0].mxu0 %v2603
          %v2785 = vpop.f32.mrb[0].mxu0
          %v2786 = vadd.f32 0.0, %v2785
          %v2787 = vpop.f32.mrb[0].mxu0
          %v2788 = vpop.f32.mrb[0].mxu0
          %v2789 = vadd.f32 0.0, %v2788
          %v2790 = vpop.f32.mrb[0].mxu0
          %2791 = vmatprep.mubr.bf16.mxu0 0
          %2792 = vmatmul.mubr.bf16.gmra.mrb[0].mxu0 %v2604
          %v2793 = vpop.f32.mrb[0].mxu0
          %v2794 = vadd.f32 0.0, %v2793
          %v2795 = vpop.f32.mrb[0].mxu0
          %v2796 = vpop.f32.mrb[0].mxu0
          %v2797 = vadd.f32 0.0, %v2796
          %v2798 = vpop.f32.mrb[0].mxu0
          %2799 = vmatprep.mubr.bf16.mxu0 0
          %2800 = vmatmul.mubr.bf16.gmra.mrb[0].mxu0 %v2605
          %v2801 = vpop.f32.mrb[0].mxu0
          %v2802 = vadd.f32 0.0, %v2801
          %v2803 = vpop.f32.mrb[0].mxu0
          %v2804 = vpop.f32.mrb[0].mxu0
          %v2805 = vadd.f32 0.0, %v2804
          %v2806 = vpop.f32.mrb[0].mxu0
          %2807 = vmatprep.mubr.bf16.mxu0 0
          %2808 = vmatmul.mubr.bf16.gmra.mrb[0].mxu0 %v2606
          %v2809 = vpop.f32.mrb[0].mxu0
          %v2810 = vadd.f32 0.0, %v2809
          %v2811 = vpop.f32.mrb[0].mxu0
          %v2812 = vpop.f32.mrb[0].mxu0
          %v2813 = vadd.f32 0.0, %v2812
          %v2814 = vpop.f32.mrb[0].mxu0
          %2815 = vmatprep.mubr.bf16.mxu0 0
          %2816 = vmatmul.mubr.bf16.gmra.mrb[0].mxu0 %v2607
          %v2817 = vpop.f32.mrb[0].mxu0
          %v2818 = vadd.f32 0.0, %v2817
          %v2819 = vpop.f32.mrb[0].mxu0
          %v2820 = vpop.f32.mrb[0].mxu0
          %v2821 = vadd.f32 0.0, %v2820
          %v2822 = vpop.f32.mrb[0].mxu0
          %2823 = vmatprep.mubr.bf16.mxu0 0
          %2824 = vmatmul.mubr.bf16.gmra.mrb[0].mxu0 %v2608
          %v2825 = vpop.f32.mrb[0].mxu0
          %v2826 = vadd.f32 0.0, %v2825
          %v2827 = vpop.f32.mrb[0].mxu0
          %v2828 = vpop.f32.mrb[0].mxu0
          %v2829 = vadd.f32 0.0, %v2828
          %v2830 = vpop.f32.mrb[0].mxu0
          %2831 = vmatprep.mubr.bf16.mxu0 0
          %2832 = vmatmul.mubr.bf16.gmra.mrb[0].mxu0 %v2609
          %v2833 = vpop.f32.mrb[0].mxu0
          %v2834 = vadd.f32 0.0, %v2833
          %v2835 = vpop.f32.mrb[0].mxu0
          %v2836 = vpop.f32.mrb[0].mxu0
          %v2837 = vadd.f32 0.0, %v2836
          %v2838 = vpop.f32.mrb[0].mxu0
          %2839 = vmatprep.mubr.bf16.mxu0 0
          %2840 = vmatmul.mubr.bf16.gmra.mrb[0].mxu0 %v2610
          %v2841 = vpop.f32.mrb[0].mxu0
          %v2842 = vadd.f32 0.0, %v2841
          %v2843 = vpop.f32.mrb[0].mxu0
          %v2844 = vpop.f32.mrb[0].mxu0
          %v2845 = vadd.f32 0.0, %v2844
          %v2846 = vpop.f32.mrb[0].mxu0
          %2847 = vmatprep.mubr.bf16.mxu0 0
          %2848 = vmatmul.mubr.bf16.gmra.mrb[0].mxu0 %v2611
          %v2849 = vpop.f32.mrb[0].mxu0
          %v2850 = vadd.f32 0.0, %v2849
          %v2851 = vpop.f32.mrb[0].mxu0
          %v2852 = vpop.f32.mrb[0].mxu0
          %v2853 = vadd.f32 0.0, %v2852
          %v2854 = vpop.f32.mrb[0].mxu0
          %2855 = vmatprep.mubr.bf16.mxu0 0
          %2856 = vmatmul.mubr.bf16.gmra.mrb[0].mxu0 %v2612
          %v2857 = vpop.f32.mrb[0].mxu0
          %v2858 = vadd.f32 0.0, %v2857
          %v2859 = vpop.f32.mrb[0].mxu0
          %v2860 = vpop.f32.mrb[0].mxu0
          %v2861 = vadd.f32 0.0, %v2860
          %v2862 = vpop.f32.mrb[0].mxu0
          %2863 = vmatprep.mubr.bf16.mxu0 0
          %2864 = vmatmul.mubr.bf16.gmra.mrb[0].mxu0 %v2613
          %v2865 = vpop.f32.mrb[0].mxu0
          %v2866 = vadd.f32 0.0, %v2865
          %v2867 = vpop.f32.mrb[0].mxu0
          %v2868 = vpop.f32.mrb[0].mxu0
          %v2869 = vadd.f32 0.0, %v2868
          %v2870 = vpop.f32.mrb[0].mxu0
          %2871 = vdwg.mxu0
          %v2872 = vadd.f32 %v2615, %v2746
          %v2873 = vadd.f32 %v2616, %v2749
          %v2874 = vadd.f32 %v2617, %v2754
          %v2875 = vadd.f32 %v2618, %v2757
          %v2876 = vadd.f32 %v2619, %v2762
          %v2877 = vadd.f32 %v2620, %v2765
          %v2878 = vadd.f32 %v2621, %v2770
          %v2879 = vadd.f32 %v2622, %v2773
          %v2880 = vadd.f32 %v2623, %v2778
          %v2881 = vadd.f32 %v2624, %v2781
          %v2882 = vadd.f32 %v2625, %v2786
          %v2883 = vadd.f32 %v2626, %v2789
          %v2884 = vadd.f32 %v2627, %v2794
          %v2885 = vadd.f32 %v2628, %v2797
          %v2886 = vadd.f32 %v2629, %v2802
          %v2887 = vadd.f32 %v2630, %v2805
          %v2888 = vadd.f32 %v2631, %v2810
          %v2889 = vadd.f32 %v2632, %v2813
          %v2890 = vadd.f32 %v2633, %v2818
          %v2891 = vadd.f32 %v2634, %v2821
          %v2892 = vadd.f32 %v2635, %v2826
          %v2893 = vadd.f32 %v2636, %v2829
          %v2894 = vadd.f32 %v2637, %v2834
          %v2895 = vadd.f32 %v2638, %v2837
          %v2896 = vadd.f32 %v2639, %v2842
          %v2897 = vadd.f32 %v2640, %v2845
          %v2898 = vadd.f32 %v2641, %v2850
          %v2899 = vadd.f32 %v2642, %v2853
          %v2900 = vadd.f32 %v2643, %v2858
          %v2901 = vadd.f32 %v2644, %v2861
          %v2902 = vadd.f32 %v2645, %v2866
          %v2903 = vadd.f32 %v2646, %v2869
          %2904 = vst [vmem:[%s2614] sm:$0xff] %v2872
          %2905 = vst [vmem:[%s2614 + $0x8] sm:$0xff] %v2873
          %2906 = vst [vmem:[%s2614 + $0x10] sm:$0xff] %v2874
          %2907 = vst [vmem:[%s2614 + $0x18] sm:$0xff] %v2875
          %2908 = vst [vmem:[%s2614 + $0x20] sm:$0xff] %v2876
          %2909 = vst [vmem:[%s2614 + $0x28] sm:$0xff] %v2877
          %2910 = vst [vmem:[%s2614 + $0x30] sm:$0xff] %v2878
          %2911 = vst [vmem:[%s2614 + $0x38] sm:$0xff] %v2879
          %2912 = vst [vmem:[%s2614 + $0x40] sm:$0xff] %v2880
          %2913 = vst [vmem:[%s2614 + $0x48] sm:$0xff] %v2881
          %2914 = vst [vmem:[%s2614 + $0x50] sm:$0xff] %v2882
          %2915 = vst [vmem:[%s2614 + $0x58] sm:$0xff] %v2883
          %2916 = vst [vmem:[%s2614 + $0x60] sm:$0xff] %v2884
          %2917 = vst [vmem:[%s2614 + $0x68] sm:$0xff] %v2885
          %2918 = vst [vmem:[%s2614 + $0x70] sm:$0xff] %v2886
          %2919 = vst [vmem:[%s2614 + $0x78] sm:$0xff] %v2887
          %2920 = vst [vmem:[%s2614 + $0x80] sm:$0xff] %v2888
          %2921 = vst [vmem:[%s2614 + $0x88] sm:$0xff] %v2889
          %2922 = vst [vmem:[%s2614 + $0x90] sm:$0xff] %v2890
          %2923 = vst [vmem:[%s2614 + $0x98] sm:$0xff] %v2891
          %2924 = vst [vmem:[%s2614 + $0xa0] sm:$0xff] %v2892
          %2925 = vst [vmem:[%s2614 + $0xa8] sm:$0xff] %v2893
          %2926 = vst [vmem:[%s2614 + $0xb0] sm:$0xff] %v2894
          %2927 = vst [vmem:[%s2614 + $0xb8] sm:$0xff] %v2895
          %2928 = vst [vmem:[%s2614 + $0xc0] sm:$0xff] %v2896
          %2929 = vst [vmem:[%s2614 + $0xc8] sm:$0xff] %v2897
          %2930 = vst [vmem:[%s2614 + $0xd0] sm:$0xff] %v2898
          %2931 = vst [vmem:[%s2614 + $0xd8] sm:$0xff] %v2899
          %2932 = vst [vmem:[%s2614 + $0xe0] sm:$0xff] %v2900
          %2933 = vst [vmem:[%s2614 + $0xe8] sm:$0xff] %v2901
          %2934 = vst [vmem:[%s2614 + $0xf0] sm:$0xff] %v2902
          %2935 = vst [vmem:[%s2614 + $0xf8] sm:$0xff] %v2903
          %p2936 = scmp.lt.s32.totalorder %s28, 2
          // Predicated region
          $region65: #{tpu_custom_call.1} parent=63 // pred_check
            %p2937 = pneg %p2936
          $region66: #{tpu_custom_call.1} parent=63 // pred_check_branch
            %2939 = sbr.rel (%p2937) target = $region68
          $region67: #{tpu_custom_call.1} parent=63 // pred_region
            %s2940 = sshra.s32 %s326, 4
            %s2941 = sand.u32 %s326, 15
            %s2942 = smul.addr %s2940, 8
            %s2943 = scalar_lea.vmem [#allocation2], %s2942
            %2944 = vst [vmem:[%s2943] sm:$0xff] %v2598
            %2945 = vst [vmem:[%s2943 + $0x8] sm:$0xff] %v2599
            %2946 = vst [vmem:[%s2943 + $0x10] sm:$0xff] %v2600
            %2947 = vst [vmem:[%s2943 + $0x18] sm:$0xff] %v2601
            %2948 = vst [vmem:[%s2943 + $0x20] sm:$0xff] %v2602
            %2949 = vst [vmem:[%s2943 + $0x28] sm:$0xff] %v2603
            %2950 = vst [vmem:[%s2943 + $0x30] sm:$0xff] %v2604
            %2951 = vst [vmem:[%s2943 + $0x38] sm:$0xff] %v2605
            %2952 = vst [vmem:[%s2943 + $0x40] sm:$0xff] %v2606
            %2953 = vst [vmem:[%s2943 + $0x48] sm:$0xff] %v2607
            %2954 = vst [vmem:[%s2943 + $0x50] sm:$0xff] %v2608
            %2955 = vst [vmem:[%s2943 + $0x58] sm:$0xff] %v2609
            %2956 = vst [vmem:[%s2943 + $0x60] sm:$0xff] %v2610
            %2957 = vst [vmem:[%s2943 + $0x68] sm:$0xff] %v2611
            %2958 = vst [vmem:[%s2943 + $0x70] sm:$0xff] %v2612
            %2959 = vst [vmem:[%s2943 + $0x78] sm:$0xff] %v2613
          $region68: #{tpu_custom_call.1} parent=63 // pred_fallthru
            _
        $region64: #{tpu_custom_call.1} parent=35 // pred_fallthru
          _
        %p2960 = scmp.eq.s32.totalorder %s28, 2
        // Predicated region
        $region69: #{tpu_custom_call.1} parent=35 // pred_check
          %p2961 = pneg %p2960
        $region70: #{tpu_custom_call.1} parent=35 // pred_check_branch
          %2963 = sbr.rel (%p2961) target = $region72
        $region71: #{tpu_custom_call.1} parent=35 // pred_region
          %s2964 = scalar_lea.vmem [#allocation4], %s326
          %v2965 = vld [vmem:[%s2964] sm:$0xff]
          %v2966 = vld [vmem:[%s2964 + $0x8] sm:$0xff]
          %v2967 = vld [vmem:[%s2964 + $0x10] sm:$0xff]
          %v2968 = vld [vmem:[%s2964 + $0x18] sm:$0xff]
          %v2969 = vld [vmem:[%s2964 + $0x20] sm:$0xff]
          %v2970 = vld [vmem:[%s2964 + $0x28] sm:$0xff]
          %v2971 = vld [vmem:[%s2964 + $0x30] sm:$0xff]
          %v2972 = vld [vmem:[%s2964 + $0x38] sm:$0xff]
          %v2973 = vld [vmem:[%s2964 + $0x40] sm:$0xff]
          %v2974 = vld [vmem:[%s2964 + $0x48] sm:$0xff]
          %v2975 = vld [vmem:[%s2964 + $0x50] sm:$0xff]
          %v2976 = vld [vmem:[%s2964 + $0x58] sm:$0xff]
          %v2977 = vld [vmem:[%s2964 + $0x60] sm:$0xff]
          %v2978 = vld [vmem:[%s2964 + $0x68] sm:$0xff]
          %v2979 = vld [vmem:[%s2964 + $0x70] sm:$0xff]
          %v2980 = vld [vmem:[%s2964 + $0x78] sm:$0xff]
          %v2981 = vld [vmem:[%s2964 + $0x80] sm:$0xff]
          %v2982 = vld [vmem:[%s2964 + $0x88] sm:$0xff]
          %v2983 = vld [vmem:[%s2964 + $0x90] sm:$0xff]
          %v2984 = vld [vmem:[%s2964 + $0x98] sm:$0xff]
          %v2985 = vld [vmem:[%s2964 + $0xa0] sm:$0xff]
          %v2986 = vld [vmem:[%s2964 + $0xa8] sm:$0xff]
          %v2987 = vld [vmem:[%s2964 + $0xb0] sm:$0xff]
          %v2988 = vld [vmem:[%s2964 + $0xb8] sm:$0xff]
          %v2989 = vld [vmem:[%s2964 + $0xc0] sm:$0xff]
          %v2990 = vld [vmem:[%s2964 + $0xc8] sm:$0xff]
          %v2991 = vld [vmem:[%s2964 + $0xd0] sm:$0xff]
          %v2992 = vld [vmem:[%s2964 + $0xd8] sm:$0xff]
          %v2993 = vld [vmem:[%s2964 + $0xe0] sm:$0xff]
          %v2994 = vld [vmem:[%s2964 + $0xe8] sm:$0xff]
          %v2995 = vld [vmem:[%s2964 + $0xf0] sm:$0xff]
          %v2996 = vld [vmem:[%s2964 + $0xf8] sm:$0xff]
          %v2997 = vld [vmem:[%s3] sm:$0x1]
          %v2999 = vlaneseq
          %v3000 = vshrl.u32 %v2999, 7
          %v3001 = vsub.s32 0, %v3000
          %v3002 = vrot.slane %v2997, %v3001
          %v3004 = vadd.f32 %v2965, %v3002
          %v3005 = vadd.f32 %v2966, %v3002
          %v3006 = vadd.f32 %v2967, %v3002
          %v3007 = vadd.f32 %v2968, %v3002
          %v3008 = vadd.f32 %v2969, %v3002
          %v3009 = vadd.f32 %v2970, %v3002
          %v3010 = vadd.f32 %v2971, %v3002
          %v3011 = vadd.f32 %v2972, %v3002
          %v3012 = vadd.f32 %v2973, %v3002
          %v3013 = vadd.f32 %v2974, %v3002
          %v3014 = vadd.f32 %v2975, %v3002
          %v3015 = vadd.f32 %v2976, %v3002
          %v3016 = vadd.f32 %v2977, %v3002
          %v3017 = vadd.f32 %v2978, %v3002
          %v3018 = vadd.f32 %v2979, %v3002
          %v3019 = vadd.f32 %v2980, %v3002
          %v3020 = vadd.f32 %v2981, %v3002
          %v3021 = vadd.f32 %v2982, %v3002
          %v3022 = vadd.f32 %v2983, %v3002
          %v3023 = vadd.f32 %v2984, %v3002
          %v3024 = vadd.f32 %v2985, %v3002
          %v3025 = vadd.f32 %v2986, %v3002
          %v3026 = vadd.f32 %v2987, %v3002
          %v3027 = vadd.f32 %v2988, %v3002
          %v3028 = vadd.f32 %v2989, %v3002
          %v3029 = vadd.f32 %v2990, %v3002
          %v3030 = vadd.f32 %v2991, %v3002
          %v3031 = vadd.f32 %v2992, %v3002
          %v3032 = vadd.f32 %v2993, %v3002
          %v3033 = vadd.f32 %v2994, %v3002
          %v3034 = vadd.f32 %v2995, %v3002
          %v3035 = vadd.f32 %v2996, %v3002
          %v3036 = vtanh.pop %v3004
          %v3037 = vtanh.pop %v3005
          %v3038 = vtanh.pop %v3006
          %v3039 = vtanh.pop %v3007
          %v3040 = vtanh.pop %v3008
          %v3041 = vtanh.pop %v3009
          %v3042 = vtanh.pop %v3010
          %v3043 = vtanh.pop %v3011
          %v3044 = vtanh.pop %v3012
          %v3045 = vtanh.pop %v3013
          %v3046 = vtanh.pop %v3014
          %v3047 = vtanh.pop %v3015
          %v3048 = vtanh.pop %v3016
          %v3049 = vtanh.pop %v3017
          %v3050 = vtanh.pop %v3018
          %v3051 = vtanh.pop %v3019
          %v3052 = vtanh.pop %v3020
          %v3053 = vtanh.pop %v3021
          %v3054 = vtanh.pop %v3022
          %v3055 = vtanh.pop %v3023
          %v3056 = vtanh.pop %v3024
          %v3057 = vtanh.pop %v3025
          %v3058 = vtanh.pop %v3026
          %v3059 = vtanh.pop %v3027
          %v3060 = vtanh.pop %v3028
          %v3061 = vtanh.pop %v3029
          %v3062 = vtanh.pop %v3030
          %v3063 = vtanh.pop %v3031
          %v3064 = vtanh.pop %v3032
          %v3065 = vtanh.pop %v3033
          %v3066 = vtanh.pop %v3034
          %v3067 = vtanh.pop %v3035
          %v3068 = vpack.c.bf16 %v3037, %v3036
          %v3069 = vpack.c.bf16 %v3039, %v3038
          %v3070 = vpack.c.bf16 %v3041, %v3040
          %v3071 = vpack.c.bf16 %v3043, %v3042
          %v3072 = vpack.c.bf16 %v3045, %v3044
          %v3073 = vpack.c.bf16 %v3047, %v3046
          %v3074 = vpack.c.bf16 %v3049, %v3048
          %v3075 = vpack.c.bf16 %v3051, %v3050
          %v3076 = vpack.c.bf16 %v3053, %v3052
          %v3077 = vpack.c.bf16 %v3055, %v3054
          %v3078 = vpack.c.bf16 %v3057, %v3056
          %v3079 = vpack.c.bf16 %v3059, %v3058
          %v3080 = vpack.c.bf16 %v3061, %v3060
          %v3081 = vpack.c.bf16 %v3063, %v3062
          %v3082 = vpack.c.bf16 %v3065, %v3064
          %v3083 = vpack.c.bf16 %v3067, %v3066
          %v3100 = vunpack.c.l.b16 %v3068
          %v3101 = vunpack.c.h.b16 %v3068
          %v3102 = vunpack.c.l.b16 %v3069
          %v3103 = vunpack.c.h.b16 %v3069
          %v3104 = vunpack.c.l.b16 %v3070
          %v3105 = vunpack.c.h.b16 %v3070
          %v3106 = vunpack.c.l.b16 %v3071
          %v3107 = vunpack.c.h.b16 %v3071
          %v3108 = vunpack.c.l.b16 %v3072
          %v3109 = vunpack.c.h.b16 %v3072
          %v3110 = vunpack.c.l.b16 %v3073
          %v3111 = vunpack.c.h.b16 %v3073
          %v3112 = vunpack.c.l.b16 %v3074
          %v3113 = vunpack.c.h.b16 %v3074
          %v3114 = vunpack.c.l.b16 %v3075
          %v3115 = vunpack.c.h.b16 %v3075
          %v3116 = vunpack.c.l.b16 %v3076
          %v3117 = vunpack.c.h.b16 %v3076
          %v3118 = vunpack.c.l.b16 %v3077
          %v3119 = vunpack.c.h.b16 %v3077
          %v3120 = vunpack.c.l.b16 %v3078
          %v3121 = vunpack.c.h.b16 %v3078
          %v3122 = vunpack.c.l.b16 %v3079
          %v3123 = vunpack.c.h.b16 %v3079
          %v3124 = vunpack.c.l.b16 %v3080
          %v3125 = vunpack.c.h.b16 %v3080
          %v3126 = vunpack.c.l.b16 %v3081
          %v3127 = vunpack.c.h.b16 %v3081
          %v3128 = vunpack.c.l.b16 %v3082
          %v3129 = vunpack.c.h.b16 %v3082
          %v3130 = vunpack.c.l.b16 %v3083
          %v3131 = vunpack.c.h.b16 %v3083
          %v3132 = vpack.c.b16 %v3100, %v3100
          %v3133 = vpack.c.b16 %v3101, %v3101
          %v3134 = vpack.c.b16 %v3102, %v3102
          %v3135 = vpack.c.b16 %v3103, %v3103
          %v3136 = vpack.c.b16 %v3104, %v3104
          %v3137 = vpack.c.b16 %v3105, %v3105
          %v3138 = vpack.c.b16 %v3106, %v3106
          %v3139 = vpack.c.b16 %v3107, %v3107
          %v3140 = vpack.c.b16 %v3108, %v3108
          %v3141 = vpack.c.b16 %v3109, %v3109
          %v3142 = vpack.c.b16 %v3110, %v3110
          %v3143 = vpack.c.b16 %v3111, %v3111
          %v3144 = vpack.c.b16 %v3112, %v3112
          %v3145 = vpack.c.b16 %v3113, %v3113
          %v3146 = vpack.c.b16 %v3114, %v3114
          %v3147 = vpack.c.b16 %v3115, %v3115
          %v3148 = vpack.c.b16 %v3116, %v3116
          %v3149 = vpack.c.b16 %v3117, %v3117
          %v3150 = vpack.c.b16 %v3118, %v3118
          %v3151 = vpack.c.b16 %v3119, %v3119
          %v3152 = vpack.c.b16 %v3120, %v3120
          %v3153 = vpack.c.b16 %v3121, %v3121
          %v3154 = vpack.c.b16 %v3122, %v3122
          %v3155 = vpack.c.b16 %v3123, %v3123
          %v3156 = vpack.c.b16 %v3124, %v3124
          %v3157 = vpack.c.b16 %v3125, %v3125
          %v3158 = vpack.c.b16 %v3126, %v3126
          %v3159 = vpack.c.b16 %v3127, %v3127
          %v3160 = vpack.c.b16 %v3128, %v3128
          %v3161 = vpack.c.b16 %v3129, %v3129
          %v3162 = vpack.c.b16 %v3130, %v3130
          %v3163 = vpack.c.b16 %v3131, %v3131
          %3196 = vst [vmem:[%s317] sm:$0xf] %v3132
          %3197 = vst [vmem:[%s317 + $0x4] sm:$0xf] %v3133
          %3198 = vst [vmem:[%s317 + $0x8] sm:$0xf] %v3134
          %3199 = vst [vmem:[%s317 + $0xc] sm:$0xf] %v3135
          %3200 = vst [vmem:[%s317 + $0x10] sm:$0xf] %v3136
          %3201 = vst [vmem:[%s317 + $0x14] sm:$0xf] %v3137
          %3202 = vst [vmem:[%s317 + $0x18] sm:$0xf] %v3138
          %3203 = vst [vmem:[%s317 + $0x1c] sm:$0xf] %v3139
          %3204 = vst [vmem:[%s317 + $0x20] sm:$0xf] %v3140
          %3205 = vst [vmem:[%s317 + $0x24] sm:$0xf] %v3141
          %3206 = vst [vmem:[%s317 + $0x28] sm:$0xf] %v3142
          %3207 = vst [vmem:[%s317 + $0x2c] sm:$0xf] %v3143
          %3208 = vst [vmem:[%s317 + $0x30] sm:$0xf] %v3144
          %3209 = vst [vmem:[%s317 + $0x34] sm:$0xf] %v3145
          %3210 = vst [vmem:[%s317 + $0x38] sm:$0xf] %v3146
          %3211 = vst [vmem:[%s317 + $0x3c] sm:$0xf] %v3147
          %3212 = vst [vmem:[%s317 + $0x40] sm:$0xf] %v3148
          %3213 = vst [vmem:[%s317 + $0x44] sm:$0xf] %v3149
          %3214 = vst [vmem:[%s317 + $0x48] sm:$0xf] %v3150
          %3215 = vst [vmem:[%s317 + $0x4c] sm:$0xf] %v3151
          %3216 = vst [vmem:[%s317 + $0x50] sm:$0xf] %v3152
          %3217 = vst [vmem:[%s317 + $0x54] sm:$0xf] %v3153
          %3218 = vst [vmem:[%s317 + $0x58] sm:$0xf] %v3154
          %3219 = vst [vmem:[%s317 + $0x5c] sm:$0xf] %v3155
          %3220 = vst [vmem:[%s317 + $0x60] sm:$0xf] %v3156
          %3221 = vst [vmem:[%s317 + $0x64] sm:$0xf] %v3157
          %3222 = vst [vmem:[%s317 + $0x68] sm:$0xf] %v3158
          %3223 = vst [vmem:[%s317 + $0x6c] sm:$0xf] %v3159
          %3224 = vst [vmem:[%s317 + $0x70] sm:$0xf] %v3160
          %3225 = vst [vmem:[%s317 + $0x74] sm:$0xf] %v3161
          %3226 = vst [vmem:[%s317 + $0x78] sm:$0xf] %v3162
          %3227 = vst [vmem:[%s317 + $0x7c] sm:$0xf] %v3163
        $region72: #{tpu_custom_call.1} parent=35 // pred_fallthru
          _
        %s3228 = sand.u32 %s151, 1
        %s3229 = scalar_lea.sflag [#allocation7], %s3228
        %s3230 = sand.u32 %s151, 1
        %s3231 = smul.addr %s3230, 128
        %s3232 = scalar_lea.vmem [#allocation11], %s3231
        // Predicated region
        $region73: #{tpu_custom_call.1} parent=35 // pred_check
          %p3233 = pneg %p161
        $region74: #{tpu_custom_call.1} parent=35 // pred_check_branch
          %3235 = sbr.rel (%p3233) target = $region76
        $region75: #{tpu_custom_call.1} parent=35 // pred_region
          %s3236 = smul.u32 32, %s29
          %s3238 = ssub.s32 2048, 2048
          %3239 = vsyncadd %s3229, %s3238
          %s3240 = smul.addr %s3236, 64
          %s3241 = scalar_lea.hbm %s4, %s3240
          %s3242 = sshll.u32 %s3232, 4
          %s3243 = int_to_ptr.vmem [resolvable:$true] %s3242
          %3248 = dma.vmem_to_hbm [thread:$0]  %s3243, 2048, %s3241, %s3229, 64, 64, 4
        $region76: #{tpu_custom_call.1} parent=35 // pred_fallthru
          _
      $region36: #{tpu_custom_call.1} parent=5 // pred_fallthru
        _
      %p3249 = scmp.le.s32.totalorder 2, %s19
      // Predicated region
      $region77: #{tpu_custom_call.1} parent=5 // pred_check
        %p3250 = pneg %p3249
      $region78: #{tpu_custom_call.1} parent=5 // pred_check_branch
        %3252 = sbr.rel (%p3250) target = $region80
      $region79: #{tpu_custom_call.1} parent=5 // pred_region
        %s3253 = ssub.s32 %s19, 2
        // Predicated region
        $region81: #{tpu_custom_call.1} parent=79 // pred_check
          %p3254 = pneg %p167
        $region82: #{tpu_custom_call.1} parent=79 // pred_check_branch
          %3256 = sbr.rel (%p3254) target = $region84
        $region83: #{tpu_custom_call.1} parent=79 // pred_region
          %s3257 = sand.u32 %s152, 1
          %s3258 = scalar_lea.sflag [#allocation7], %s3257
          %s3259 = sand.u32 %s152, 1
          %s3260 = smul.addr %s3259, 128
          %s3261 = scalar_lea.vmem [#allocation11], %s3260
          %3262 = dma.done %s3258, 2048
        $region84: #{tpu_custom_call.1} parent=79 // pred_fallthru
          _
      $region80: #{tpu_custom_call.1} parent=5 // pred_fallthru
        _
    $region6: #{tpu_custom_call.1} parent=1 // loop_footer
      %s23 = sadd.s32 1, %s19
    $region7: #{tpu_custom_call.1} parent=1 // loop_footer_branch
      %18 = sbr.rel target = $region3
    $region8: #{tpu_custom_call.1} parent=1 // loop_exit
      _
    %3263 = vsyncpa [#allocation6], 1
    %s3264 = scalar_lea.sflag [#allocation6], 1
    %3265 = vsyncpa %s3264, 1
    %3266 = vsyncpa [#allocation9], 1
    %s3267 = scalar_lea.sflag [#allocation9], 1
    %3268 = vsyncpa %s3267, 1
    %3269 = vsyncpa [#allocation7], 1
    %s3270 = scalar_lea.sflag [#allocation7], 1
    %3271 = vsyncpa %s3270, 1

</llo_original>
